<compile_context>
chip_gen: v5e
topology: v5e:2x2
jax: 0.10.0
libtpu: 0.0.40
codegen_flags: <defaults>
</compile_context>

<pallas_src>
import jax
import jax.numpy as jnp
from jax.experimental import pallas as pl
from jax.experimental.pallas import tpu as pltpu


def _round_up(x, m):
    return -(-x // m) * m


def _leaky_relu(x, negative_slope=0.2):
    return jnp.where(x >= 0, x, negative_slope * x)


# ----------------------------------------------------------------------------
# Kernel: fully fused 3-matmul MLP on one batch tile.
# ----------------------------------------------------------------------------
def h_kernel(x_ref,
             w1_ref, b1_ref,
             wh_ref, bh_ref,
             wo_ref, bo_ref,
             o_ref):
    cdt = w1_ref.dtype  # MXU operand dtype (bf16); accumulation stays f32

    # layer1 + leaky_relu(0.2)               (tm, din_pad) x (din_pad, H)
    out = jnp.dot(x_ref[...], w1_ref[...],
                  preferred_element_type=jnp.float32) + b1_ref[...]
    out = _leaky_relu(out).astype(cdt)

    # fused hidden stack (3 Linears pre-multiplied on host) + leaky_relu(0.2)
    out = jnp.dot(out, wh_ref[...],
                  preferred_element_type=jnp.float32) + bh_ref[...]
    out = _leaky_relu(out).astype(cdt)

    # outlayer (no activation) -> narrow f32 store (dout_pad lanes)
    out = jnp.dot(out, wo_ref[...],
                  preferred_element_type=jnp.float32) + bo_ref[...]
    o_ref[...] = out.astype(o_ref.dtype)


# ----------------------------------------------------------------------------
# Parameter init (PyTorch nn.Linear default) and one-time weight preparation.
# ----------------------------------------------------------------------------
def init_linear(key, in_features, out_features, dtype=jnp.float32):
    """PyTorch nn.Linear default init: U(-1/sqrt(in), 1/sqrt(in)) for W and b."""
    kw, kb = jax.random.split(key)
    bound = 1.0 / jnp.sqrt(jnp.float32(in_features))
    w = jax.random.uniform(kw, (out_features, in_features), dtype, -bound, bound)
    b = jax.random.uniform(kb, (out_features,), dtype, -bound, bound)
    return w, b


def init_h_params(key, input_dim, output_dim, hidden_features=256, hidden_layers=3):
    keys = jax.random.split(key, hidden_layers + 2)
    params = {"layer1": init_linear(keys[0], input_dim, hidden_features)}
    params["hidden"] = [
        init_linear(keys[1 + i], hidden_features, hidden_features)
        for i in range(hidden_layers)
    ]
    params["outlayer"] = init_linear(keys[-1], hidden_features, output_dim)
    return params


def prepare_h_params(params, *, compute_dtype=jnp.bfloat16):
    """One-time prep: fuse hidden Linears (f32), transpose, pad, cast to bf16.

    Hoisted out of the per-call path so the forward only pads x and launches
    the kernel.
    """
    w1_t, b1_t = params["layer1"]
    H, Din = w1_t.shape
    wo_t, bo_t = params["outlayer"]
    Dout = wo_t.shape[0]

    din_pad = max(16, _round_up(Din, 16))    # bf16 sublane-pack friendly K
    dout_pad = max(8, _round_up(Dout, 8))    # narrow output slab (16x less f32 writeback)

    # layer1: (H, Din) -> zero-padded (din_pad, H)
    w1 = jnp.pad(w1_t.T.astype(jnp.float32),
                 ((0, din_pad - Din), (0, 0))).astype(compute_dtype)
    b1 = b1_t.reshape(1, -1).astype(jnp.float32)

    # Fuse the activation-free hidden Linears:  z -> z @ W_h + b_h
    wh_f32 = jnp.eye(H, dtype=jnp.float32)
    bh_f32 = jnp.zeros((1, H), jnp.float32)
    for (w, b) in params["hidden"]:
        wt = w.T.astype(jnp.float32)
        wh_f32 = wh_f32 @ wt
        bh_f32 = bh_f32 @ wt + b.reshape(1, -1).astype(jnp.float32)
    wh = wh_f32.astype(compute_dtype)
    bh = bh_f32

    # outlayer: (Dout, H) -> zero-padded (H, dout_pad)
    wo = jnp.pad(wo_t.T.astype(jnp.float32),
                 ((0, 0), (0, dout_pad - Dout))).astype(compute_dtype)
    bo = jnp.pad(bo_t.reshape(1, -1).astype(jnp.float32),
                 ((0, 0), (0, dout_pad - Dout)))

    return {"w1": w1, "b1": b1, "wh": wh, "bh": bh, "wo": wo, "bo": bo,
            "din": Din, "dout": Dout}


# ----------------------------------------------------------------------------
# Forward wrapper.
# ----------------------------------------------------------------------------
def h_forward(x, prep, *, tm=1024):
    """Run the fused MLP in one Pallas kernel, tiled over the batch dim.

    tm: batch (row) tile; 512-2048 recommended (multiple of 256 keeps the
        256-wide MXU on v6e/v7x fed).  Ragged N is zero-padded.
    """
    N, Din = x.shape
    din_pad = prep["w1"].shape[0]
    dout_pad = prep["wo"].shape[1]
    cdt = prep["w1"].dtype

    # Keep both v7x TensorCores busy: with dimension_semantics=("parallel",)
    # a single-step grid leaves one TC idle, so split when there is enough work.
    if N > 256 and pl.cdiv(N, tm) < 2:
        tm = _round_up(pl.cdiv(N, 2), 256)
    tm = min(tm, _round_up(N, 8))            # don't over-allocate for tiny batches
    n_pad = pl.cdiv(N, tm) * tm

    xp = jnp.pad(x.astype(cdt), ((0, n_pad - N), (0, din_pad - Din)))

    # grid-invariant blocks (constant index_map): fetched once, stay resident
    full = lambda arr: pl.BlockSpec(arr.shape, lambda i: (0,) * arr.ndim)

    grid_spec = pltpu.PrefetchScalarGridSpec(
        num_scalar_prefetch=0,
        grid=(n_pad // tm,),
        in_specs=[
            pl.BlockSpec((tm, din_pad), lambda i: (i, 0)),   # x tile
            full(prep["w1"]), full(prep["b1"]),
            full(prep["wh"]), full(prep["bh"]),
            full(prep["wo"]), full(prep["bo"]),
        ],
        out_specs=pl.BlockSpec((tm, dout_pad), lambda i: (i, 0)),
    )

    out_padded = pl.pallas_call(
        h_kernel,
        out_shape=jax.ShapeDtypeStruct((n_pad, dout_pad), jnp.float32),
        grid_spec=grid_spec,
        compiler_params=pltpu.CompilerParams(
            dimension_semantics=("parallel",),   # shards batch tiles across v7x TCs
        ),
    )(xp, prep["w1"], prep["b1"], prep["wh"], prep["bh"], prep["wo"], prep["bo"])

    return out_padded[:N, :prep["dout"]]


# ----------------------------------------------------------------------------
# References.
# ----------------------------------------------------------------------------
def h_forward_ref(x, params):
    """Pure-JAX f32 reference mirroring the PyTorch forward (sirens=False)."""
    lin = lambda z, wb: z @ wb[0].T + wb[1]
    out = _leaky_relu(lin(x, params["layer1"]))
    for wb in params["hidden"]:
        out = lin(out, wb)
    out = _leaky_relu(out)
    return lin(out, params["outlayer"])


def h_forward_ref_matched(x, prep):
    """Reference that mimics the kernel's fused / bf16-operand / f32-accum math."""
    N, Din = x.shape
    cdt = prep["w1"].dtype
    xp = jnp.pad(x.astype(cdt), ((0, 0), (0, prep["w1"].shape[0] - Din)))
    out = _leaky_relu(jnp.dot(xp, prep["w1"],
                              preferred_element_type=jnp.float32) + prep["b1"])
    out = _leaky_relu(jnp.dot(out.astype(cdt), prep["wh"],
                              preferred_element_type=jnp.float32) + prep["bh"])
    out = jnp.dot(out.astype(cdt), prep["wo"],
                  preferred_element_type=jnp.float32) + prep["bo"]
    return out[:, :prep["dout"]]


if __name__ == "__main__":
    key = jax.random.PRNGKey(0)
    k_param, k_x = jax.random.split(key)

    input_dim, output_dim, hidden = 3, 3, 256   # spateo use: 3D coords -> 3D field
    N = 1000                                    # ragged batch (not a tile multiple)

    params = init_h_params(k_param, input_dim, output_dim,
                           hidden_features=hidden, hidden_layers=3)
    x = jax.random.normal(k_x, (N, input_dim), dtype=jnp.float32)

    prep = prepare_h_params(params)             # one-time fusion / pad / cast
    out = h_forward(x, prep)                    # wrapper auto-splits grid into 2 tiles
    out = jax.block_until_ready(out)
    assert out.shape == (N, output_dim)

    # Tight check vs a precision-matched (fused, bf16 operand, f32 accum) reference.
    ref_matched = h_forward_ref_matched(x, prep)
    assert jnp.allclose(out, ref_matched, atol=1e-2, rtol=1e-2), \
        "mismatch vs precision-matched JAX reference"

    # Loose check vs the exact f32 PyTorch-semantics reference (bf16 rounding + fusion).
    ref_f32 = h_forward_ref(x, params)
    assert jnp.allclose(out, ref_f32, atol=5e-2, rtol=5e-2), \
        "mismatch vs f32 JAX reference"

    print("KERNEL_OK")
</pallas_src>

<mosaic_0001>
module attributes {stable_mosaic.version = 11 : i64} {
  func.func @h_kernel(%arg0: i32, %arg1: memref<512x16xbf16, #tpu.memory_space<vmem>>, %arg2: memref<16x256xbf16, #tpu.memory_space<vmem>>, %arg3: memref<1x256xf32, #tpu.memory_space<vmem>>, %arg4: memref<256x256xbf16, #tpu.memory_space<vmem>>, %arg5: memref<1x256xf32, #tpu.memory_space<vmem>>, %arg6: memref<256x8xbf16, #tpu.memory_space<vmem>>, %arg7: memref<1x8xf32, #tpu.memory_space<vmem>>, %arg8: memref<512x8xf32, #tpu.memory_space<vmem>>) attributes {dimension_semantics = [#tpu.dimension_semantics<parallel>], iteration_bounds = array<i64: 2>, scalar_prefetch = 0 : i64, scratch_operands = 0 : i64, tpu.core_type = #tpu.core_type<tc>, window_params = [{transform_indices = @transform_0, window_bounds = array<i64: 512, 16>}, {pipeline_mode = #tpu.pipeline_mode<synchronous>, transform_indices = @transform_1, window_bounds = array<i64: 16, 256>}, {pipeline_mode = #tpu.pipeline_mode<synchronous>, transform_indices = @transform_2, window_bounds = array<i64: 1, 256>}, {pipeline_mode = #tpu.pipeline_mode<synchronous>, transform_indices = @transform_3, window_bounds = array<i64: 256, 256>}, {pipeline_mode = #tpu.pipeline_mode<synchronous>, transform_indices = @transform_4, window_bounds = array<i64: 1, 256>}, {pipeline_mode = #tpu.pipeline_mode<synchronous>, transform_indices = @transform_5, window_bounds = array<i64: 256, 8>}, {pipeline_mode = #tpu.pipeline_mode<synchronous>, transform_indices = @transform_6, window_bounds = array<i64: 1, 8>}, {transform_indices = @transform_7, window_bounds = array<i64: 512, 8>}]} {
    %c0 = arith.constant 0 : index
    %c0_0 = arith.constant 0 : index
    %0 = vector.load %arg1[%c0, %c0_0] : memref<512x16xbf16, #tpu.memory_space<vmem>>, vector<512x16xbf16>
    %c0_1 = arith.constant 0 : index
    %c0_2 = arith.constant 0 : index
    %1 = vector.load %arg2[%c0_1, %c0_2] : memref<16x256xbf16, #tpu.memory_space<vmem>>, vector<16x256xbf16>
    %cst = arith.constant dense<0.000000e+00> : vector<512x256xf32>
    %2 = tpu.matmul %0, %1, %cst {dimension_numbers = #tpu.dot_dimension_numbers<[1], [0], [0], [1], [0, 0, 1, 1], [], []>} : vector<512x16xbf16>, vector<16x256xbf16>, vector<512x256xf32> -> vector<512x256xf32>
    %c0_3 = arith.constant 0 : index
    %c0_4 = arith.constant 0 : index
    %3 = vector.load %arg3[%c0_3, %c0_4] : memref<1x256xf32, #tpu.memory_space<vmem>>, vector<1x256xf32>
    %4 = vector.broadcast %3 : vector<1x256xf32> to vector<512x256xf32>
    %5 = arith.addf %2, %4 : vector<512x256xf32>
    %cst_5 = arith.constant 0.000000e+00 : f32
    %6 = vector.broadcast %cst_5 : f32 to vector<512x256xf32>
    %7 = arith.cmpf oge, %5, %6 : vector<512x256xf32>
    %cst_6 = arith.constant 2.000000e-01 : f32
    %8 = vector.broadcast %cst_6 : f32 to vector<512x256xf32>
    %9 = arith.mulf %8, %5 : vector<512x256xf32>
    %10 = arith.select %7, %5, %9 : vector<512x256xi1>, vector<512x256xf32>
    %11 = arith.truncf %10 : vector<512x256xf32> to vector<512x256xbf16>
    %c0_7 = arith.constant 0 : index
    %c0_8 = arith.constant 0 : index
    %12 = vector.load %arg4[%c0_7, %c0_8] : memref<256x256xbf16, #tpu.memory_space<vmem>>, vector<256x256xbf16>
    %cst_9 = arith.constant dense<0.000000e+00> : vector<512x256xf32>
    %13 = tpu.matmul %11, %12, %cst_9 {dimension_numbers = #tpu.dot_dimension_numbers<[1], [0], [0], [1], [0, 0, 1, 1], [], []>} : vector<512x256xbf16>, vector<256x256xbf16>, vector<512x256xf32> -> vector<512x256xf32>
    %c0_10 = arith.constant 0 : index
    %c0_11 = arith.constant 0 : index
    %14 = vector.load %arg5[%c0_10, %c0_11] : memref<1x256xf32, #tpu.memory_space<vmem>>, vector<1x256xf32>
    %15 = vector.broadcast %14 : vector<1x256xf32> to vector<512x256xf32>
    %16 = arith.addf %13, %15 : vector<512x256xf32>
    %cst_12 = arith.constant 0.000000e+00 : f32
    %17 = vector.broadcast %cst_12 : f32 to vector<512x256xf32>
    %18 = arith.cmpf oge, %16, %17 : vector<512x256xf32>
    %cst_13 = arith.constant 2.000000e-01 : f32
    %19 = vector.broadcast %cst_13 : f32 to vector<512x256xf32>
    %20 = arith.mulf %19, %16 : vector<512x256xf32>
    %21 = arith.select %18, %16, %20 : vector<512x256xi1>, vector<512x256xf32>
    %22 = arith.truncf %21 : vector<512x256xf32> to vector<512x256xbf16>
    %c0_14 = arith.constant 0 : index
    %c0_15 = arith.constant 0 : index
    %23 = vector.load %arg6[%c0_14, %c0_15] : memref<256x8xbf16, #tpu.memory_space<vmem>>, vector<256x8xbf16>
    %cst_16 = arith.constant dense<0.000000e+00> : vector<512x8xf32>
    %24 = tpu.matmul %22, %23, %cst_16 {dimension_numbers = #tpu.dot_dimension_numbers<[1], [0], [0], [1], [0, 0, 1, 1], [], []>} : vector<512x256xbf16>, vector<256x8xbf16>, vector<512x8xf32> -> vector<512x8xf32>
    %c0_17 = arith.constant 0 : index
    %c0_18 = arith.constant 0 : index
    %25 = vector.load %arg7[%c0_17, %c0_18] : memref<1x8xf32, #tpu.memory_space<vmem>>, vector<1x8xf32>
    %26 = vector.broadcast %25 : vector<1x8xf32> to vector<512x8xf32>
    %27 = arith.addf %24, %26 : vector<512x8xf32>
    %c0_19 = arith.constant 0 : index
    %c0_20 = arith.constant 0 : index
    %28 = vector.load %arg8[%c0_19, %c0_20] : memref<512x8xf32, #tpu.memory_space<vmem>>, vector<512x8xf32>
    tpu.vector_store %arg8[%c0_19, %c0_20], %27 {strides = array<i32>} : memref<512x8xf32, #tpu.memory_space<vmem>>, vector<512x8xf32>,
    return
  }
  func.func @transform_0(%arg0: i32) -> (i32, i32) {
    %c0_i32 = arith.constant 0 : i32
    %c0_i32_0 = arith.constant 0 : i32
    return %arg0, %c0_i32 : i32, i32
  }
  func.func @transform_1(%arg0: i32) -> (i32, i32) {
    %c0_i32 = arith.constant 0 : i32
    %c0_i32_0 = arith.constant 0 : i32
    %c0_i32_1 = arith.constant 0 : i32
    return %c0_i32, %c0_i32_0 : i32, i32
  }
  func.func @transform_2(%arg0: i32) -> (i32, i32) {
    %c0_i32 = arith.constant 0 : i32
    %c0_i32_0 = arith.constant 0 : i32
    %c0_i32_1 = arith.constant 0 : i32
    return %c0_i32, %c0_i32_0 : i32, i32
  }
  func.func @transform_3(%arg0: i32) -> (i32, i32) {
    %c0_i32 = arith.constant 0 : i32
    %c0_i32_0 = arith.constant 0 : i32
    %c0_i32_1 = arith.constant 0 : i32
    return %c0_i32, %c0_i32_0 : i32, i32
  }
  func.func @transform_4(%arg0: i32) -> (i32, i32) {
    %c0_i32 = arith.constant 0 : i32
    %c0_i32_0 = arith.constant 0 : i32
    %c0_i32_1 = arith.constant 0 : i32
    return %c0_i32, %c0_i32_0 : i32, i32
  }
  func.func @transform_5(%arg0: i32) -> (i32, i32) {
    %c0_i32 = arith.constant 0 : i32
    %c0_i32_0 = arith.constant 0 : i32
    %c0_i32_1 = arith.constant 0 : i32
    return %c0_i32, %c0_i32_0 : i32, i32
  }
  func.func @transform_6(%arg0: i32) -> (i32, i32) {
    %c0_i32 = arith.constant 0 : i32
    %c0_i32_0 = arith.constant 0 : i32
    %c0_i32_1 = arith.constant 0 : i32
    return %c0_i32, %c0_i32_0 : i32, i32
  }
  func.func @transform_7(%arg0: i32) -> (i32, i32) {
    %c0_i32 = arith.constant 0 : i32
    %c0_i32_0 = arith.constant 0 : i32
    return %arg0, %c0_i32 : i32, i32
  }
}

</mosaic_0001>

<llo_original>
// kernel: tpu_custom_call.1
$region0: #{tpu_custom_call.1}
  #allocation0 [shape = 'u32[]', space=smem, size = 0x4, offset = 0x4, fixed_abs, tag = 'smem constant byte address 0x4 - core index']
  #allocation1 [shape = 'u32[72,128]{1,0:T(1,128)}', space=vmem, size = 0x9000, scoped, tag = 'internal scratch']
  %s0 = inlined_call_operand.vmem [shape: bf16[1024,16], index: 0, kind: input, shape index: {}]
  %s1 = inlined_call_operand.vmem [shape: bf16[16,256], index: 1, kind: input, shape index: {}]
  %s2 = inlined_call_operand.vmem [shape: f32[1,256], index: 2, kind: input, shape index: {}]
  %s3 = inlined_call_operand.vmem [shape: bf16[256,256], index: 3, kind: input, shape index: {}]
  %s4 = inlined_call_operand.vmem [shape: f32[1,256], index: 4, kind: input, shape index: {}]
  %s5 = inlined_call_operand.vmem [shape: bf16[256,8], index: 5, kind: input, shape index: {}]
  %s6 = inlined_call_operand.vmem [shape: f32[1,8], index: 6, kind: input, shape index: {}]
  %s7 = inlined_call_operand.vmem [shape: f32[1024,8], index: 7, kind: output, shape index: {}]
  %s8 = sld [smem:[#allocation0]]
  $region61: #{tpu_custom_call.1} parent=0
    _
  %s10 = ssub.s32 1, %s8
  %s11 = scalar_select 0, %s10, %s8
  loop: start=0, step=1, limit=4
  $region2: #{tpu_custom_call.1} parent=0 // loop_pre_header
    _
  $region3: #{tpu_custom_call.1} parent=0 // loop_header
    %s13 = sphi 0, %s17
    %p14 = scmp.ge.s32.totalorder %s13, 4
    %s23 = sphi 0, %s25
    %s26 = sphi 0, %s23
    %s27 = sphi 0, %s26
    %s43 = sphi 0, %s27
    %s47 = sphi 0, %s47
    %s49 = sphi 0, %s47
    %s50 = sphi 0, %s49
    %s64 = sphi 0, %s50
    %s68 = sphi 0, %s68
    %s70 = sphi 0, %s68
    %s71 = sphi 0, %s70
    %s85 = sphi 0, %s71
    %s89 = sphi 0, %s89
    %s91 = sphi 0, %s89
    %s92 = sphi 0, %s91
    %s106 = sphi 0, %s92
    %s110 = sphi 0, %s110
    %s112 = sphi 0, %s110
    %s113 = sphi 0, %s112
    %s127 = sphi 0, %s113
    %s131 = sphi 0, %s131
    %s133 = sphi 0, %s131
    %s134 = sphi 0, %s133
    %s148 = sphi 0, %s134
    %s152 = sphi 0, %s152
    %s154 = sphi 0, %s152
    %s155 = sphi 0, %s154
    %s169 = sphi 0, %s155
    %s175 = sphi 0, %s177
    %s178 = sphi 0, %s175
    %s179 = sphi 0, %s178
    %s195 = sphi 0, %s179
  $region4: #{tpu_custom_call.1} parent=0 // loop_header_branch
    %16 = sbr.rel (%p14) target = $region8
  $region5: #{tpu_custom_call.1} parent=0 // loop_body
    %s18 = ssub.s32 %s13, 1
    %s19 = ssub.s32 %s13, 2
    %s20 = sadd.s32 %s13, 1
    %s21 = ssub.s32 %s13, %s20
    %p22 = scmp.eq.s32.totalorder %s21, 0
    %s24 = sadd.s32 %s23, 1
    %s25 = scalar_select %p22, %s23, %s24
    %p28 = pneg %p22
    %p29 = scmp.eq.s32.totalorder %s13, 1
    %p30 = por %p28, %p29
    %p31 = scmp.ne.s32.totalorder %s23, %s26
    %p32 = scmp.eq.s32.totalorder %s13, 0
    %p33 = por %p31, %p32
    %p34 = scmp.ne.s32.totalorder %s23, %s26
    %p35 = scmp.eq.s32.totalorder %s18, 1
    %p36 = por %p34, %p35
    %p37 = scmp.ne.s32.totalorder %s26, %s27
    %p38 = scmp.eq.s32.totalorder %s18, 0
    %p39 = por %p37, %p38
    %p40 = scmp.ne.s32.totalorder %s26, %s27
    %p41 = scmp.eq.s32.totalorder %s19, 1
    %p42 = por %p40, %p41
    %p44 = scmp.ne.s32.totalorder %s27, %s43
    %p45 = scmp.eq.s32.totalorder %s19, 0
    %p46 = por %p44, %p45
    %s48 = sadd.s32 %s47, 1
    %p51 = scmp.eq.s32.totalorder %s13, 1
    %p52 = scmp.ne.s32.totalorder %s47, %s49
    %p53 = scmp.eq.s32.totalorder %s13, 0
    %p54 = por %p52, %p53
    %p55 = scmp.ne.s32.totalorder %s47, %s49
    %p56 = scmp.eq.s32.totalorder %s18, 1
    %p57 = por %p55, %p56
    %p58 = scmp.ne.s32.totalorder %s49, %s50
    %p59 = scmp.eq.s32.totalorder %s18, 0
    %p60 = por %p58, %p59
    %p61 = scmp.ne.s32.totalorder %s49, %s50
    %p62 = scmp.eq.s32.totalorder %s19, 1
    %p63 = por %p61, %p62
    %p65 = scmp.ne.s32.totalorder %s50, %s64
    %p66 = scmp.eq.s32.totalorder %s19, 0
    %p67 = por %p65, %p66
    %s69 = sadd.s32 %s68, 1
    %p72 = scmp.eq.s32.totalorder %s13, 1
    %p73 = scmp.ne.s32.totalorder %s68, %s70
    %p74 = scmp.eq.s32.totalorder %s13, 0
    %p75 = por %p73, %p74
    %p76 = scmp.ne.s32.totalorder %s68, %s70
    %p77 = scmp.eq.s32.totalorder %s18, 1
    %p78 = por %p76, %p77
    %p79 = scmp.ne.s32.totalorder %s70, %s71
    %p80 = scmp.eq.s32.totalorder %s18, 0
    %p81 = por %p79, %p80
    %p82 = scmp.ne.s32.totalorder %s70, %s71
    %p83 = scmp.eq.s32.totalorder %s19, 1
    %p84 = por %p82, %p83
    %p86 = scmp.ne.s32.totalorder %s71, %s85
    %p87 = scmp.eq.s32.totalorder %s19, 0
    %p88 = por %p86, %p87
    %s90 = sadd.s32 %s89, 1
    %p93 = scmp.eq.s32.totalorder %s13, 1
    %p94 = scmp.ne.s32.totalorder %s89, %s91
    %p95 = scmp.eq.s32.totalorder %s13, 0
    %p96 = por %p94, %p95
    %p97 = scmp.ne.s32.totalorder %s89, %s91
    %p98 = scmp.eq.s32.totalorder %s18, 1
    %p99 = por %p97, %p98
    %p100 = scmp.ne.s32.totalorder %s91, %s92
    %p101 = scmp.eq.s32.totalorder %s18, 0
    %p102 = por %p100, %p101
    %p103 = scmp.ne.s32.totalorder %s91, %s92
    %p104 = scmp.eq.s32.totalorder %s19, 1
    %p105 = por %p103, %p104
    %p107 = scmp.ne.s32.totalorder %s92, %s106
    %p108 = scmp.eq.s32.totalorder %s19, 0
    %p109 = por %p107, %p108
    %s111 = sadd.s32 %s110, 1
    %p114 = scmp.eq.s32.totalorder %s13, 1
    %p115 = scmp.ne.s32.totalorder %s110, %s112
    %p116 = scmp.eq.s32.totalorder %s13, 0
    %p117 = por %p115, %p116
    %p118 = scmp.ne.s32.totalorder %s110, %s112
    %p119 = scmp.eq.s32.totalorder %s18, 1
    %p120 = por %p118, %p119
    %p121 = scmp.ne.s32.totalorder %s112, %s113
    %p122 = scmp.eq.s32.totalorder %s18, 0
    %p123 = por %p121, %p122
    %p124 = scmp.ne.s32.totalorder %s112, %s113
    %p125 = scmp.eq.s32.totalorder %s19, 1
    %p126 = por %p124, %p125
    %p128 = scmp.ne.s32.totalorder %s113, %s127
    %p129 = scmp.eq.s32.totalorder %s19, 0
    %p130 = por %p128, %p129
    %s132 = sadd.s32 %s131, 1
    %p135 = scmp.eq.s32.totalorder %s13, 1
    %p136 = scmp.ne.s32.totalorder %s131, %s133
    %p137 = scmp.eq.s32.totalorder %s13, 0
    %p138 = por %p136, %p137
    %p139 = scmp.ne.s32.totalorder %s131, %s133
    %p140 = scmp.eq.s32.totalorder %s18, 1
    %p141 = por %p139, %p140
    %p142 = scmp.ne.s32.totalorder %s133, %s134
    %p143 = scmp.eq.s32.totalorder %s18, 0
    %p144 = por %p142, %p143
    %p145 = scmp.ne.s32.totalorder %s133, %s134
    %p146 = scmp.eq.s32.totalorder %s19, 1
    %p147 = por %p145, %p146
    %p149 = scmp.ne.s32.totalorder %s134, %s148
    %p150 = scmp.eq.s32.totalorder %s19, 0
    %p151 = por %p149, %p150
    %s153 = sadd.s32 %s152, 1
    %p156 = scmp.eq.s32.totalorder %s13, 1
    %p157 = scmp.ne.s32.totalorder %s152, %s154
    %p158 = scmp.eq.s32.totalorder %s13, 0
    %p159 = por %p157, %p158
    %p160 = scmp.ne.s32.totalorder %s152, %s154
    %p161 = scmp.eq.s32.totalorder %s18, 1
    %p162 = por %p160, %p161
    %p163 = scmp.ne.s32.totalorder %s154, %s155
    %p164 = scmp.eq.s32.totalorder %s18, 0
    %p165 = por %p163, %p164
    %p166 = scmp.ne.s32.totalorder %s154, %s155
    %p167 = scmp.eq.s32.totalorder %s19, 1
    %p168 = por %p166, %p167
    %p170 = scmp.ne.s32.totalorder %s155, %s169
    %p171 = scmp.eq.s32.totalorder %s19, 0
    %p172 = por %p170, %p171
    %s173 = ssub.s32 %s13, %s20
    %p174 = scmp.eq.s32.totalorder %s173, 0
    %s176 = sadd.s32 %s175, 1
    %s177 = scalar_select %p174, %s175, %s176
    %p180 = pneg %p174
    %p181 = scmp.eq.s32.totalorder %s13, 1
    %p182 = por %p180, %p181
    %p183 = scmp.ne.s32.totalorder %s175, %s178
    %p184 = scmp.eq.s32.totalorder %s13, 0
    %p185 = por %p183, %p184
    %p186 = scmp.ne.s32.totalorder %s175, %s178
    %p187 = scmp.eq.s32.totalorder %s18, 1
    %p188 = por %p186, %p187
    %p189 = scmp.ne.s32.totalorder %s178, %s179
    %p190 = scmp.eq.s32.totalorder %s18, 0
    %p191 = por %p189, %p190
    %p192 = scmp.ne.s32.totalorder %s178, %s179
    %p193 = scmp.eq.s32.totalorder %s19, 1
    %p194 = por %p192, %p193
    %p196 = scmp.ne.s32.totalorder %s179, %s195
    %p197 = scmp.eq.s32.totalorder %s19, 0
    %p198 = por %p196, %p197
    %p199 = scmp.le.s32.totalorder 1, %s13
    %p200 = scmp.lt.s32.totalorder %s13, 3
    %p201 = pnand %p199, %p200
    %p202 = pneg %p201
    // Predicated region
    $region9: #{tpu_custom_call.1} parent=5 // pred_check
      _
    $region10: #{tpu_custom_call.1} parent=5 // pred_check_branch
      %204 = sbr.rel (%p201) target = $region12
    $region11: #{tpu_custom_call.1} parent=5 // pred_region
      %s205 = ssub.s32 %s13, 1
      // Predicated region
      $region13: #{tpu_custom_call.1} parent=11 // pred_check
        %p206 = pneg %p60
      $region14: #{tpu_custom_call.1} parent=11 // pred_check_branch
        %208 = sbr.rel (%p206) target = $region16
      $region15: #{tpu_custom_call.1} parent=11 // pred_region
        _
      $region16: #{tpu_custom_call.1} parent=11 // pred_fallthru
        _
      // Predicated region
      $region17: #{tpu_custom_call.1} parent=11 // pred_check
        %p209 = pneg %p81
      $region18: #{tpu_custom_call.1} parent=11 // pred_check_branch
        %211 = sbr.rel (%p209) target = $region20
      $region19: #{tpu_custom_call.1} parent=11 // pred_region
        _
      $region20: #{tpu_custom_call.1} parent=11 // pred_fallthru
        _
      // Predicated region
      $region21: #{tpu_custom_call.1} parent=11 // pred_check
        %p212 = pneg %p102
      $region22: #{tpu_custom_call.1} parent=11 // pred_check_branch
        %214 = sbr.rel (%p212) target = $region24
      $region23: #{tpu_custom_call.1} parent=11 // pred_region
        _
      $region24: #{tpu_custom_call.1} parent=11 // pred_fallthru
        _
      // Predicated region
      $region25: #{tpu_custom_call.1} parent=11 // pred_check
        %p215 = pneg %p123
      $region26: #{tpu_custom_call.1} parent=11 // pred_check_branch
        %217 = sbr.rel (%p215) target = $region28
      $region27: #{tpu_custom_call.1} parent=11 // pred_region
        _
      $region28: #{tpu_custom_call.1} parent=11 // pred_fallthru
        _
      // Predicated region
      $region29: #{tpu_custom_call.1} parent=11 // pred_check
        %p218 = pneg %p144
      $region30: #{tpu_custom_call.1} parent=11 // pred_check_branch
        %220 = sbr.rel (%p218) target = $region32
      $region31: #{tpu_custom_call.1} parent=11 // pred_region
        _
      $region32: #{tpu_custom_call.1} parent=11 // pred_fallthru
        _
      // Predicated region
      $region33: #{tpu_custom_call.1} parent=11 // pred_check
        %p221 = pneg %p165
      $region34: #{tpu_custom_call.1} parent=11 // pred_check_branch
        %223 = sbr.rel (%p221) target = $region36
      $region35: #{tpu_custom_call.1} parent=11 // pred_region
        _
      $region36: #{tpu_custom_call.1} parent=11 // pred_fallthru
        _
    $region12: #{tpu_custom_call.1} parent=5 // pred_fallthru
      _
    %p224 = scmp.lt.s32.totalorder %s13, 2
    // Predicated region
    $region37: #{tpu_custom_call.1} parent=5 // pred_check
      %p225 = pneg %p224
    $region38: #{tpu_custom_call.1} parent=5 // pred_check_branch
      %227 = sbr.rel (%p225) target = $region40
    $region39: #{tpu_custom_call.1} parent=5 // pred_region
      // Predicated region
      $region41: #{tpu_custom_call.1} parent=39 // pred_check
        %p228 = pneg %p33
      $region42: #{tpu_custom_call.1} parent=39 // pred_check_branch
        %230 = sbr.rel (%p228) target = $region44
      $region43: #{tpu_custom_call.1} parent=39 // pred_region
        %s231 = smul.u32 64, %s13
        %p232 = scmp.lt.s32.totalorder %s231, 127
        %s233 = scalar_select %p232, %s231, 127
        %s234 = smul.addr %s233, 4
        %s235 = scalar_lea.vmem %s0, %s234
        %s236 = smul.u32 64, %s13
      $region44: #{tpu_custom_call.1} parent=39 // pred_fallthru
        _
    $region40: #{tpu_custom_call.1} parent=5 // pred_fallthru
      _
    %p237 = scmp.le.s32.totalorder 1, %s13
    %p238 = scmp.lt.s32.totalorder %s13, 3
    %p239 = pnand %p237, %p238
    %p240 = pneg %p239
    // Predicated region
    $region45: #{tpu_custom_call.1} parent=5 // pred_check
      _
    $region46: #{tpu_custom_call.1} parent=5 // pred_check_branch
      %242 = sbr.rel (%p239) target = $region48
    $region47: #{tpu_custom_call.1} parent=5 // pred_region
      %s243 = ssub.s32 %s13, 1
      %s244 = smul.u32 64, %s18
      %p245 = scmp.lt.s32.totalorder %s244, 127
      %s246 = scalar_select %p245, %s244, 127
      %s247 = smul.addr %s246, 4
      %s248 = scalar_lea.vmem %s0, %s247
      %p249 = pneg %p39
      %p250 = pneg %p36
      %p251 = pneg %p60
      %p252 = pneg %p57
      %p253 = pneg %p81
      %p254 = pneg %p78
      %p255 = pneg %p102
      %p256 = pneg %p99
      %p257 = pneg %p123
      %p258 = pneg %p120
      %p259 = pneg %p144
      %p260 = pneg %p141
      %p261 = pneg %p165
      %p262 = pneg %p162
      %p263 = pneg %p191
      %p264 = pneg %p188
      %s265 = smul.u32 64, %s18
      %p266 = scmp.lt.s32.totalorder %s265, 127
      %s267 = scalar_select %p266, %s265, 127
      %s268 = smul.addr %s267, 8
      %s269 = scalar_lea.vmem %s7, %s268
      %s270 = smul.u32 64, %s18
      %p271 = scmp.lt.s32.totalorder %s270, 127
      %s272 = scalar_select %p271, %s270, 127
      %s273 = smul.addr %s272, 4
      %s274 = scalar_lea.vmem %s0, %s273
      %s275 = smul.u32 64, %s18
      %s276 = smul.u32 64, %s18
      %p277 = scmp.lt.s32.totalorder %s276, 127
      %s278 = scalar_select %p277, %s276, 127
      %s279 = smul.addr %s278, 8
      %s280 = scalar_lea.vmem %s7, %s279
      %s281 = smul.u32 64, %s18
      %v283 = vld [vmem:[%s274] sm:$0xf]
      %v284 = vld [vmem:[%s274 + $0x4] sm:$0xf]
      %v285 = vld [vmem:[%s274 + $0x8] sm:$0xf]
      %v286 = vld [vmem:[%s274 + $0xc] sm:$0xf]
      %v287 = vld [vmem:[%s274 + $0x10] sm:$0xf]
      %v288 = vld [vmem:[%s274 + $0x14] sm:$0xf]
      %v289 = vld [vmem:[%s274 + $0x18] sm:$0xf]
      %v290 = vld [vmem:[%s274 + $0x1c] sm:$0xf]
      %v291 = vld [vmem:[%s274 + $0x20] sm:$0xf]
      %v292 = vld [vmem:[%s274 + $0x24] sm:$0xf]
      %v293 = vld [vmem:[%s274 + $0x28] sm:$0xf]
      %v294 = vld [vmem:[%s274 + $0x2c] sm:$0xf]
      %v295 = vld [vmem:[%s274 + $0x30] sm:$0xf]
      %v296 = vld [vmem:[%s274 + $0x34] sm:$0xf]
      %v297 = vld [vmem:[%s274 + $0x38] sm:$0xf]
      %v298 = vld [vmem:[%s274 + $0x3c] sm:$0xf]
      %v299 = vld [vmem:[%s274 + $0x40] sm:$0xf]
      %v300 = vld [vmem:[%s274 + $0x44] sm:$0xf]
      %v301 = vld [vmem:[%s274 + $0x48] sm:$0xf]
      %v302 = vld [vmem:[%s274 + $0x4c] sm:$0xf]
      %v303 = vld [vmem:[%s274 + $0x50] sm:$0xf]
      %v304 = vld [vmem:[%s274 + $0x54] sm:$0xf]
      %v305 = vld [vmem:[%s274 + $0x58] sm:$0xf]
      %v306 = vld [vmem:[%s274 + $0x5c] sm:$0xf]
      %v307 = vld [vmem:[%s274 + $0x60] sm:$0xf]
      %v308 = vld [vmem:[%s274 + $0x64] sm:$0xf]
      %v309 = vld [vmem:[%s274 + $0x68] sm:$0xf]
      %v310 = vld [vmem:[%s274 + $0x6c] sm:$0xf]
      %v311 = vld [vmem:[%s274 + $0x70] sm:$0xf]
      %v312 = vld [vmem:[%s274 + $0x74] sm:$0xf]
      %v313 = vld [vmem:[%s274 + $0x78] sm:$0xf]
      %v314 = vld [vmem:[%s274 + $0x7c] sm:$0xf]
      %v315 = vld [vmem:[%s274 + $0x80] sm:$0xf]
      %v316 = vld [vmem:[%s274 + $0x84] sm:$0xf]
      %v317 = vld [vmem:[%s274 + $0x88] sm:$0xf]
      %v318 = vld [vmem:[%s274 + $0x8c] sm:$0xf]
      %v319 = vld [vmem:[%s274 + $0x90] sm:$0xf]
      %v320 = vld [vmem:[%s274 + $0x94] sm:$0xf]
      %v321 = vld [vmem:[%s274 + $0x98] sm:$0xf]
      %v322 = vld [vmem:[%s274 + $0x9c] sm:$0xf]
      %v323 = vld [vmem:[%s274 + $0xa0] sm:$0xf]
      %v324 = vld [vmem:[%s274 + $0xa4] sm:$0xf]
      %v325 = vld [vmem:[%s274 + $0xa8] sm:$0xf]
      %v326 = vld [vmem:[%s274 + $0xac] sm:$0xf]
      %v327 = vld [vmem:[%s274 + $0xb0] sm:$0xf]
      %v328 = vld [vmem:[%s274 + $0xb4] sm:$0xf]
      %v329 = vld [vmem:[%s274 + $0xb8] sm:$0xf]
      %v330 = vld [vmem:[%s274 + $0xbc] sm:$0xf]
      %v331 = vld [vmem:[%s274 + $0xc0] sm:$0xf]
      %v332 = vld [vmem:[%s274 + $0xc4] sm:$0xf]
      %v333 = vld [vmem:[%s274 + $0xc8] sm:$0xf]
      %v334 = vld [vmem:[%s274 + $0xcc] sm:$0xf]
      %v335 = vld [vmem:[%s274 + $0xd0] sm:$0xf]
      %v336 = vld [vmem:[%s274 + $0xd4] sm:$0xf]
      %v337 = vld [vmem:[%s274 + $0xd8] sm:$0xf]
      %v338 = vld [vmem:[%s274 + $0xdc] sm:$0xf]
      %v339 = vld [vmem:[%s274 + $0xe0] sm:$0xf]
      %v340 = vld [vmem:[%s274 + $0xe4] sm:$0xf]
      %v341 = vld [vmem:[%s274 + $0xe8] sm:$0xf]
      %v342 = vld [vmem:[%s274 + $0xec] sm:$0xf]
      %v343 = vld [vmem:[%s274 + $0xf0] sm:$0xf]
      %v344 = vld [vmem:[%s274 + $0xf4] sm:$0xf]
      %v345 = vld [vmem:[%s274 + $0xf8] sm:$0xf]
      %v346 = vld [vmem:[%s274 + $0xfc] sm:$0xf]
      %v347 = vld [vmem:[%s1] sm:$0xff]
      %v348 = vld [vmem:[%s1 + $0x8] sm:$0xff]
      %v349 = vld [vmem:[%s2] sm:$0x3]
      %v351 = vperm.slane %v349, 0
      %v352 = vperm.slane %v349, 1
      %v419 = vunpack.c.l.b16 %v283
      %v420 = vunpack.c.l.b16 %v284
      %v421 = vunpack.c.l.b16 %v285
      %v422 = vunpack.c.l.b16 %v286
      %v423 = vunpack.c.l.b16 %v287
      %v424 = vunpack.c.l.b16 %v288
      %v425 = vunpack.c.l.b16 %v289
      %v426 = vunpack.c.l.b16 %v290
      %v427 = vunpack.c.l.b16 %v291
      %v428 = vunpack.c.l.b16 %v292
      %v429 = vunpack.c.l.b16 %v293
      %v430 = vunpack.c.l.b16 %v294
      %v431 = vunpack.c.l.b16 %v295
      %v432 = vunpack.c.l.b16 %v296
      %v433 = vunpack.c.l.b16 %v297
      %v434 = vunpack.c.l.b16 %v298
      %v435 = vunpack.c.l.b16 %v299
      %v436 = vunpack.c.l.b16 %v300
      %v437 = vunpack.c.l.b16 %v301
      %v438 = vunpack.c.l.b16 %v302
      %v439 = vunpack.c.l.b16 %v303
      %v440 = vunpack.c.l.b16 %v304
      %v441 = vunpack.c.l.b16 %v305
      %v442 = vunpack.c.l.b16 %v306
      %v443 = vunpack.c.l.b16 %v307
      %v444 = vunpack.c.l.b16 %v308
      %v445 = vunpack.c.l.b16 %v309
      %v446 = vunpack.c.l.b16 %v310
      %v447 = vunpack.c.l.b16 %v311
      %v448 = vunpack.c.l.b16 %v312
      %v449 = vunpack.c.l.b16 %v313
      %v450 = vunpack.c.l.b16 %v314
      %v451 = vunpack.c.l.b16 %v315
      %v452 = vunpack.c.l.b16 %v316
      %v453 = vunpack.c.l.b16 %v317
      %v454 = vunpack.c.l.b16 %v318
      %v455 = vunpack.c.l.b16 %v319
      %v456 = vunpack.c.l.b16 %v320
      %v457 = vunpack.c.l.b16 %v321
      %v458 = vunpack.c.l.b16 %v322
      %v459 = vunpack.c.l.b16 %v323
      %v460 = vunpack.c.l.b16 %v324
      %v461 = vunpack.c.l.b16 %v325
      %v462 = vunpack.c.l.b16 %v326
      %v463 = vunpack.c.l.b16 %v327
      %v464 = vunpack.c.l.b16 %v328
      %v465 = vunpack.c.l.b16 %v329
      %v466 = vunpack.c.l.b16 %v330
      %v467 = vunpack.c.l.b16 %v331
      %v468 = vunpack.c.l.b16 %v332
      %v469 = vunpack.c.l.b16 %v333
      %v470 = vunpack.c.l.b16 %v334
      %v471 = vunpack.c.l.b16 %v335
      %v472 = vunpack.c.l.b16 %v336
      %v473 = vunpack.c.l.b16 %v337
      %v474 = vunpack.c.l.b16 %v338
      %v475 = vunpack.c.l.b16 %v339
      %v476 = vunpack.c.l.b16 %v340
      %v477 = vunpack.c.l.b16 %v341
      %v478 = vunpack.c.l.b16 %v342
      %v479 = vunpack.c.l.b16 %v343
      %v480 = vunpack.c.l.b16 %v344
      %v481 = vunpack.c.l.b16 %v345
      %v482 = vunpack.c.l.b16 %v346
      %v483 = vpack.c.b16 %v420, %v419
      %v484 = vpack.c.b16 %v422, %v421
      %v485 = vpack.c.b16 %v424, %v423
      %v486 = vpack.c.b16 %v426, %v425
      %v487 = vpack.c.b16 %v428, %v427
      %v488 = vpack.c.b16 %v430, %v429
      %v489 = vpack.c.b16 %v432, %v431
      %v490 = vpack.c.b16 %v434, %v433
      %v491 = vpack.c.b16 %v436, %v435
      %v492 = vpack.c.b16 %v438, %v437
      %v493 = vpack.c.b16 %v440, %v439
      %v494 = vpack.c.b16 %v442, %v441
      %v495 = vpack.c.b16 %v444, %v443
      %v496 = vpack.c.b16 %v446, %v445
      %v497 = vpack.c.b16 %v448, %v447
      %v498 = vpack.c.b16 %v450, %v449
      %v499 = vpack.c.b16 %v452, %v451
      %v500 = vpack.c.b16 %v454, %v453
      %v501 = vpack.c.b16 %v456, %v455
      %v502 = vpack.c.b16 %v458, %v457
      %v503 = vpack.c.b16 %v460, %v459
      %v504 = vpack.c.b16 %v462, %v461
      %v505 = vpack.c.b16 %v464, %v463
      %v506 = vpack.c.b16 %v466, %v465
      %v507 = vpack.c.b16 %v468, %v467
      %v508 = vpack.c.b16 %v470, %v469
      %v509 = vpack.c.b16 %v472, %v471
      %v510 = vpack.c.b16 %v474, %v473
      %v511 = vpack.c.b16 %v476, %v475
      %v512 = vpack.c.b16 %v478, %v477
      %v513 = vpack.c.b16 %v480, %v479
      %v514 = vpack.c.b16 %v482, %v481
      %v517 = vunpack.c.l.b16 %v347
      %v518 = vunpack.c.h.b16 %v347
      %v519 = vunpack.c.l.b16 %v348
      %v520 = vunpack.c.h.b16 %v348
      %v521 = vpack.c.b16 %v519, %v517
      %v522 = vpack.c.b16 %v520, %v518
      %vm525 = vcmask 130048
      %v527 = vsel %vm525, %v483, 0
      %v530 = vsel %vm525, %v484, 0
      %v533 = vsel %vm525, %v485, 0
      %v536 = vsel %vm525, %v486, 0
      %v539 = vsel %vm525, %v487, 0
      %v542 = vsel %vm525, %v488, 0
      %v545 = vsel %vm525, %v489, 0
      %v548 = vsel %vm525, %v490, 0
      %v551 = vsel %vm525, %v491, 0
      %v554 = vsel %vm525, %v492, 0
      %v557 = vsel %vm525, %v493, 0
      %v560 = vsel %vm525, %v494, 0
      %v563 = vsel %vm525, %v495, 0
      %v566 = vsel %vm525, %v496, 0
      %v569 = vsel %vm525, %v497, 0
      %v572 = vsel %vm525, %v498, 0
      %v575 = vsel %vm525, %v499, 0
      %v578 = vsel %vm525, %v500, 0
      %v581 = vsel %vm525, %v501, 0
      %v584 = vsel %vm525, %v502, 0
      %v587 = vsel %vm525, %v503, 0
      %v590 = vsel %vm525, %v504, 0
      %v593 = vsel %vm525, %v505, 0
      %v596 = vsel %vm525, %v506, 0
      %v599 = vsel %vm525, %v507, 0
      %v602 = vsel %vm525, %v508, 0
      %v605 = vsel %vm525, %v509, 0
      %v608 = vsel %vm525, %v510, 0
      %v611 = vsel %vm525, %v511, 0
      %v614 = vsel %vm525, %v512, 0
      %v617 = vsel %vm525, %v513, 0
      %v620 = vsel %vm525, %v514, 0
      %622 = vmatpush.bf16.msra.mxu0 0
      %623 = vmatpush.bf16.msra.mxu0 0
      %624 = vmatpush.bf16.msra.mxu0 0
      %625 = vmatpush.bf16.msra.mxu0 0
      %626 = vmatpush.bf16.msra.mxu0 0
      %627 = vmatpush.bf16.msra.mxu0 0
      %628 = vmatpush.bf16.msra.mxu0 0
      %629 = vmatpush.bf16.msra.mxu0 %v521
      %630 = vmatmul.bf16.gmra.mxu0 %v527
      %v631 = vpop.f32.mrf.mxu0
      %v632 = vadd.f32 %v351, %v631
      %v633 = vpop.f32.mrf.mxu0
      %v634 = vadd.f32 %v351, %v633
      %635 = vmatmul.bf16.gmra.mxu0 %v530
      %v636 = vpop.f32.mrf.mxu0
      %v637 = vadd.f32 %v351, %v636
      %v638 = vpop.f32.mrf.mxu0
      %v639 = vadd.f32 %v351, %v638
      %640 = vmatmul.bf16.gmra.mxu0 %v533
      %v641 = vpop.f32.mrf.mxu0
      %v642 = vadd.f32 %v351, %v641
      %v643 = vpop.f32.mrf.mxu0
      %v644 = vadd.f32 %v351, %v643
      %645 = vmatmul.bf16.gmra.mxu0 %v536
      %v646 = vpop.f32.mrf.mxu0
      %v647 = vadd.f32 %v351, %v646
      %v648 = vpop.f32.mrf.mxu0
      %v649 = vadd.f32 %v351, %v648
      %650 = vmatmul.bf16.gmra.mxu0 %v539
      %v651 = vpop.f32.mrf.mxu0
      %v652 = vadd.f32 %v351, %v651
      %v653 = vpop.f32.mrf.mxu0
      %v654 = vadd.f32 %v351, %v653
      %655 = vmatmul.bf16.gmra.mxu0 %v542
      %v656 = vpop.f32.mrf.mxu0
      %v657 = vadd.f32 %v351, %v656
      %v658 = vpop.f32.mrf.mxu0
      %v659 = vadd.f32 %v351, %v658
      %660 = vmatmul.bf16.gmra.mxu0 %v545
      %v661 = vpop.f32.mrf.mxu0
      %v662 = vadd.f32 %v351, %v661
      %v663 = vpop.f32.mrf.mxu0
      %v664 = vadd.f32 %v351, %v663
      %665 = vmatmul.bf16.gmra.mxu0 %v548
      %v666 = vpop.f32.mrf.mxu0
      %v667 = vadd.f32 %v351, %v666
      %v668 = vpop.f32.mrf.mxu0
      %v669 = vadd.f32 %v351, %v668
      %670 = vmatmul.bf16.gmra.mxu0 %v551
      %v671 = vpop.f32.mrf.mxu0
      %v672 = vadd.f32 %v351, %v671
      %v673 = vpop.f32.mrf.mxu0
      %v674 = vadd.f32 %v351, %v673
      %675 = vmatmul.bf16.gmra.mxu0 %v554
      %v676 = vpop.f32.mrf.mxu0
      %v677 = vadd.f32 %v351, %v676
      %v678 = vpop.f32.mrf.mxu0
      %v679 = vadd.f32 %v351, %v678
      %680 = vmatmul.bf16.gmra.mxu0 %v557
      %v681 = vpop.f32.mrf.mxu0
      %v682 = vadd.f32 %v351, %v681
      %v683 = vpop.f32.mrf.mxu0
      %v684 = vadd.f32 %v351, %v683
      %685 = vmatmul.bf16.gmra.mxu0 %v560
      %v686 = vpop.f32.mrf.mxu0
      %v687 = vadd.f32 %v351, %v686
      %v688 = vpop.f32.mrf.mxu0
      %v689 = vadd.f32 %v351, %v688
      %690 = vmatmul.bf16.gmra.mxu0 %v563
      %v691 = vpop.f32.mrf.mxu0
      %v692 = vadd.f32 %v351, %v691
      %v693 = vpop.f32.mrf.mxu0
      %v694 = vadd.f32 %v351, %v693
      %695 = vmatmul.bf16.gmra.mxu0 %v566
      %v696 = vpop.f32.mrf.mxu0
      %v697 = vadd.f32 %v351, %v696
      %v698 = vpop.f32.mrf.mxu0
      %v699 = vadd.f32 %v351, %v698
      %700 = vmatmul.bf16.gmra.mxu0 %v569
      %v701 = vpop.f32.mrf.mxu0
      %v702 = vadd.f32 %v351, %v701
      %v703 = vpop.f32.mrf.mxu0
      %v704 = vadd.f32 %v351, %v703
      %705 = vmatmul.bf16.gmra.mxu0 %v572
      %v706 = vpop.f32.mrf.mxu0
      %v707 = vadd.f32 %v351, %v706
      %v708 = vpop.f32.mrf.mxu0
      %v709 = vadd.f32 %v351, %v708
      %710 = vmatmul.bf16.gmra.mxu0 %v575
      %v711 = vpop.f32.mrf.mxu0
      %v712 = vadd.f32 %v351, %v711
      %v713 = vpop.f32.mrf.mxu0
      %v714 = vadd.f32 %v351, %v713
      %715 = vmatmul.bf16.gmra.mxu0 %v578
      %v716 = vpop.f32.mrf.mxu0
      %v717 = vadd.f32 %v351, %v716
      %v718 = vpop.f32.mrf.mxu0
      %v719 = vadd.f32 %v351, %v718
      %720 = vmatmul.bf16.gmra.mxu0 %v581
      %v721 = vpop.f32.mrf.mxu0
      %v722 = vadd.f32 %v351, %v721
      %v723 = vpop.f32.mrf.mxu0
      %v724 = vadd.f32 %v351, %v723
      %725 = vmatmul.bf16.gmra.mxu0 %v584
      %v726 = vpop.f32.mrf.mxu0
      %v727 = vadd.f32 %v351, %v726
      %v728 = vpop.f32.mrf.mxu0
      %v729 = vadd.f32 %v351, %v728
      %730 = vmatmul.bf16.gmra.mxu0 %v587
      %v731 = vpop.f32.mrf.mxu0
      %v732 = vadd.f32 %v351, %v731
      %v733 = vpop.f32.mrf.mxu0
      %v734 = vadd.f32 %v351, %v733
      %735 = vmatmul.bf16.gmra.mxu0 %v590
      %v736 = vpop.f32.mrf.mxu0
      %v737 = vadd.f32 %v351, %v736
      %v738 = vpop.f32.mrf.mxu0
      %v739 = vadd.f32 %v351, %v738
      %740 = vmatmul.bf16.gmra.mxu0 %v593
      %v741 = vpop.f32.mrf.mxu0
      %v742 = vadd.f32 %v351, %v741
      %v743 = vpop.f32.mrf.mxu0
      %v744 = vadd.f32 %v351, %v743
      %745 = vmatmul.bf16.gmra.mxu0 %v596
      %v746 = vpop.f32.mrf.mxu0
      %v747 = vadd.f32 %v351, %v746
      %v748 = vpop.f32.mrf.mxu0
      %v749 = vadd.f32 %v351, %v748
      %750 = vmatmul.bf16.gmra.mxu0 %v599
      %v751 = vpop.f32.mrf.mxu0
      %v752 = vadd.f32 %v351, %v751
      %v753 = vpop.f32.mrf.mxu0
      %v754 = vadd.f32 %v351, %v753
      %755 = vmatmul.bf16.gmra.mxu0 %v602
      %v756 = vpop.f32.mrf.mxu0
      %v757 = vadd.f32 %v351, %v756
      %v758 = vpop.f32.mrf.mxu0
      %v759 = vadd.f32 %v351, %v758
      %760 = vmatmul.bf16.gmra.mxu0 %v605
      %v761 = vpop.f32.mrf.mxu0
      %v762 = vadd.f32 %v351, %v761
      %v763 = vpop.f32.mrf.mxu0
      %v764 = vadd.f32 %v351, %v763
      %765 = vmatmul.bf16.gmra.mxu0 %v608
      %v766 = vpop.f32.mrf.mxu0
      %v767 = vadd.f32 %v351, %v766
      %v768 = vpop.f32.mrf.mxu0
      %v769 = vadd.f32 %v351, %v768
      %770 = vmatmul.bf16.gmra.mxu0 %v611
      %v771 = vpop.f32.mrf.mxu0
      %v772 = vadd.f32 %v351, %v771
      %v773 = vpop.f32.mrf.mxu0
      %v774 = vadd.f32 %v351, %v773
      %775 = vmatmul.bf16.gmra.mxu0 %v614
      %v776 = vpop.f32.mrf.mxu0
      %v777 = vadd.f32 %v351, %v776
      %v778 = vpop.f32.mrf.mxu0
      %v779 = vadd.f32 %v351, %v778
      %780 = vmatmul.bf16.gmra.mxu0 %v617
      %v781 = vpop.f32.mrf.mxu0
      %v782 = vadd.f32 %v351, %v781
      %v783 = vpop.f32.mrf.mxu0
      %v784 = vadd.f32 %v351, %v783
      %785 = vmatmul.bf16.gmra.mxu0 %v620
      %v786 = vpop.f32.mrf.mxu0
      %v787 = vadd.f32 %v351, %v786
      %v788 = vpop.f32.mrf.mxu0
      %v789 = vadd.f32 %v351, %v788
      %790 = vdwg.mxu0
      %791 = vmatpush.bf16.msra.mxu0 0
      %792 = vmatpush.bf16.msra.mxu0 0
      %793 = vmatpush.bf16.msra.mxu0 0
      %794 = vmatpush.bf16.msra.mxu0 0
      %795 = vmatpush.bf16.msra.mxu0 0
      %796 = vmatpush.bf16.msra.mxu0 0
      %797 = vmatpush.bf16.msra.mxu0 0
      %798 = vmatpush.bf16.msra.mxu0 %v522
      %799 = vmatmul.bf16.gmra.mxu0 %v527
      %v800 = vpop.f32.mrf.mxu0
      %v801 = vadd.f32 %v352, %v800
      %v802 = vpop.f32.mrf.mxu0
      %v803 = vadd.f32 %v352, %v802
      %804 = vmatmul.bf16.gmra.mxu0 %v530
      %v805 = vpop.f32.mrf.mxu0
      %v806 = vadd.f32 %v352, %v805
      %v807 = vpop.f32.mrf.mxu0
      %v808 = vadd.f32 %v352, %v807
      %809 = vmatmul.bf16.gmra.mxu0 %v533
      %v810 = vpop.f32.mrf.mxu0
      %v811 = vadd.f32 %v352, %v810
      %v812 = vpop.f32.mrf.mxu0
      %v813 = vadd.f32 %v352, %v812
      %814 = vmatmul.bf16.gmra.mxu0 %v536
      %v815 = vpop.f32.mrf.mxu0
      %v816 = vadd.f32 %v352, %v815
      %v817 = vpop.f32.mrf.mxu0
      %v818 = vadd.f32 %v352, %v817
      %819 = vmatmul.bf16.gmra.mxu0 %v539
      %v820 = vpop.f32.mrf.mxu0
      %v821 = vadd.f32 %v352, %v820
      %v822 = vpop.f32.mrf.mxu0
      %v823 = vadd.f32 %v352, %v822
      %824 = vmatmul.bf16.gmra.mxu0 %v542
      %v825 = vpop.f32.mrf.mxu0
      %v826 = vadd.f32 %v352, %v825
      %v827 = vpop.f32.mrf.mxu0
      %v828 = vadd.f32 %v352, %v827
      %829 = vmatmul.bf16.gmra.mxu0 %v545
      %v830 = vpop.f32.mrf.mxu0
      %v831 = vadd.f32 %v352, %v830
      %v832 = vpop.f32.mrf.mxu0
      %v833 = vadd.f32 %v352, %v832
      %834 = vmatmul.bf16.gmra.mxu0 %v548
      %v835 = vpop.f32.mrf.mxu0
      %v836 = vadd.f32 %v352, %v835
      %v837 = vpop.f32.mrf.mxu0
      %v838 = vadd.f32 %v352, %v837
      %839 = vmatmul.bf16.gmra.mxu0 %v551
      %v840 = vpop.f32.mrf.mxu0
      %v841 = vadd.f32 %v352, %v840
      %v842 = vpop.f32.mrf.mxu0
      %v843 = vadd.f32 %v352, %v842
      %844 = vmatmul.bf16.gmra.mxu0 %v554
      %v845 = vpop.f32.mrf.mxu0
      %v846 = vadd.f32 %v352, %v845
      %v847 = vpop.f32.mrf.mxu0
      %v848 = vadd.f32 %v352, %v847
      %849 = vmatmul.bf16.gmra.mxu0 %v557
      %v850 = vpop.f32.mrf.mxu0
      %v851 = vadd.f32 %v352, %v850
      %v852 = vpop.f32.mrf.mxu0
      %v853 = vadd.f32 %v352, %v852
      %854 = vmatmul.bf16.gmra.mxu0 %v560
      %v855 = vpop.f32.mrf.mxu0
      %v856 = vadd.f32 %v352, %v855
      %v857 = vpop.f32.mrf.mxu0
      %v858 = vadd.f32 %v352, %v857
      %859 = vmatmul.bf16.gmra.mxu0 %v563
      %v860 = vpop.f32.mrf.mxu0
      %v861 = vadd.f32 %v352, %v860
      %v862 = vpop.f32.mrf.mxu0
      %v863 = vadd.f32 %v352, %v862
      %864 = vmatmul.bf16.gmra.mxu0 %v566
      %v865 = vpop.f32.mrf.mxu0
      %v866 = vadd.f32 %v352, %v865
      %v867 = vpop.f32.mrf.mxu0
      %v868 = vadd.f32 %v352, %v867
      %869 = vmatmul.bf16.gmra.mxu0 %v569
      %v870 = vpop.f32.mrf.mxu0
      %v871 = vadd.f32 %v352, %v870
      %v872 = vpop.f32.mrf.mxu0
      %v873 = vadd.f32 %v352, %v872
      %874 = vmatmul.bf16.gmra.mxu0 %v572
      %v875 = vpop.f32.mrf.mxu0
      %v876 = vadd.f32 %v352, %v875
      %v877 = vpop.f32.mrf.mxu0
      %v878 = vadd.f32 %v352, %v877
      %879 = vmatmul.bf16.gmra.mxu0 %v575
      %v880 = vpop.f32.mrf.mxu0
      %v881 = vadd.f32 %v352, %v880
      %v882 = vpop.f32.mrf.mxu0
      %v883 = vadd.f32 %v352, %v882
      %884 = vmatmul.bf16.gmra.mxu0 %v578
      %v885 = vpop.f32.mrf.mxu0
      %v886 = vadd.f32 %v352, %v885
      %v887 = vpop.f32.mrf.mxu0
      %v888 = vadd.f32 %v352, %v887
      %889 = vmatmul.bf16.gmra.mxu0 %v581
      %v890 = vpop.f32.mrf.mxu0
      %v891 = vadd.f32 %v352, %v890
      %v892 = vpop.f32.mrf.mxu0
      %v893 = vadd.f32 %v352, %v892
      %894 = vmatmul.bf16.gmra.mxu0 %v584
      %v895 = vpop.f32.mrf.mxu0
      %v896 = vadd.f32 %v352, %v895
      %v897 = vpop.f32.mrf.mxu0
      %v898 = vadd.f32 %v352, %v897
      %899 = vmatmul.bf16.gmra.mxu0 %v587
      %v900 = vpop.f32.mrf.mxu0
      %v901 = vadd.f32 %v352, %v900
      %v902 = vpop.f32.mrf.mxu0
      %v903 = vadd.f32 %v352, %v902
      %904 = vmatmul.bf16.gmra.mxu0 %v590
      %v905 = vpop.f32.mrf.mxu0
      %v906 = vadd.f32 %v352, %v905
      %v907 = vpop.f32.mrf.mxu0
      %v908 = vadd.f32 %v352, %v907
      %909 = vmatmul.bf16.gmra.mxu0 %v593
      %v910 = vpop.f32.mrf.mxu0
      %v911 = vadd.f32 %v352, %v910
      %v912 = vpop.f32.mrf.mxu0
      %v913 = vadd.f32 %v352, %v912
      %914 = vmatmul.bf16.gmra.mxu0 %v596
      %v915 = vpop.f32.mrf.mxu0
      %v916 = vadd.f32 %v352, %v915
      %v917 = vpop.f32.mrf.mxu0
      %v918 = vadd.f32 %v352, %v917
      %919 = vmatmul.bf16.gmra.mxu0 %v599
      %v920 = vpop.f32.mrf.mxu0
      %v921 = vadd.f32 %v352, %v920
      %v922 = vpop.f32.mrf.mxu0
      %v923 = vadd.f32 %v352, %v922
      %924 = vmatmul.bf16.gmra.mxu0 %v602
      %v925 = vpop.f32.mrf.mxu0
      %v926 = vadd.f32 %v352, %v925
      %v927 = vpop.f32.mrf.mxu0
      %v928 = vadd.f32 %v352, %v927
      %929 = vmatmul.bf16.gmra.mxu0 %v605
      %v930 = vpop.f32.mrf.mxu0
      %v931 = vadd.f32 %v352, %v930
      %v932 = vpop.f32.mrf.mxu0
      %v933 = vadd.f32 %v352, %v932
      %934 = vmatmul.bf16.gmra.mxu0 %v608
      %v935 = vpop.f32.mrf.mxu0
      %v936 = vadd.f32 %v352, %v935
      %v937 = vpop.f32.mrf.mxu0
      %v938 = vadd.f32 %v352, %v937
      %939 = vmatmul.bf16.gmra.mxu0 %v611
      %v940 = vpop.f32.mrf.mxu0
      %v941 = vadd.f32 %v352, %v940
      %v942 = vpop.f32.mrf.mxu0
      %v943 = vadd.f32 %v352, %v942
      %944 = vmatmul.bf16.gmra.mxu0 %v614
      %v945 = vpop.f32.mrf.mxu0
      %v946 = vadd.f32 %v352, %v945
      %v947 = vpop.f32.mrf.mxu0
      %v948 = vadd.f32 %v352, %v947
      %949 = vmatmul.bf16.gmra.mxu0 %v617
      %v950 = vpop.f32.mrf.mxu0
      %v951 = vadd.f32 %v352, %v950
      %v952 = vpop.f32.mrf.mxu0
      %v953 = vadd.f32 %v352, %v952
      %954 = vmatmul.bf16.gmra.mxu0 %v620
      %v955 = vpop.f32.mrf.mxu0
      %v956 = vadd.f32 %v352, %v955
      %v957 = vpop.f32.mrf.mxu0
      %v958 = vadd.f32 %v352, %v957
      %959 = vdwg.mxu0
      %vm960 = vcmp.ge.f32.partialorder %v632, 0.0
      %vm961 = vcmp.ge.f32.partialorder %v801, 0.0
      %vm962 = vcmp.ge.f32.partialorder %v634, 0.0
      %vm963 = vcmp.ge.f32.partialorder %v803, 0.0
      %vm964 = vcmp.ge.f32.partialorder %v637, 0.0
      %vm965 = vcmp.ge.f32.partialorder %v806, 0.0
      %vm966 = vcmp.ge.f32.partialorder %v639, 0.0
      %vm967 = vcmp.ge.f32.partialorder %v808, 0.0
      %vm968 = vcmp.ge.f32.partialorder %v642, 0.0
      %vm969 = vcmp.ge.f32.partialorder %v811, 0.0
      %vm970 = vcmp.ge.f32.partialorder %v644, 0.0
      %vm971 = vcmp.ge.f32.partialorder %v813, 0.0
      %vm972 = vcmp.ge.f32.partialorder %v647, 0.0
      %vm973 = vcmp.ge.f32.partialorder %v816, 0.0
      %vm974 = vcmp.ge.f32.partialorder %v649, 0.0
      %vm975 = vcmp.ge.f32.partialorder %v818, 0.0
      %vm976 = vcmp.ge.f32.partialorder %v652, 0.0
      %vm977 = vcmp.ge.f32.partialorder %v821, 0.0
      %vm978 = vcmp.ge.f32.partialorder %v654, 0.0
      %vm979 = vcmp.ge.f32.partialorder %v823, 0.0
      %vm980 = vcmp.ge.f32.partialorder %v657, 0.0
      %vm981 = vcmp.ge.f32.partialorder %v826, 0.0
      %vm982 = vcmp.ge.f32.partialorder %v659, 0.0
      %vm983 = vcmp.ge.f32.partialorder %v828, 0.0
      %vm984 = vcmp.ge.f32.partialorder %v662, 0.0
      %vm985 = vcmp.ge.f32.partialorder %v831, 0.0
      %vm986 = vcmp.ge.f32.partialorder %v664, 0.0
      %vm987 = vcmp.ge.f32.partialorder %v833, 0.0
      %vm988 = vcmp.ge.f32.partialorder %v667, 0.0
      %vm989 = vcmp.ge.f32.partialorder %v836, 0.0
      %vm990 = vcmp.ge.f32.partialorder %v669, 0.0
      %vm991 = vcmp.ge.f32.partialorder %v838, 0.0
      %vm992 = vcmp.ge.f32.partialorder %v672, 0.0
      %vm993 = vcmp.ge.f32.partialorder %v841, 0.0
      %vm994 = vcmp.ge.f32.partialorder %v674, 0.0
      %vm995 = vcmp.ge.f32.partialorder %v843, 0.0
      %vm996 = vcmp.ge.f32.partialorder %v677, 0.0
      %vm997 = vcmp.ge.f32.partialorder %v846, 0.0
      %vm998 = vcmp.ge.f32.partialorder %v679, 0.0
      %vm999 = vcmp.ge.f32.partialorder %v848, 0.0
      %vm1000 = vcmp.ge.f32.partialorder %v682, 0.0
      %vm1001 = vcmp.ge.f32.partialorder %v851, 0.0
      %vm1002 = vcmp.ge.f32.partialorder %v684, 0.0
      %vm1003 = vcmp.ge.f32.partialorder %v853, 0.0
      %vm1004 = vcmp.ge.f32.partialorder %v687, 0.0
      %vm1005 = vcmp.ge.f32.partialorder %v856, 0.0
      %vm1006 = vcmp.ge.f32.partialorder %v689, 0.0
      %vm1007 = vcmp.ge.f32.partialorder %v858, 0.0
      %vm1008 = vcmp.ge.f32.partialorder %v692, 0.0
      %vm1009 = vcmp.ge.f32.partialorder %v861, 0.0
      %vm1010 = vcmp.ge.f32.partialorder %v694, 0.0
      %vm1011 = vcmp.ge.f32.partialorder %v863, 0.0
      %vm1012 = vcmp.ge.f32.partialorder %v697, 0.0
      %vm1013 = vcmp.ge.f32.partialorder %v866, 0.0
      %vm1014 = vcmp.ge.f32.partialorder %v699, 0.0
      %vm1015 = vcmp.ge.f32.partialorder %v868, 0.0
      %vm1016 = vcmp.ge.f32.partialorder %v702, 0.0
      %vm1017 = vcmp.ge.f32.partialorder %v871, 0.0
      %vm1018 = vcmp.ge.f32.partialorder %v704, 0.0
      %vm1019 = vcmp.ge.f32.partialorder %v873, 0.0
      %vm1020 = vcmp.ge.f32.partialorder %v707, 0.0
      %vm1021 = vcmp.ge.f32.partialorder %v876, 0.0
      %vm1022 = vcmp.ge.f32.partialorder %v709, 0.0
      %vm1023 = vcmp.ge.f32.partialorder %v878, 0.0
      %vm1024 = vcmp.ge.f32.partialorder %v712, 0.0
      %vm1025 = vcmp.ge.f32.partialorder %v881, 0.0
      %vm1026 = vcmp.ge.f32.partialorder %v714, 0.0
      %vm1027 = vcmp.ge.f32.partialorder %v883, 0.0
      %vm1028 = vcmp.ge.f32.partialorder %v717, 0.0
      %vm1029 = vcmp.ge.f32.partialorder %v886, 0.0
      %vm1030 = vcmp.ge.f32.partialorder %v719, 0.0
      %vm1031 = vcmp.ge.f32.partialorder %v888, 0.0
      %vm1032 = vcmp.ge.f32.partialorder %v722, 0.0
      %vm1033 = vcmp.ge.f32.partialorder %v891, 0.0
      %vm1034 = vcmp.ge.f32.partialorder %v724, 0.0
      %vm1035 = vcmp.ge.f32.partialorder %v893, 0.0
      %vm1036 = vcmp.ge.f32.partialorder %v727, 0.0
      %vm1037 = vcmp.ge.f32.partialorder %v896, 0.0
      %vm1038 = vcmp.ge.f32.partialorder %v729, 0.0
      %vm1039 = vcmp.ge.f32.partialorder %v898, 0.0
      %vm1040 = vcmp.ge.f32.partialorder %v732, 0.0
      %vm1041 = vcmp.ge.f32.partialorder %v901, 0.0
      %vm1042 = vcmp.ge.f32.partialorder %v734, 0.0
      %vm1043 = vcmp.ge.f32.partialorder %v903, 0.0
      %vm1044 = vcmp.ge.f32.partialorder %v737, 0.0
      %vm1045 = vcmp.ge.f32.partialorder %v906, 0.0
      %vm1046 = vcmp.ge.f32.partialorder %v739, 0.0
      %vm1047 = vcmp.ge.f32.partialorder %v908, 0.0
      %vm1048 = vcmp.ge.f32.partialorder %v742, 0.0
      %vm1049 = vcmp.ge.f32.partialorder %v911, 0.0
      %vm1050 = vcmp.ge.f32.partialorder %v744, 0.0
      %vm1051 = vcmp.ge.f32.partialorder %v913, 0.0
      %vm1052 = vcmp.ge.f32.partialorder %v747, 0.0
      %vm1053 = vcmp.ge.f32.partialorder %v916, 0.0
      %vm1054 = vcmp.ge.f32.partialorder %v749, 0.0
      %vm1055 = vcmp.ge.f32.partialorder %v918, 0.0
      %vm1056 = vcmp.ge.f32.partialorder %v752, 0.0
      %vm1057 = vcmp.ge.f32.partialorder %v921, 0.0
      %vm1058 = vcmp.ge.f32.partialorder %v754, 0.0
      %vm1059 = vcmp.ge.f32.partialorder %v923, 0.0
      %vm1060 = vcmp.ge.f32.partialorder %v757, 0.0
      %vm1061 = vcmp.ge.f32.partialorder %v926, 0.0
      %vm1062 = vcmp.ge.f32.partialorder %v759, 0.0
      %vm1063 = vcmp.ge.f32.partialorder %v928, 0.0
      %vm1064 = vcmp.ge.f32.partialorder %v762, 0.0
      %vm1065 = vcmp.ge.f32.partialorder %v931, 0.0
      %vm1066 = vcmp.ge.f32.partialorder %v764, 0.0
      %vm1067 = vcmp.ge.f32.partialorder %v933, 0.0
      %vm1068 = vcmp.ge.f32.partialorder %v767, 0.0
      %vm1069 = vcmp.ge.f32.partialorder %v936, 0.0
      %vm1070 = vcmp.ge.f32.partialorder %v769, 0.0
      %vm1071 = vcmp.ge.f32.partialorder %v938, 0.0
      %vm1072 = vcmp.ge.f32.partialorder %v772, 0.0
      %vm1073 = vcmp.ge.f32.partialorder %v941, 0.0
      %vm1074 = vcmp.ge.f32.partialorder %v774, 0.0
      %vm1075 = vcmp.ge.f32.partialorder %v943, 0.0
      %vm1076 = vcmp.ge.f32.partialorder %v777, 0.0
      %vm1077 = vcmp.ge.f32.partialorder %v946, 0.0
      %vm1078 = vcmp.ge.f32.partialorder %v779, 0.0
      %vm1079 = vcmp.ge.f32.partialorder %v948, 0.0
      %vm1080 = vcmp.ge.f32.partialorder %v782, 0.0
      %vm1081 = vcmp.ge.f32.partialorder %v951, 0.0
      %vm1082 = vcmp.ge.f32.partialorder %v784, 0.0
      %vm1083 = vcmp.ge.f32.partialorder %v953, 0.0
      %vm1084 = vcmp.ge.f32.partialorder %v787, 0.0
      %vm1085 = vcmp.ge.f32.partialorder %v956, 0.0
      %vm1086 = vcmp.ge.f32.partialorder %v789, 0.0
      %vm1087 = vcmp.ge.f32.partialorder %v958, 0.0
      %v1088 = vmul.f32 %v632, 0.2
      %v1089 = vmul.f32 %v801, 0.2
      %v1090 = vmul.f32 %v634, 0.2
      %v1091 = vmul.f32 %v803, 0.2
      %v1092 = vmul.f32 %v637, 0.2
      %v1093 = vmul.f32 %v806, 0.2
      %v1094 = vmul.f32 %v639, 0.2
      %v1095 = vmul.f32 %v808, 0.2
      %v1096 = vmul.f32 %v642, 0.2
      %v1097 = vmul.f32 %v811, 0.2
      %v1098 = vmul.f32 %v644, 0.2
      %v1099 = vmul.f32 %v813, 0.2
      %v1100 = vmul.f32 %v647, 0.2
      %v1101 = vmul.f32 %v816, 0.2
      %v1102 = vmul.f32 %v649, 0.2
      %v1103 = vmul.f32 %v818, 0.2
      %v1104 = vmul.f32 %v652, 0.2
      %v1105 = vmul.f32 %v821, 0.2
      %v1106 = vmul.f32 %v654, 0.2
      %v1107 = vmul.f32 %v823, 0.2
      %v1108 = vmul.f32 %v657, 0.2
      %v1109 = vmul.f32 %v826, 0.2
      %v1110 = vmul.f32 %v659, 0.2
      %v1111 = vmul.f32 %v828, 0.2
      %v1112 = vmul.f32 %v662, 0.2
      %v1113 = vmul.f32 %v831, 0.2
      %v1114 = vmul.f32 %v664, 0.2
      %v1115 = vmul.f32 %v833, 0.2
      %v1116 = vmul.f32 %v667, 0.2
      %v1117 = vmul.f32 %v836, 0.2
      %v1118 = vmul.f32 %v669, 0.2
      %v1119 = vmul.f32 %v838, 0.2
      %v1120 = vmul.f32 %v672, 0.2
      %v1121 = vmul.f32 %v841, 0.2
      %v1122 = vmul.f32 %v674, 0.2
      %v1123 = vmul.f32 %v843, 0.2
      %v1124 = vmul.f32 %v677, 0.2
      %v1125 = vmul.f32 %v846, 0.2
      %v1126 = vmul.f32 %v679, 0.2
      %v1127 = vmul.f32 %v848, 0.2
      %v1128 = vmul.f32 %v682, 0.2
      %v1129 = vmul.f32 %v851, 0.2
      %v1130 = vmul.f32 %v684, 0.2
      %v1131 = vmul.f32 %v853, 0.2
      %v1132 = vmul.f32 %v687, 0.2
      %v1133 = vmul.f32 %v856, 0.2
      %v1134 = vmul.f32 %v689, 0.2
      %v1135 = vmul.f32 %v858, 0.2
      %v1136 = vmul.f32 %v692, 0.2
      %v1137 = vmul.f32 %v861, 0.2
      %v1138 = vmul.f32 %v694, 0.2
      %v1139 = vmul.f32 %v863, 0.2
      %v1140 = vmul.f32 %v697, 0.2
      %v1141 = vmul.f32 %v866, 0.2
      %v1142 = vmul.f32 %v699, 0.2
      %v1143 = vmul.f32 %v868, 0.2
      %v1144 = vmul.f32 %v702, 0.2
      %v1145 = vmul.f32 %v871, 0.2
      %v1146 = vmul.f32 %v704, 0.2
      %v1147 = vmul.f32 %v873, 0.2
      %v1148 = vmul.f32 %v707, 0.2
      %v1149 = vmul.f32 %v876, 0.2
      %v1150 = vmul.f32 %v709, 0.2
      %v1151 = vmul.f32 %v878, 0.2
      %v1152 = vmul.f32 %v712, 0.2
      %v1153 = vmul.f32 %v881, 0.2
      %v1154 = vmul.f32 %v714, 0.2
      %v1155 = vmul.f32 %v883, 0.2
      %v1156 = vmul.f32 %v717, 0.2
      %v1157 = vmul.f32 %v886, 0.2
      %v1158 = vmul.f32 %v719, 0.2
      %v1159 = vmul.f32 %v888, 0.2
      %v1160 = vmul.f32 %v722, 0.2
      %v1161 = vmul.f32 %v891, 0.2
      %v1162 = vmul.f32 %v724, 0.2
      %v1163 = vmul.f32 %v893, 0.2
      %v1164 = vmul.f32 %v727, 0.2
      %v1165 = vmul.f32 %v896, 0.2
      %v1166 = vmul.f32 %v729, 0.2
      %v1167 = vmul.f32 %v898, 0.2
      %v1168 = vmul.f32 %v732, 0.2
      %v1169 = vmul.f32 %v901, 0.2
      %v1170 = vmul.f32 %v734, 0.2
      %v1171 = vmul.f32 %v903, 0.2
      %v1172 = vmul.f32 %v737, 0.2
      %v1173 = vmul.f32 %v906, 0.2
      %v1174 = vmul.f32 %v739, 0.2
      %v1175 = vmul.f32 %v908, 0.2
      %v1176 = vmul.f32 %v742, 0.2
      %v1177 = vmul.f32 %v911, 0.2
      %v1178 = vmul.f32 %v744, 0.2
      %v1179 = vmul.f32 %v913, 0.2
      %v1180 = vmul.f32 %v747, 0.2
      %v1181 = vmul.f32 %v916, 0.2
      %v1182 = vmul.f32 %v749, 0.2
      %v1183 = vmul.f32 %v918, 0.2
      %v1184 = vmul.f32 %v752, 0.2
      %v1185 = vmul.f32 %v921, 0.2
      %v1186 = vmul.f32 %v754, 0.2
      %v1187 = vmul.f32 %v923, 0.2
      %v1188 = vmul.f32 %v757, 0.2
      %v1189 = vmul.f32 %v926, 0.2
      %v1190 = vmul.f32 %v759, 0.2
      %v1191 = vmul.f32 %v928, 0.2
      %v1192 = vmul.f32 %v762, 0.2
      %v1193 = vmul.f32 %v931, 0.2
      %v1194 = vmul.f32 %v764, 0.2
      %v1195 = vmul.f32 %v933, 0.2
      %v1196 = vmul.f32 %v767, 0.2
      %v1197 = vmul.f32 %v936, 0.2
      %v1198 = vmul.f32 %v769, 0.2
      %v1199 = vmul.f32 %v938, 0.2
      %v1200 = vmul.f32 %v772, 0.2
      %v1201 = vmul.f32 %v941, 0.2
      %v1202 = vmul.f32 %v774, 0.2
      %v1203 = vmul.f32 %v943, 0.2
      %v1204 = vmul.f32 %v777, 0.2
      %v1205 = vmul.f32 %v946, 0.2
      %v1206 = vmul.f32 %v779, 0.2
      %v1207 = vmul.f32 %v948, 0.2
      %v1208 = vmul.f32 %v782, 0.2
      %v1209 = vmul.f32 %v951, 0.2
      %v1210 = vmul.f32 %v784, 0.2
      %v1211 = vmul.f32 %v953, 0.2
      %v1212 = vmul.f32 %v787, 0.2
      %v1213 = vmul.f32 %v956, 0.2
      %v1214 = vmul.f32 %v789, 0.2
      %v1215 = vmul.f32 %v958, 0.2
      %v1216 = vsel %vm960, %v632, %v1088
      %v1217 = vsel %vm961, %v801, %v1089
      %v1218 = vsel %vm962, %v634, %v1090
      %v1219 = vsel %vm963, %v803, %v1091
      %v1220 = vsel %vm964, %v637, %v1092
      %v1221 = vsel %vm965, %v806, %v1093
      %v1222 = vsel %vm966, %v639, %v1094
      %v1223 = vsel %vm967, %v808, %v1095
      %v1224 = vsel %vm968, %v642, %v1096
      %v1225 = vsel %vm969, %v811, %v1097
      %v1226 = vsel %vm970, %v644, %v1098
      %v1227 = vsel %vm971, %v813, %v1099
      %v1228 = vsel %vm972, %v647, %v1100
      %v1229 = vsel %vm973, %v816, %v1101
      %v1230 = vsel %vm974, %v649, %v1102
      %v1231 = vsel %vm975, %v818, %v1103
      %v1232 = vsel %vm976, %v652, %v1104
      %v1233 = vsel %vm977, %v821, %v1105
      %v1234 = vsel %vm978, %v654, %v1106
      %v1235 = vsel %vm979, %v823, %v1107
      %v1236 = vsel %vm980, %v657, %v1108
      %v1237 = vsel %vm981, %v826, %v1109
      %v1238 = vsel %vm982, %v659, %v1110
      %v1239 = vsel %vm983, %v828, %v1111
      %v1240 = vsel %vm984, %v662, %v1112
      %v1241 = vsel %vm985, %v831, %v1113
      %v1242 = vsel %vm986, %v664, %v1114
      %v1243 = vsel %vm987, %v833, %v1115
      %v1244 = vsel %vm988, %v667, %v1116
      %v1245 = vsel %vm989, %v836, %v1117
      %v1246 = vsel %vm990, %v669, %v1118
      %v1247 = vsel %vm991, %v838, %v1119
      %v1248 = vsel %vm992, %v672, %v1120
      %v1249 = vsel %vm993, %v841, %v1121
      %v1250 = vsel %vm994, %v674, %v1122
      %v1251 = vsel %vm995, %v843, %v1123
      %v1252 = vsel %vm996, %v677, %v1124
      %v1253 = vsel %vm997, %v846, %v1125
      %v1254 = vsel %vm998, %v679, %v1126
      %v1255 = vsel %vm999, %v848, %v1127
      %v1256 = vsel %vm1000, %v682, %v1128
      %v1257 = vsel %vm1001, %v851, %v1129
      %v1258 = vsel %vm1002, %v684, %v1130
      %v1259 = vsel %vm1003, %v853, %v1131
      %v1260 = vsel %vm1004, %v687, %v1132
      %v1261 = vsel %vm1005, %v856, %v1133
      %v1262 = vsel %vm1006, %v689, %v1134
      %v1263 = vsel %vm1007, %v858, %v1135
      %v1264 = vsel %vm1008, %v692, %v1136
      %v1265 = vsel %vm1009, %v861, %v1137
      %v1266 = vsel %vm1010, %v694, %v1138
      %v1267 = vsel %vm1011, %v863, %v1139
      %v1268 = vsel %vm1012, %v697, %v1140
      %v1269 = vsel %vm1013, %v866, %v1141
      %v1270 = vsel %vm1014, %v699, %v1142
      %v1271 = vsel %vm1015, %v868, %v1143
      %v1272 = vsel %vm1016, %v702, %v1144
      %v1273 = vsel %vm1017, %v871, %v1145
      %v1274 = vsel %vm1018, %v704, %v1146
      %v1275 = vsel %vm1019, %v873, %v1147
      %v1276 = vsel %vm1020, %v707, %v1148
      %v1277 = vsel %vm1021, %v876, %v1149
      %v1278 = vsel %vm1022, %v709, %v1150
      %v1279 = vsel %vm1023, %v878, %v1151
      %v1280 = vsel %vm1024, %v712, %v1152
      %v1281 = vsel %vm1025, %v881, %v1153
      %v1282 = vsel %vm1026, %v714, %v1154
      %v1283 = vsel %vm1027, %v883, %v1155
      %v1284 = vsel %vm1028, %v717, %v1156
      %v1285 = vsel %vm1029, %v886, %v1157
      %v1286 = vsel %vm1030, %v719, %v1158
      %v1287 = vsel %vm1031, %v888, %v1159
      %v1288 = vsel %vm1032, %v722, %v1160
      %v1289 = vsel %vm1033, %v891, %v1161
      %v1290 = vsel %vm1034, %v724, %v1162
      %v1291 = vsel %vm1035, %v893, %v1163
      %v1292 = vsel %vm1036, %v727, %v1164
      %v1293 = vsel %vm1037, %v896, %v1165
      %v1294 = vsel %vm1038, %v729, %v1166
      %v1295 = vsel %vm1039, %v898, %v1167
      %v1296 = vsel %vm1040, %v732, %v1168
      %v1297 = vsel %vm1041, %v901, %v1169
      %v1298 = vsel %vm1042, %v734, %v1170
      %v1299 = vsel %vm1043, %v903, %v1171
      %v1300 = vsel %vm1044, %v737, %v1172
      %v1301 = vsel %vm1045, %v906, %v1173
      %v1302 = vsel %vm1046, %v739, %v1174
      %v1303 = vsel %vm1047, %v908, %v1175
      %v1304 = vsel %vm1048, %v742, %v1176
      %v1305 = vsel %vm1049, %v911, %v1177
      %v1306 = vsel %vm1050, %v744, %v1178
      %v1307 = vsel %vm1051, %v913, %v1179
      %v1308 = vsel %vm1052, %v747, %v1180
      %v1309 = vsel %vm1053, %v916, %v1181
      %v1310 = vsel %vm1054, %v749, %v1182
      %v1311 = vsel %vm1055, %v918, %v1183
      %v1312 = vsel %vm1056, %v752, %v1184
      %v1313 = vsel %vm1057, %v921, %v1185
      %v1314 = vsel %vm1058, %v754, %v1186
      %v1315 = vsel %vm1059, %v923, %v1187
      %v1316 = vsel %vm1060, %v757, %v1188
      %v1317 = vsel %vm1061, %v926, %v1189
      %v1318 = vsel %vm1062, %v759, %v1190
      %v1319 = vsel %vm1063, %v928, %v1191
      %v1320 = vsel %vm1064, %v762, %v1192
      %v1321 = vsel %vm1065, %v931, %v1193
      %v1322 = vsel %vm1066, %v764, %v1194
      %v1323 = vsel %vm1067, %v933, %v1195
      %v1324 = vsel %vm1068, %v767, %v1196
      %v1325 = vsel %vm1069, %v936, %v1197
      %v1326 = vsel %vm1070, %v769, %v1198
      %v1327 = vsel %vm1071, %v938, %v1199
      %v1328 = vsel %vm1072, %v772, %v1200
      %v1329 = vsel %vm1073, %v941, %v1201
      %v1330 = vsel %vm1074, %v774, %v1202
      %v1331 = vsel %vm1075, %v943, %v1203
      %v1332 = vsel %vm1076, %v777, %v1204
      %v1333 = vsel %vm1077, %v946, %v1205
      %v1334 = vsel %vm1078, %v779, %v1206
      %v1335 = vsel %vm1079, %v948, %v1207
      %v1336 = vsel %vm1080, %v782, %v1208
      %v1337 = vsel %vm1081, %v951, %v1209
      %v1338 = vsel %vm1082, %v784, %v1210
      %v1339 = vsel %vm1083, %v953, %v1211
      %v1340 = vsel %vm1084, %v787, %v1212
      %v1341 = vsel %vm1085, %v956, %v1213
      %v1342 = vsel %vm1086, %v789, %v1214
      %v1343 = vsel %vm1087, %v958, %v1215
      %v1344 = vpack.c.bf16 %v1218, %v1216
      %v1345 = vpack.c.bf16 %v1219, %v1217
      %v1346 = vpack.c.bf16 %v1222, %v1220
      %v1347 = vpack.c.bf16 %v1223, %v1221
      %v1348 = vpack.c.bf16 %v1226, %v1224
      %v1349 = vpack.c.bf16 %v1227, %v1225
      %v1350 = vpack.c.bf16 %v1230, %v1228
      %v1351 = vpack.c.bf16 %v1231, %v1229
      %v1352 = vpack.c.bf16 %v1234, %v1232
      %v1353 = vpack.c.bf16 %v1235, %v1233
      %v1354 = vpack.c.bf16 %v1238, %v1236
      %v1355 = vpack.c.bf16 %v1239, %v1237
      %v1356 = vpack.c.bf16 %v1242, %v1240
      %v1357 = vpack.c.bf16 %v1243, %v1241
      %v1358 = vpack.c.bf16 %v1246, %v1244
      %v1359 = vpack.c.bf16 %v1247, %v1245
      %v1360 = vpack.c.bf16 %v1250, %v1248
      %v1361 = vpack.c.bf16 %v1251, %v1249
      %v1362 = vpack.c.bf16 %v1254, %v1252
      %v1363 = vpack.c.bf16 %v1255, %v1253
      %v1364 = vpack.c.bf16 %v1258, %v1256
      %v1365 = vpack.c.bf16 %v1259, %v1257
      %v1366 = vpack.c.bf16 %v1262, %v1260
      %v1367 = vpack.c.bf16 %v1263, %v1261
      %v1368 = vpack.c.bf16 %v1266, %v1264
      %v1369 = vpack.c.bf16 %v1267, %v1265
      %v1370 = vpack.c.bf16 %v1270, %v1268
      %v1371 = vpack.c.bf16 %v1271, %v1269
      %v1372 = vpack.c.bf16 %v1274, %v1272
      %v1373 = vpack.c.bf16 %v1275, %v1273
      %v1374 = vpack.c.bf16 %v1278, %v1276
      %v1375 = vpack.c.bf16 %v1279, %v1277
      %v1376 = vpack.c.bf16 %v1282, %v1280
      %v1377 = vpack.c.bf16 %v1283, %v1281
      %v1378 = vpack.c.bf16 %v1286, %v1284
      %v1379 = vpack.c.bf16 %v1287, %v1285
      %v1380 = vpack.c.bf16 %v1290, %v1288
      %v1381 = vpack.c.bf16 %v1291, %v1289
      %v1382 = vpack.c.bf16 %v1294, %v1292
      %v1383 = vpack.c.bf16 %v1295, %v1293
      %v1384 = vpack.c.bf16 %v1298, %v1296
      %v1385 = vpack.c.bf16 %v1299, %v1297
      %v1386 = vpack.c.bf16 %v1302, %v1300
      %v1387 = vpack.c.bf16 %v1303, %v1301
      %v1388 = vpack.c.bf16 %v1306, %v1304
      %v1389 = vpack.c.bf16 %v1307, %v1305
      %v1390 = vpack.c.bf16 %v1310, %v1308
      %v1391 = vpack.c.bf16 %v1311, %v1309
      %v1392 = vpack.c.bf16 %v1314, %v1312
      %v1393 = vpack.c.bf16 %v1315, %v1313
      %v1394 = vpack.c.bf16 %v1318, %v1316
      %v1395 = vpack.c.bf16 %v1319, %v1317
      %v1396 = vpack.c.bf16 %v1322, %v1320
      %v1397 = vpack.c.bf16 %v1323, %v1321
      %v1398 = vpack.c.bf16 %v1326, %v1324
      %v1399 = vpack.c.bf16 %v1327, %v1325
      %v1400 = vpack.c.bf16 %v1330, %v1328
      %v1401 = vpack.c.bf16 %v1331, %v1329
      %v1402 = vpack.c.bf16 %v1334, %v1332
      %v1403 = vpack.c.bf16 %v1335, %v1333
      %v1404 = vpack.c.bf16 %v1338, %v1336
      %v1405 = vpack.c.bf16 %v1339, %v1337
      %v1406 = vpack.c.bf16 %v1342, %v1340
      %v1407 = vpack.c.bf16 %v1343, %v1341
      %v1408 = vld [vmem:[%s3] sm:$0xff]
      %v1409 = vld [vmem:[%s3 + $0x8] sm:$0xff]
      %v1410 = vld [vmem:[%s3 + $0x10] sm:$0xff]
      %v1411 = vld [vmem:[%s3 + $0x18] sm:$0xff]
      %v1412 = vld [vmem:[%s3 + $0x20] sm:$0xff]
      %v1413 = vld [vmem:[%s3 + $0x28] sm:$0xff]
      %v1414 = vld [vmem:[%s3 + $0x30] sm:$0xff]
      %v1415 = vld [vmem:[%s3 + $0x38] sm:$0xff]
      %v1416 = vld [vmem:[%s3 + $0x40] sm:$0xff]
      %v1417 = vld [vmem:[%s3 + $0x48] sm:$0xff]
      %v1418 = vld [vmem:[%s3 + $0x50] sm:$0xff]
      %v1419 = vld [vmem:[%s3 + $0x58] sm:$0xff]
      %v1420 = vld [vmem:[%s3 + $0x60] sm:$0xff]
      %v1421 = vld [vmem:[%s3 + $0x68] sm:$0xff]
      %v1422 = vld [vmem:[%s3 + $0x70] sm:$0xff]
      %v1423 = vld [vmem:[%s3 + $0x78] sm:$0xff]
      %v1424 = vld [vmem:[%s3 + $0x80] sm:$0xff]
      %v1425 = vld [vmem:[%s3 + $0x88] sm:$0xff]
      %v1426 = vld [vmem:[%s3 + $0x90] sm:$0xff]
      %v1427 = vld [vmem:[%s3 + $0x98] sm:$0xff]
      %v1428 = vld [vmem:[%s3 + $0xa0] sm:$0xff]
      %v1429 = vld [vmem:[%s3 + $0xa8] sm:$0xff]
      %v1430 = vld [vmem:[%s3 + $0xb0] sm:$0xff]
      %v1431 = vld [vmem:[%s3 + $0xb8] sm:$0xff]
      %v1432 = vld [vmem:[%s3 + $0xc0] sm:$0xff]
      %v1433 = vld [vmem:[%s3 + $0xc8] sm:$0xff]
      %v1434 = vld [vmem:[%s3 + $0xd0] sm:$0xff]
      %v1435 = vld [vmem:[%s3 + $0xd8] sm:$0xff]
      %v1436 = vld [vmem:[%s3 + $0xe0] sm:$0xff]
      %v1437 = vld [vmem:[%s3 + $0xe8] sm:$0xff]
      %v1438 = vld [vmem:[%s3 + $0xf0] sm:$0xff]
      %v1439 = vld [vmem:[%s3 + $0xf8] sm:$0xff]
      %v1440 = vld [vmem:[%s4] sm:$0x3]
      %v1442 = vperm.slane %v1440, 0
      %v1443 = vperm.slane %v1440, 1
      %v1478 = vunpack.c.l.b16 %v1408
      %v1479 = vunpack.c.h.b16 %v1408
      %v1480 = vunpack.c.l.b16 %v1409
      %v1481 = vunpack.c.h.b16 %v1409
      %v1482 = vunpack.c.l.b16 %v1410
      %v1483 = vunpack.c.h.b16 %v1410
      %v1484 = vunpack.c.l.b16 %v1411
      %v1485 = vunpack.c.h.b16 %v1411
      %v1486 = vunpack.c.l.b16 %v1412
      %v1487 = vunpack.c.h.b16 %v1412
      %v1488 = vunpack.c.l.b16 %v1413
      %v1489 = vunpack.c.h.b16 %v1413
      %v1490 = vunpack.c.l.b16 %v1414
      %v1491 = vunpack.c.h.b16 %v1414
      %v1492 = vunpack.c.l.b16 %v1415
      %v1493 = vunpack.c.h.b16 %v1415
      %v1494 = vunpack.c.l.b16 %v1416
      %v1495 = vunpack.c.h.b16 %v1416
      %v1496 = vunpack.c.l.b16 %v1417
      %v1497 = vunpack.c.h.b16 %v1417
      %v1498 = vunpack.c.l.b16 %v1418
      %v1499 = vunpack.c.h.b16 %v1418
      %v1500 = vunpack.c.l.b16 %v1419
      %v1501 = vunpack.c.h.b16 %v1419
      %v1502 = vunpack.c.l.b16 %v1420
      %v1503 = vunpack.c.h.b16 %v1420
      %v1504 = vunpack.c.l.b16 %v1421
      %v1505 = vunpack.c.h.b16 %v1421
      %v1506 = vunpack.c.l.b16 %v1422
      %v1507 = vunpack.c.h.b16 %v1422
      %v1508 = vunpack.c.l.b16 %v1423
      %v1509 = vunpack.c.h.b16 %v1423
      %v1510 = vunpack.c.l.b16 %v1424
      %v1511 = vunpack.c.h.b16 %v1424
      %v1512 = vunpack.c.l.b16 %v1425
      %v1513 = vunpack.c.h.b16 %v1425
      %v1514 = vunpack.c.l.b16 %v1426
      %v1515 = vunpack.c.h.b16 %v1426
      %v1516 = vunpack.c.l.b16 %v1427
      %v1517 = vunpack.c.h.b16 %v1427
      %v1518 = vunpack.c.l.b16 %v1428
      %v1519 = vunpack.c.h.b16 %v1428
      %v1520 = vunpack.c.l.b16 %v1429
      %v1521 = vunpack.c.h.b16 %v1429
      %v1522 = vunpack.c.l.b16 %v1430
      %v1523 = vunpack.c.h.b16 %v1430
      %v1524 = vunpack.c.l.b16 %v1431
      %v1525 = vunpack.c.h.b16 %v1431
      %v1526 = vunpack.c.l.b16 %v1432
      %v1527 = vunpack.c.h.b16 %v1432
      %v1528 = vunpack.c.l.b16 %v1433
      %v1529 = vunpack.c.h.b16 %v1433
      %v1530 = vunpack.c.l.b16 %v1434
      %v1531 = vunpack.c.h.b16 %v1434
      %v1532 = vunpack.c.l.b16 %v1435
      %v1533 = vunpack.c.h.b16 %v1435
      %v1534 = vunpack.c.l.b16 %v1436
      %v1535 = vunpack.c.h.b16 %v1436
      %v1536 = vunpack.c.l.b16 %v1437
      %v1537 = vunpack.c.h.b16 %v1437
      %v1538 = vunpack.c.l.b16 %v1438
      %v1539 = vunpack.c.h.b16 %v1438
      %v1540 = vunpack.c.l.b16 %v1439
      %v1541 = vunpack.c.h.b16 %v1439
      %v1542 = vpack.c.b16 %v1480, %v1478
      %v1543 = vpack.c.b16 %v1481, %v1479
      %v1544 = vpack.c.b16 %v1484, %v1482
      %v1545 = vpack.c.b16 %v1485, %v1483
      %v1546 = vpack.c.b16 %v1488, %v1486
      %v1547 = vpack.c.b16 %v1489, %v1487
      %v1548 = vpack.c.b16 %v1492, %v1490
      %v1549 = vpack.c.b16 %v1493, %v1491
      %v1550 = vpack.c.b16 %v1496, %v1494
      %v1551 = vpack.c.b16 %v1497, %v1495
      %v1552 = vpack.c.b16 %v1500, %v1498
      %v1553 = vpack.c.b16 %v1501, %v1499
      %v1554 = vpack.c.b16 %v1504, %v1502
      %v1555 = vpack.c.b16 %v1505, %v1503
      %v1556 = vpack.c.b16 %v1508, %v1506
      %v1557 = vpack.c.b16 %v1509, %v1507
      %v1558 = vpack.c.b16 %v1512, %v1510
      %v1559 = vpack.c.b16 %v1513, %v1511
      %v1560 = vpack.c.b16 %v1516, %v1514
      %v1561 = vpack.c.b16 %v1517, %v1515
      %v1562 = vpack.c.b16 %v1520, %v1518
      %v1563 = vpack.c.b16 %v1521, %v1519
      %v1564 = vpack.c.b16 %v1524, %v1522
      %v1565 = vpack.c.b16 %v1525, %v1523
      %v1566 = vpack.c.b16 %v1528, %v1526
      %v1567 = vpack.c.b16 %v1529, %v1527
      %v1568 = vpack.c.b16 %v1532, %v1530
      %v1569 = vpack.c.b16 %v1533, %v1531
      %v1570 = vpack.c.b16 %v1536, %v1534
      %v1571 = vpack.c.b16 %v1537, %v1535
      %v1572 = vpack.c.b16 %v1540, %v1538
      %v1573 = vpack.c.b16 %v1541, %v1539
      %1606 = vmatpush.bf16.msra.mxu0 %v1556
      %1607 = vmatpush.bf16.msra.mxu0 %v1554
      %1608 = vmatpush.bf16.msra.mxu0 %v1552
      %1609 = vmatpush.bf16.msra.mxu0 %v1550
      %1610 = vmatpush.bf16.msra.mxu0 %v1548
      %1611 = vmatpush.bf16.msra.mxu0 %v1546
      %1612 = vmatpush.bf16.msra.mxu0 %v1544
      %1613 = vmatpush.bf16.msra.mxu0 %v1542
      %1614 = vmatmul.bf16.gmra.mxu0 %v1344
      %v1615 = vpop.f32.mrf.mxu0
      %v1616 = vadd.f32 %v1442, %v1615
      %v1617 = vpop.f32.mrf.mxu0
      %v1618 = vadd.f32 %v1442, %v1617
      %1619 = vmatmul.bf16.gmra.mxu0 %v1346
      %v1620 = vpop.f32.mrf.mxu0
      %v1621 = vadd.f32 %v1442, %v1620
      %v1622 = vpop.f32.mrf.mxu0
      %v1623 = vadd.f32 %v1442, %v1622
      %1624 = vmatmul.bf16.gmra.mxu0 %v1348
      %v1625 = vpop.f32.mrf.mxu0
      %v1626 = vadd.f32 %v1442, %v1625
      %v1627 = vpop.f32.mrf.mxu0
      %v1628 = vadd.f32 %v1442, %v1627
      %1629 = vmatmul.bf16.gmra.mxu0 %v1350
      %v1630 = vpop.f32.mrf.mxu0
      %v1631 = vadd.f32 %v1442, %v1630
      %v1632 = vpop.f32.mrf.mxu0
      %v1633 = vadd.f32 %v1442, %v1632
      %1634 = vmatmul.bf16.gmra.mxu0 %v1352
      %v1635 = vpop.f32.mrf.mxu0
      %v1636 = vadd.f32 %v1442, %v1635
      %v1637 = vpop.f32.mrf.mxu0
      %v1638 = vadd.f32 %v1442, %v1637
      %1639 = vmatmul.bf16.gmra.mxu0 %v1354
      %v1640 = vpop.f32.mrf.mxu0
      %v1641 = vadd.f32 %v1442, %v1640
      %v1642 = vpop.f32.mrf.mxu0
      %v1643 = vadd.f32 %v1442, %v1642
      %1644 = vmatmul.bf16.gmra.mxu0 %v1356
      %v1645 = vpop.f32.mrf.mxu0
      %v1646 = vadd.f32 %v1442, %v1645
      %v1647 = vpop.f32.mrf.mxu0
      %v1648 = vadd.f32 %v1442, %v1647
      %1649 = vmatmul.bf16.gmra.mxu0 %v1358
      %v1650 = vpop.f32.mrf.mxu0
      %v1651 = vadd.f32 %v1442, %v1650
      %v1652 = vpop.f32.mrf.mxu0
      %v1653 = vadd.f32 %v1442, %v1652
      %1654 = vmatmul.bf16.gmra.mxu0 %v1360
      %v1655 = vpop.f32.mrf.mxu0
      %v1656 = vadd.f32 %v1442, %v1655
      %v1657 = vpop.f32.mrf.mxu0
      %v1658 = vadd.f32 %v1442, %v1657
      %1659 = vmatmul.bf16.gmra.mxu0 %v1362
      %v1660 = vpop.f32.mrf.mxu0
      %v1661 = vadd.f32 %v1442, %v1660
      %v1662 = vpop.f32.mrf.mxu0
      %v1663 = vadd.f32 %v1442, %v1662
      %1664 = vmatmul.bf16.gmra.mxu0 %v1364
      %v1665 = vpop.f32.mrf.mxu0
      %v1666 = vadd.f32 %v1442, %v1665
      %v1667 = vpop.f32.mrf.mxu0
      %v1668 = vadd.f32 %v1442, %v1667
      %1669 = vmatmul.bf16.gmra.mxu0 %v1366
      %v1670 = vpop.f32.mrf.mxu0
      %v1671 = vadd.f32 %v1442, %v1670
      %v1672 = vpop.f32.mrf.mxu0
      %v1673 = vadd.f32 %v1442, %v1672
      %1674 = vmatmul.bf16.gmra.mxu0 %v1368
      %v1675 = vpop.f32.mrf.mxu0
      %v1676 = vadd.f32 %v1442, %v1675
      %v1677 = vpop.f32.mrf.mxu0
      %v1678 = vadd.f32 %v1442, %v1677
      %1679 = vmatmul.bf16.gmra.mxu0 %v1370
      %v1680 = vpop.f32.mrf.mxu0
      %v1681 = vadd.f32 %v1442, %v1680
      %v1682 = vpop.f32.mrf.mxu0
      %v1683 = vadd.f32 %v1442, %v1682
      %1684 = vmatmul.bf16.gmra.mxu0 %v1372
      %v1685 = vpop.f32.mrf.mxu0
      %v1686 = vadd.f32 %v1442, %v1685
      %v1687 = vpop.f32.mrf.mxu0
      %v1688 = vadd.f32 %v1442, %v1687
      %1689 = vmatmul.bf16.gmra.mxu0 %v1374
      %v1690 = vpop.f32.mrf.mxu0
      %v1691 = vadd.f32 %v1442, %v1690
      %v1692 = vpop.f32.mrf.mxu0
      %v1693 = vadd.f32 %v1442, %v1692
      %1694 = vmatmul.bf16.gmra.mxu0 %v1376
      %v1695 = vpop.f32.mrf.mxu0
      %v1696 = vadd.f32 %v1442, %v1695
      %v1697 = vpop.f32.mrf.mxu0
      %v1698 = vadd.f32 %v1442, %v1697
      %1699 = vmatmul.bf16.gmra.mxu0 %v1378
      %v1700 = vpop.f32.mrf.mxu0
      %v1701 = vadd.f32 %v1442, %v1700
      %v1702 = vpop.f32.mrf.mxu0
      %v1703 = vadd.f32 %v1442, %v1702
      %1704 = vmatmul.bf16.gmra.mxu0 %v1380
      %v1705 = vpop.f32.mrf.mxu0
      %v1706 = vadd.f32 %v1442, %v1705
      %v1707 = vpop.f32.mrf.mxu0
      %v1708 = vadd.f32 %v1442, %v1707
      %1709 = vmatmul.bf16.gmra.mxu0 %v1382
      %v1710 = vpop.f32.mrf.mxu0
      %v1711 = vadd.f32 %v1442, %v1710
      %v1712 = vpop.f32.mrf.mxu0
      %v1713 = vadd.f32 %v1442, %v1712
      %1714 = vmatmul.bf16.gmra.mxu0 %v1384
      %v1715 = vpop.f32.mrf.mxu0
      %v1716 = vadd.f32 %v1442, %v1715
      %v1717 = vpop.f32.mrf.mxu0
      %v1718 = vadd.f32 %v1442, %v1717
      %1719 = vmatmul.bf16.gmra.mxu0 %v1386
      %v1720 = vpop.f32.mrf.mxu0
      %v1721 = vadd.f32 %v1442, %v1720
      %v1722 = vpop.f32.mrf.mxu0
      %v1723 = vadd.f32 %v1442, %v1722
      %1724 = vmatmul.bf16.gmra.mxu0 %v1388
      %v1725 = vpop.f32.mrf.mxu0
      %v1726 = vadd.f32 %v1442, %v1725
      %v1727 = vpop.f32.mrf.mxu0
      %v1728 = vadd.f32 %v1442, %v1727
      %1729 = vmatmul.bf16.gmra.mxu0 %v1390
      %v1730 = vpop.f32.mrf.mxu0
      %v1731 = vadd.f32 %v1442, %v1730
      %v1732 = vpop.f32.mrf.mxu0
      %v1733 = vadd.f32 %v1442, %v1732
      %1734 = vmatmul.bf16.gmra.mxu0 %v1392
      %v1735 = vpop.f32.mrf.mxu0
      %v1736 = vadd.f32 %v1442, %v1735
      %v1737 = vpop.f32.mrf.mxu0
      %v1738 = vadd.f32 %v1442, %v1737
      %1739 = vmatmul.bf16.gmra.mxu0 %v1394
      %v1740 = vpop.f32.mrf.mxu0
      %v1741 = vadd.f32 %v1442, %v1740
      %v1742 = vpop.f32.mrf.mxu0
      %v1743 = vadd.f32 %v1442, %v1742
      %1744 = vmatmul.bf16.gmra.mxu0 %v1396
      %v1745 = vpop.f32.mrf.mxu0
      %v1746 = vadd.f32 %v1442, %v1745
      %v1747 = vpop.f32.mrf.mxu0
      %v1748 = vadd.f32 %v1442, %v1747
      %1749 = vmatmul.bf16.gmra.mxu0 %v1398
      %v1750 = vpop.f32.mrf.mxu0
      %v1751 = vadd.f32 %v1442, %v1750
      %v1752 = vpop.f32.mrf.mxu0
      %v1753 = vadd.f32 %v1442, %v1752
      %1754 = vmatmul.bf16.gmra.mxu0 %v1400
      %v1755 = vpop.f32.mrf.mxu0
      %v1756 = vadd.f32 %v1442, %v1755
      %v1757 = vpop.f32.mrf.mxu0
      %v1758 = vadd.f32 %v1442, %v1757
      %1759 = vmatmul.bf16.gmra.mxu0 %v1402
      %v1760 = vpop.f32.mrf.mxu0
      %v1761 = vadd.f32 %v1442, %v1760
      %v1762 = vpop.f32.mrf.mxu0
      %v1763 = vadd.f32 %v1442, %v1762
      %1764 = vmatmul.bf16.gmra.mxu0 %v1404
      %v1765 = vpop.f32.mrf.mxu0
      %v1766 = vadd.f32 %v1442, %v1765
      %v1767 = vpop.f32.mrf.mxu0
      %v1768 = vadd.f32 %v1442, %v1767
      %1769 = vmatmul.bf16.gmra.mxu0 %v1406
      %v1770 = vpop.f32.mrf.mxu0
      %v1771 = vadd.f32 %v1442, %v1770
      %v1772 = vpop.f32.mrf.mxu0
      %v1773 = vadd.f32 %v1442, %v1772
      %1774 = vdwg.mxu0
      %1775 = vmatpush.bf16.msra.mxu0 %v1572
      %1776 = vmatpush.bf16.msra.mxu0 %v1570
      %1777 = vmatpush.bf16.msra.mxu0 %v1568
      %1778 = vmatpush.bf16.msra.mxu0 %v1566
      %1779 = vmatpush.bf16.msra.mxu0 %v1564
      %1780 = vmatpush.bf16.msra.mxu0 %v1562
      %1781 = vmatpush.bf16.msra.mxu0 %v1560
      %1782 = vmatpush.bf16.msra.mxu0 %v1558
      %1783 = vmatmul.bf16.gmra.mxu0 %v1345
      %v1784 = vpop.f32.mrf.mxu0
      %v1785 = vadd.f32 %v1616, %v1784
      %v1786 = vpop.f32.mrf.mxu0
      %v1787 = vadd.f32 %v1618, %v1786
      %1788 = vmatmul.bf16.gmra.mxu0 %v1347
      %v1789 = vpop.f32.mrf.mxu0
      %v1790 = vadd.f32 %v1621, %v1789
      %v1791 = vpop.f32.mrf.mxu0
      %v1792 = vadd.f32 %v1623, %v1791
      %1793 = vmatmul.bf16.gmra.mxu0 %v1349
      %v1794 = vpop.f32.mrf.mxu0
      %v1795 = vadd.f32 %v1626, %v1794
      %v1796 = vpop.f32.mrf.mxu0
      %v1797 = vadd.f32 %v1628, %v1796
      %1798 = vmatmul.bf16.gmra.mxu0 %v1351
      %v1799 = vpop.f32.mrf.mxu0
      %v1800 = vadd.f32 %v1631, %v1799
      %v1801 = vpop.f32.mrf.mxu0
      %v1802 = vadd.f32 %v1633, %v1801
      %1803 = vmatmul.bf16.gmra.mxu0 %v1353
      %v1804 = vpop.f32.mrf.mxu0
      %v1805 = vadd.f32 %v1636, %v1804
      %v1806 = vpop.f32.mrf.mxu0
      %v1807 = vadd.f32 %v1638, %v1806
      %1808 = vmatmul.bf16.gmra.mxu0 %v1355
      %v1809 = vpop.f32.mrf.mxu0
      %v1810 = vadd.f32 %v1641, %v1809
      %v1811 = vpop.f32.mrf.mxu0
      %v1812 = vadd.f32 %v1643, %v1811
      %1813 = vmatmul.bf16.gmra.mxu0 %v1357
      %v1814 = vpop.f32.mrf.mxu0
      %v1815 = vadd.f32 %v1646, %v1814
      %v1816 = vpop.f32.mrf.mxu0
      %v1817 = vadd.f32 %v1648, %v1816
      %1818 = vmatmul.bf16.gmra.mxu0 %v1359
      %v1819 = vpop.f32.mrf.mxu0
      %v1820 = vadd.f32 %v1651, %v1819
      %v1821 = vpop.f32.mrf.mxu0
      %v1822 = vadd.f32 %v1653, %v1821
      %1823 = vmatmul.bf16.gmra.mxu0 %v1361
      %v1824 = vpop.f32.mrf.mxu0
      %v1825 = vadd.f32 %v1656, %v1824
      %v1826 = vpop.f32.mrf.mxu0
      %v1827 = vadd.f32 %v1658, %v1826
      %1828 = vmatmul.bf16.gmra.mxu0 %v1363
      %v1829 = vpop.f32.mrf.mxu0
      %v1830 = vadd.f32 %v1661, %v1829
      %v1831 = vpop.f32.mrf.mxu0
      %v1832 = vadd.f32 %v1663, %v1831
      %1833 = vmatmul.bf16.gmra.mxu0 %v1365
      %v1834 = vpop.f32.mrf.mxu0
      %v1835 = vadd.f32 %v1666, %v1834
      %v1836 = vpop.f32.mrf.mxu0
      %v1837 = vadd.f32 %v1668, %v1836
      %1838 = vmatmul.bf16.gmra.mxu0 %v1367
      %v1839 = vpop.f32.mrf.mxu0
      %v1840 = vadd.f32 %v1671, %v1839
      %v1841 = vpop.f32.mrf.mxu0
      %v1842 = vadd.f32 %v1673, %v1841
      %1843 = vmatmul.bf16.gmra.mxu0 %v1369
      %v1844 = vpop.f32.mrf.mxu0
      %v1845 = vadd.f32 %v1676, %v1844
      %v1846 = vpop.f32.mrf.mxu0
      %v1847 = vadd.f32 %v1678, %v1846
      %1848 = vmatmul.bf16.gmra.mxu0 %v1371
      %v1849 = vpop.f32.mrf.mxu0
      %v1850 = vadd.f32 %v1681, %v1849
      %v1851 = vpop.f32.mrf.mxu0
      %v1852 = vadd.f32 %v1683, %v1851
      %1853 = vmatmul.bf16.gmra.mxu0 %v1373
      %v1854 = vpop.f32.mrf.mxu0
      %v1855 = vadd.f32 %v1686, %v1854
      %v1856 = vpop.f32.mrf.mxu0
      %v1857 = vadd.f32 %v1688, %v1856
      %1858 = vmatmul.bf16.gmra.mxu0 %v1375
      %v1859 = vpop.f32.mrf.mxu0
      %v1860 = vadd.f32 %v1691, %v1859
      %v1861 = vpop.f32.mrf.mxu0
      %v1862 = vadd.f32 %v1693, %v1861
      %1863 = vmatmul.bf16.gmra.mxu0 %v1377
      %v1864 = vpop.f32.mrf.mxu0
      %v1865 = vadd.f32 %v1696, %v1864
      %v1866 = vpop.f32.mrf.mxu0
      %v1867 = vadd.f32 %v1698, %v1866
      %1868 = vmatmul.bf16.gmra.mxu0 %v1379
      %v1869 = vpop.f32.mrf.mxu0
      %v1870 = vadd.f32 %v1701, %v1869
      %v1871 = vpop.f32.mrf.mxu0
      %v1872 = vadd.f32 %v1703, %v1871
      %1873 = vmatmul.bf16.gmra.mxu0 %v1381
      %v1874 = vpop.f32.mrf.mxu0
      %v1875 = vadd.f32 %v1706, %v1874
      %v1876 = vpop.f32.mrf.mxu0
      %v1877 = vadd.f32 %v1708, %v1876
      %1878 = vmatmul.bf16.gmra.mxu0 %v1383
      %v1879 = vpop.f32.mrf.mxu0
      %v1880 = vadd.f32 %v1711, %v1879
      %v1881 = vpop.f32.mrf.mxu0
      %v1882 = vadd.f32 %v1713, %v1881
      %1883 = vmatmul.bf16.gmra.mxu0 %v1385
      %v1884 = vpop.f32.mrf.mxu0
      %v1885 = vadd.f32 %v1716, %v1884
      %v1886 = vpop.f32.mrf.mxu0
      %v1887 = vadd.f32 %v1718, %v1886
      %1888 = vmatmul.bf16.gmra.mxu0 %v1387
      %v1889 = vpop.f32.mrf.mxu0
      %v1890 = vadd.f32 %v1721, %v1889
      %v1891 = vpop.f32.mrf.mxu0
      %v1892 = vadd.f32 %v1723, %v1891
      %1893 = vmatmul.bf16.gmra.mxu0 %v1389
      %v1894 = vpop.f32.mrf.mxu0
      %v1895 = vadd.f32 %v1726, %v1894
      %v1896 = vpop.f32.mrf.mxu0
      %v1897 = vadd.f32 %v1728, %v1896
      %1898 = vmatmul.bf16.gmra.mxu0 %v1391
      %v1899 = vpop.f32.mrf.mxu0
      %v1900 = vadd.f32 %v1731, %v1899
      %v1901 = vpop.f32.mrf.mxu0
      %v1902 = vadd.f32 %v1733, %v1901
      %1903 = vmatmul.bf16.gmra.mxu0 %v1393
      %v1904 = vpop.f32.mrf.mxu0
      %v1905 = vadd.f32 %v1736, %v1904
      %v1906 = vpop.f32.mrf.mxu0
      %v1907 = vadd.f32 %v1738, %v1906
      %1908 = vmatmul.bf16.gmra.mxu0 %v1395
      %v1909 = vpop.f32.mrf.mxu0
      %v1910 = vadd.f32 %v1741, %v1909
      %v1911 = vpop.f32.mrf.mxu0
      %v1912 = vadd.f32 %v1743, %v1911
      %1913 = vmatmul.bf16.gmra.mxu0 %v1397
      %v1914 = vpop.f32.mrf.mxu0
      %v1915 = vadd.f32 %v1746, %v1914
      %v1916 = vpop.f32.mrf.mxu0
      %v1917 = vadd.f32 %v1748, %v1916
      %1918 = vmatmul.bf16.gmra.mxu0 %v1399
      %v1919 = vpop.f32.mrf.mxu0
      %v1920 = vadd.f32 %v1751, %v1919
      %v1921 = vpop.f32.mrf.mxu0
      %v1922 = vadd.f32 %v1753, %v1921
      %1923 = vmatmul.bf16.gmra.mxu0 %v1401
      %v1924 = vpop.f32.mrf.mxu0
      %v1925 = vadd.f32 %v1756, %v1924
      %v1926 = vpop.f32.mrf.mxu0
      %v1927 = vadd.f32 %v1758, %v1926
      %1928 = vmatmul.bf16.gmra.mxu0 %v1403
      %v1929 = vpop.f32.mrf.mxu0
      %v1930 = vadd.f32 %v1761, %v1929
      %v1931 = vpop.f32.mrf.mxu0
      %v1932 = vadd.f32 %v1763, %v1931
      %1933 = vmatmul.bf16.gmra.mxu0 %v1405
      %v1934 = vpop.f32.mrf.mxu0
      %v1935 = vadd.f32 %v1766, %v1934
      %v1936 = vpop.f32.mrf.mxu0
      %v1937 = vadd.f32 %v1768, %v1936
      %1938 = vmatmul.bf16.gmra.mxu0 %v1407
      %v1939 = vpop.f32.mrf.mxu0
      %v1940 = vadd.f32 %v1771, %v1939
      %v1941 = vpop.f32.mrf.mxu0
      %v1942 = vadd.f32 %v1773, %v1941
      %1943 = vdwg.mxu0
      %1944 = vmatpush.bf16.msra.mxu0 %v1557
      %1945 = vmatpush.bf16.msra.mxu0 %v1555
      %1946 = vmatpush.bf16.msra.mxu0 %v1553
      %1947 = vmatpush.bf16.msra.mxu0 %v1551
      %1948 = vmatpush.bf16.msra.mxu0 %v1549
      %1949 = vmatpush.bf16.msra.mxu0 %v1547
      %1950 = vmatpush.bf16.msra.mxu0 %v1545
      %1951 = vmatpush.bf16.msra.mxu0 %v1543
      %1952 = vmatmul.bf16.gmra.mxu0 %v1344
      %v1953 = vpop.f32.mrf.mxu0
      %v1954 = vadd.f32 %v1443, %v1953
      %v1955 = vpop.f32.mrf.mxu0
      %v1956 = vadd.f32 %v1443, %v1955
      %1957 = vmatmul.bf16.gmra.mxu0 %v1346
      %v1958 = vpop.f32.mrf.mxu0
      %v1959 = vadd.f32 %v1443, %v1958
      %v1960 = vpop.f32.mrf.mxu0
      %v1961 = vadd.f32 %v1443, %v1960
      %1962 = vmatmul.bf16.gmra.mxu0 %v1348
      %v1963 = vpop.f32.mrf.mxu0
      %v1964 = vadd.f32 %v1443, %v1963
      %v1965 = vpop.f32.mrf.mxu0
      %v1966 = vadd.f32 %v1443, %v1965
      %1967 = vmatmul.bf16.gmra.mxu0 %v1350
      %v1968 = vpop.f32.mrf.mxu0
      %v1969 = vadd.f32 %v1443, %v1968
      %v1970 = vpop.f32.mrf.mxu0
      %v1971 = vadd.f32 %v1443, %v1970
      %1972 = vmatmul.bf16.gmra.mxu0 %v1352
      %v1973 = vpop.f32.mrf.mxu0
      %v1974 = vadd.f32 %v1443, %v1973
      %v1975 = vpop.f32.mrf.mxu0
      %v1976 = vadd.f32 %v1443, %v1975
      %1977 = vmatmul.bf16.gmra.mxu0 %v1354
      %v1978 = vpop.f32.mrf.mxu0
      %v1979 = vadd.f32 %v1443, %v1978
      %v1980 = vpop.f32.mrf.mxu0
      %v1981 = vadd.f32 %v1443, %v1980
      %1982 = vmatmul.bf16.gmra.mxu0 %v1356
      %v1983 = vpop.f32.mrf.mxu0
      %v1984 = vadd.f32 %v1443, %v1983
      %v1985 = vpop.f32.mrf.mxu0
      %v1986 = vadd.f32 %v1443, %v1985
      %1987 = vmatmul.bf16.gmra.mxu0 %v1358
      %v1988 = vpop.f32.mrf.mxu0
      %v1989 = vadd.f32 %v1443, %v1988
      %v1990 = vpop.f32.mrf.mxu0
      %v1991 = vadd.f32 %v1443, %v1990
      %1992 = vmatmul.bf16.gmra.mxu0 %v1360
      %v1993 = vpop.f32.mrf.mxu0
      %v1994 = vadd.f32 %v1443, %v1993
      %v1995 = vpop.f32.mrf.mxu0
      %v1996 = vadd.f32 %v1443, %v1995
      %1997 = vmatmul.bf16.gmra.mxu0 %v1362
      %v1998 = vpop.f32.mrf.mxu0
      %v1999 = vadd.f32 %v1443, %v1998
      %v2000 = vpop.f32.mrf.mxu0
      %v2001 = vadd.f32 %v1443, %v2000
      %2002 = vmatmul.bf16.gmra.mxu0 %v1364
      %v2003 = vpop.f32.mrf.mxu0
      %v2004 = vadd.f32 %v1443, %v2003
      %v2005 = vpop.f32.mrf.mxu0
      %v2006 = vadd.f32 %v1443, %v2005
      %2007 = vmatmul.bf16.gmra.mxu0 %v1366
      %v2008 = vpop.f32.mrf.mxu0
      %v2009 = vadd.f32 %v1443, %v2008
      %v2010 = vpop.f32.mrf.mxu0
      %v2011 = vadd.f32 %v1443, %v2010
      %2012 = vmatmul.bf16.gmra.mxu0 %v1368
      %v2013 = vpop.f32.mrf.mxu0
      %v2014 = vadd.f32 %v1443, %v2013
      %v2015 = vpop.f32.mrf.mxu0
      %v2016 = vadd.f32 %v1443, %v2015
      %2017 = vmatmul.bf16.gmra.mxu0 %v1370
      %v2018 = vpop.f32.mrf.mxu0
      %v2019 = vadd.f32 %v1443, %v2018
      %v2020 = vpop.f32.mrf.mxu0
      %v2021 = vadd.f32 %v1443, %v2020
      %2022 = vmatmul.bf16.gmra.mxu0 %v1372
      %v2023 = vpop.f32.mrf.mxu0
      %v2024 = vadd.f32 %v1443, %v2023
      %v2025 = vpop.f32.mrf.mxu0
      %v2026 = vadd.f32 %v1443, %v2025
      %2027 = vmatmul.bf16.gmra.mxu0 %v1374
      %v2028 = vpop.f32.mrf.mxu0
      %v2029 = vadd.f32 %v1443, %v2028
      %v2030 = vpop.f32.mrf.mxu0
      %v2031 = vadd.f32 %v1443, %v2030
      %2032 = vmatmul.bf16.gmra.mxu0 %v1376
      %v2033 = vpop.f32.mrf.mxu0
      %v2034 = vadd.f32 %v1443, %v2033
      %v2035 = vpop.f32.mrf.mxu0
      %v2036 = vadd.f32 %v1443, %v2035
      %2037 = vmatmul.bf16.gmra.mxu0 %v1378
      %v2038 = vpop.f32.mrf.mxu0
      %v2039 = vadd.f32 %v1443, %v2038
      %v2040 = vpop.f32.mrf.mxu0
      %v2041 = vadd.f32 %v1443, %v2040
      %2042 = vmatmul.bf16.gmra.mxu0 %v1380
      %v2043 = vpop.f32.mrf.mxu0
      %v2044 = vadd.f32 %v1443, %v2043
      %v2045 = vpop.f32.mrf.mxu0
      %v2046 = vadd.f32 %v1443, %v2045
      %2047 = vmatmul.bf16.gmra.mxu0 %v1382
      %v2048 = vpop.f32.mrf.mxu0
      %v2049 = vadd.f32 %v1443, %v2048
      %v2050 = vpop.f32.mrf.mxu0
      %v2051 = vadd.f32 %v1443, %v2050
      %2052 = vmatmul.bf16.gmra.mxu0 %v1384
      %v2053 = vpop.f32.mrf.mxu0
      %v2054 = vadd.f32 %v1443, %v2053
      %v2055 = vpop.f32.mrf.mxu0
      %v2056 = vadd.f32 %v1443, %v2055
      %2057 = vmatmul.bf16.gmra.mxu0 %v1386
      %v2058 = vpop.f32.mrf.mxu0
      %v2059 = vadd.f32 %v1443, %v2058
      %v2060 = vpop.f32.mrf.mxu0
      %v2061 = vadd.f32 %v1443, %v2060
      %2062 = vmatmul.bf16.gmra.mxu0 %v1388
      %v2063 = vpop.f32.mrf.mxu0
      %v2064 = vadd.f32 %v1443, %v2063
      %v2065 = vpop.f32.mrf.mxu0
      %v2066 = vadd.f32 %v1443, %v2065
      %2067 = vmatmul.bf16.gmra.mxu0 %v1390
      %v2068 = vpop.f32.mrf.mxu0
      %v2069 = vadd.f32 %v1443, %v2068
      %v2070 = vpop.f32.mrf.mxu0
      %v2071 = vadd.f32 %v1443, %v2070
      %2072 = vmatmul.bf16.gmra.mxu0 %v1392
      %v2073 = vpop.f32.mrf.mxu0
      %v2074 = vadd.f32 %v1443, %v2073
      %v2075 = vpop.f32.mrf.mxu0
      %v2076 = vadd.f32 %v1443, %v2075
      %2077 = vmatmul.bf16.gmra.mxu0 %v1394
      %v2078 = vpop.f32.mrf.mxu0
      %v2079 = vadd.f32 %v1443, %v2078
      %v2080 = vpop.f32.mrf.mxu0
      %v2081 = vadd.f32 %v1443, %v2080
      %2082 = vmatmul.bf16.gmra.mxu0 %v1396
      %v2083 = vpop.f32.mrf.mxu0
      %v2084 = vadd.f32 %v1443, %v2083
      %v2085 = vpop.f32.mrf.mxu0
      %v2086 = vadd.f32 %v1443, %v2085
      %2087 = vmatmul.bf16.gmra.mxu0 %v1398
      %v2088 = vpop.f32.mrf.mxu0
      %v2089 = vadd.f32 %v1443, %v2088
      %v2090 = vpop.f32.mrf.mxu0
      %v2091 = vadd.f32 %v1443, %v2090
      %2092 = vmatmul.bf16.gmra.mxu0 %v1400
      %v2093 = vpop.f32.mrf.mxu0
      %v2094 = vadd.f32 %v1443, %v2093
      %v2095 = vpop.f32.mrf.mxu0
      %v2096 = vadd.f32 %v1443, %v2095
      %2097 = vmatmul.bf16.gmra.mxu0 %v1402
      %v2098 = vpop.f32.mrf.mxu0
      %v2099 = vadd.f32 %v1443, %v2098
      %v2100 = vpop.f32.mrf.mxu0
      %v2101 = vadd.f32 %v1443, %v2100
      %2102 = vmatmul.bf16.gmra.mxu0 %v1404
      %v2103 = vpop.f32.mrf.mxu0
      %v2104 = vadd.f32 %v1443, %v2103
      %v2105 = vpop.f32.mrf.mxu0
      %v2106 = vadd.f32 %v1443, %v2105
      %2107 = vmatmul.bf16.gmra.mxu0 %v1406
      %v2108 = vpop.f32.mrf.mxu0
      %v2109 = vadd.f32 %v1443, %v2108
      %v2110 = vpop.f32.mrf.mxu0
      %v2111 = vadd.f32 %v1443, %v2110
      %2112 = vdwg.mxu0
      %2113 = vmatpush.bf16.msra.mxu0 %v1573
      %2114 = vmatpush.bf16.msra.mxu0 %v1571
      %2115 = vmatpush.bf16.msra.mxu0 %v1569
      %2116 = vmatpush.bf16.msra.mxu0 %v1567
      %2117 = vmatpush.bf16.msra.mxu0 %v1565
      %2118 = vmatpush.bf16.msra.mxu0 %v1563
      %2119 = vmatpush.bf16.msra.mxu0 %v1561
      %2120 = vmatpush.bf16.msra.mxu0 %v1559
      %2121 = vmatmul.bf16.gmra.mxu0 %v1345
      %v2122 = vpop.f32.mrf.mxu0
      %v2123 = vadd.f32 %v1954, %v2122
      %v2124 = vpop.f32.mrf.mxu0
      %v2125 = vadd.f32 %v1956, %v2124
      %2126 = vmatmul.bf16.gmra.mxu0 %v1347
      %v2127 = vpop.f32.mrf.mxu0
      %v2128 = vadd.f32 %v1959, %v2127
      %v2129 = vpop.f32.mrf.mxu0
      %v2130 = vadd.f32 %v1961, %v2129
      %2131 = vmatmul.bf16.gmra.mxu0 %v1349
      %v2132 = vpop.f32.mrf.mxu0
      %v2133 = vadd.f32 %v1964, %v2132
      %v2134 = vpop.f32.mrf.mxu0
      %v2135 = vadd.f32 %v1966, %v2134
      %2136 = vmatmul.bf16.gmra.mxu0 %v1351
      %v2137 = vpop.f32.mrf.mxu0
      %v2138 = vadd.f32 %v1969, %v2137
      %v2139 = vpop.f32.mrf.mxu0
      %v2140 = vadd.f32 %v1971, %v2139
      %2141 = vmatmul.bf16.gmra.mxu0 %v1353
      %v2142 = vpop.f32.mrf.mxu0
      %v2143 = vadd.f32 %v1974, %v2142
      %v2144 = vpop.f32.mrf.mxu0
      %v2145 = vadd.f32 %v1976, %v2144
      %2146 = vmatmul.bf16.gmra.mxu0 %v1355
      %v2147 = vpop.f32.mrf.mxu0
      %v2148 = vadd.f32 %v1979, %v2147
      %v2149 = vpop.f32.mrf.mxu0
      %v2150 = vadd.f32 %v1981, %v2149
      %2151 = vmatmul.bf16.gmra.mxu0 %v1357
      %v2152 = vpop.f32.mrf.mxu0
      %v2153 = vadd.f32 %v1984, %v2152
      %v2154 = vpop.f32.mrf.mxu0
      %v2155 = vadd.f32 %v1986, %v2154
      %2156 = vmatmul.bf16.gmra.mxu0 %v1359
      %v2157 = vpop.f32.mrf.mxu0
      %v2158 = vadd.f32 %v1989, %v2157
      %v2159 = vpop.f32.mrf.mxu0
      %v2160 = vadd.f32 %v1991, %v2159
      %2161 = vmatmul.bf16.gmra.mxu0 %v1361
      %v2162 = vpop.f32.mrf.mxu0
      %v2163 = vadd.f32 %v1994, %v2162
      %v2164 = vpop.f32.mrf.mxu0
      %v2165 = vadd.f32 %v1996, %v2164
      %2166 = vmatmul.bf16.gmra.mxu0 %v1363
      %v2167 = vpop.f32.mrf.mxu0
      %v2168 = vadd.f32 %v1999, %v2167
      %v2169 = vpop.f32.mrf.mxu0
      %v2170 = vadd.f32 %v2001, %v2169
      %2171 = vmatmul.bf16.gmra.mxu0 %v1365
      %v2172 = vpop.f32.mrf.mxu0
      %v2173 = vadd.f32 %v2004, %v2172
      %v2174 = vpop.f32.mrf.mxu0
      %v2175 = vadd.f32 %v2006, %v2174
      %2176 = vmatmul.bf16.gmra.mxu0 %v1367
      %v2177 = vpop.f32.mrf.mxu0
      %v2178 = vadd.f32 %v2009, %v2177
      %v2179 = vpop.f32.mrf.mxu0
      %v2180 = vadd.f32 %v2011, %v2179
      %2181 = vmatmul.bf16.gmra.mxu0 %v1369
      %v2182 = vpop.f32.mrf.mxu0
      %v2183 = vadd.f32 %v2014, %v2182
      %v2184 = vpop.f32.mrf.mxu0
      %v2185 = vadd.f32 %v2016, %v2184
      %2186 = vmatmul.bf16.gmra.mxu0 %v1371
      %v2187 = vpop.f32.mrf.mxu0
      %v2188 = vadd.f32 %v2019, %v2187
      %v2189 = vpop.f32.mrf.mxu0
      %v2190 = vadd.f32 %v2021, %v2189
      %2191 = vmatmul.bf16.gmra.mxu0 %v1373
      %v2192 = vpop.f32.mrf.mxu0
      %v2193 = vadd.f32 %v2024, %v2192
      %v2194 = vpop.f32.mrf.mxu0
      %v2195 = vadd.f32 %v2026, %v2194
      %2196 = vmatmul.bf16.gmra.mxu0 %v1375
      %v2197 = vpop.f32.mrf.mxu0
      %v2198 = vadd.f32 %v2029, %v2197
      %v2199 = vpop.f32.mrf.mxu0
      %v2200 = vadd.f32 %v2031, %v2199
      %2201 = vmatmul.bf16.gmra.mxu0 %v1377
      %v2202 = vpop.f32.mrf.mxu0
      %v2203 = vadd.f32 %v2034, %v2202
      %v2204 = vpop.f32.mrf.mxu0
      %v2205 = vadd.f32 %v2036, %v2204
      %2206 = vmatmul.bf16.gmra.mxu0 %v1379
      %v2207 = vpop.f32.mrf.mxu0
      %v2208 = vadd.f32 %v2039, %v2207
      %v2209 = vpop.f32.mrf.mxu0
      %v2210 = vadd.f32 %v2041, %v2209
      %2211 = vmatmul.bf16.gmra.mxu0 %v1381
      %v2212 = vpop.f32.mrf.mxu0
      %v2213 = vadd.f32 %v2044, %v2212
      %v2214 = vpop.f32.mrf.mxu0
      %v2215 = vadd.f32 %v2046, %v2214
      %2216 = vmatmul.bf16.gmra.mxu0 %v1383
      %v2217 = vpop.f32.mrf.mxu0
      %v2218 = vadd.f32 %v2049, %v2217
      %v2219 = vpop.f32.mrf.mxu0
      %v2220 = vadd.f32 %v2051, %v2219
      %2221 = vmatmul.bf16.gmra.mxu0 %v1385
      %v2222 = vpop.f32.mrf.mxu0
      %v2223 = vadd.f32 %v2054, %v2222
      %v2224 = vpop.f32.mrf.mxu0
      %v2225 = vadd.f32 %v2056, %v2224
      %2226 = vmatmul.bf16.gmra.mxu0 %v1387
      %v2227 = vpop.f32.mrf.mxu0
      %v2228 = vadd.f32 %v2059, %v2227
      %v2229 = vpop.f32.mrf.mxu0
      %v2230 = vadd.f32 %v2061, %v2229
      %2231 = vmatmul.bf16.gmra.mxu0 %v1389
      %v2232 = vpop.f32.mrf.mxu0
      %v2233 = vadd.f32 %v2064, %v2232
      %v2234 = vpop.f32.mrf.mxu0
      %v2235 = vadd.f32 %v2066, %v2234
      %2236 = vmatmul.bf16.gmra.mxu0 %v1391
      %v2237 = vpop.f32.mrf.mxu0
      %v2238 = vadd.f32 %v2069, %v2237
      %v2239 = vpop.f32.mrf.mxu0
      %v2240 = vadd.f32 %v2071, %v2239
      %2241 = vmatmul.bf16.gmra.mxu0 %v1393
      %v2242 = vpop.f32.mrf.mxu0
      %v2243 = vadd.f32 %v2074, %v2242
      %v2244 = vpop.f32.mrf.mxu0
      %v2245 = vadd.f32 %v2076, %v2244
      %2246 = vmatmul.bf16.gmra.mxu0 %v1395
      %v2247 = vpop.f32.mrf.mxu0
      %v2248 = vadd.f32 %v2079, %v2247
      %v2249 = vpop.f32.mrf.mxu0
      %v2250 = vadd.f32 %v2081, %v2249
      %2251 = vmatmul.bf16.gmra.mxu0 %v1397
      %v2252 = vpop.f32.mrf.mxu0
      %v2253 = vadd.f32 %v2084, %v2252
      %v2254 = vpop.f32.mrf.mxu0
      %v2255 = vadd.f32 %v2086, %v2254
      %2256 = vmatmul.bf16.gmra.mxu0 %v1399
      %v2257 = vpop.f32.mrf.mxu0
      %v2258 = vadd.f32 %v2089, %v2257
      %v2259 = vpop.f32.mrf.mxu0
      %v2260 = vadd.f32 %v2091, %v2259
      %2261 = vmatmul.bf16.gmra.mxu0 %v1401
      %v2262 = vpop.f32.mrf.mxu0
      %v2263 = vadd.f32 %v2094, %v2262
      %v2264 = vpop.f32.mrf.mxu0
      %v2265 = vadd.f32 %v2096, %v2264
      %2266 = vmatmul.bf16.gmra.mxu0 %v1403
      %v2267 = vpop.f32.mrf.mxu0
      %v2268 = vadd.f32 %v2099, %v2267
      %v2269 = vpop.f32.mrf.mxu0
      %v2270 = vadd.f32 %v2101, %v2269
      %2271 = vmatmul.bf16.gmra.mxu0 %v1405
      %v2272 = vpop.f32.mrf.mxu0
      %v2273 = vadd.f32 %v2104, %v2272
      %v2274 = vpop.f32.mrf.mxu0
      %v2275 = vadd.f32 %v2106, %v2274
      %2276 = vmatmul.bf16.gmra.mxu0 %v1407
      %v2277 = vpop.f32.mrf.mxu0
      %v2278 = vadd.f32 %v2109, %v2277
      %v2279 = vpop.f32.mrf.mxu0
      %v2280 = vadd.f32 %v2111, %v2279
      %2281 = vdwg.mxu0
      %vm2282 = vcmp.ge.f32.partialorder %v1785, 0.0
      %vm2283 = vcmp.ge.f32.partialorder %v2123, 0.0
      %vm2284 = vcmp.ge.f32.partialorder %v1787, 0.0
      %vm2285 = vcmp.ge.f32.partialorder %v2125, 0.0
      %vm2286 = vcmp.ge.f32.partialorder %v1790, 0.0
      %vm2287 = vcmp.ge.f32.partialorder %v2128, 0.0
      %vm2288 = vcmp.ge.f32.partialorder %v1792, 0.0
      %vm2289 = vcmp.ge.f32.partialorder %v2130, 0.0
      %vm2290 = vcmp.ge.f32.partialorder %v1795, 0.0
      %vm2291 = vcmp.ge.f32.partialorder %v2133, 0.0
      %vm2292 = vcmp.ge.f32.partialorder %v1797, 0.0
      %vm2293 = vcmp.ge.f32.partialorder %v2135, 0.0
      %vm2294 = vcmp.ge.f32.partialorder %v1800, 0.0
      %vm2295 = vcmp.ge.f32.partialorder %v2138, 0.0
      %vm2296 = vcmp.ge.f32.partialorder %v1802, 0.0
      %vm2297 = vcmp.ge.f32.partialorder %v2140, 0.0
      %vm2298 = vcmp.ge.f32.partialorder %v1805, 0.0
      %vm2299 = vcmp.ge.f32.partialorder %v2143, 0.0
      %vm2300 = vcmp.ge.f32.partialorder %v1807, 0.0
      %vm2301 = vcmp.ge.f32.partialorder %v2145, 0.0
      %vm2302 = vcmp.ge.f32.partialorder %v1810, 0.0
      %vm2303 = vcmp.ge.f32.partialorder %v2148, 0.0
      %vm2304 = vcmp.ge.f32.partialorder %v1812, 0.0
      %vm2305 = vcmp.ge.f32.partialorder %v2150, 0.0
      %vm2306 = vcmp.ge.f32.partialorder %v1815, 0.0
      %vm2307 = vcmp.ge.f32.partialorder %v2153, 0.0
      %vm2308 = vcmp.ge.f32.partialorder %v1817, 0.0
      %vm2309 = vcmp.ge.f32.partialorder %v2155, 0.0
      %vm2310 = vcmp.ge.f32.partialorder %v1820, 0.0
      %vm2311 = vcmp.ge.f32.partialorder %v2158, 0.0
      %vm2312 = vcmp.ge.f32.partialorder %v1822, 0.0
      %vm2313 = vcmp.ge.f32.partialorder %v2160, 0.0
      %vm2314 = vcmp.ge.f32.partialorder %v1825, 0.0
      %vm2315 = vcmp.ge.f32.partialorder %v2163, 0.0
      %vm2316 = vcmp.ge.f32.partialorder %v1827, 0.0
      %vm2317 = vcmp.ge.f32.partialorder %v2165, 0.0
      %vm2318 = vcmp.ge.f32.partialorder %v1830, 0.0
      %vm2319 = vcmp.ge.f32.partialorder %v2168, 0.0
      %vm2320 = vcmp.ge.f32.partialorder %v1832, 0.0
      %vm2321 = vcmp.ge.f32.partialorder %v2170, 0.0
      %vm2322 = vcmp.ge.f32.partialorder %v1835, 0.0
      %vm2323 = vcmp.ge.f32.partialorder %v2173, 0.0
      %vm2324 = vcmp.ge.f32.partialorder %v1837, 0.0
      %vm2325 = vcmp.ge.f32.partialorder %v2175, 0.0
      %vm2326 = vcmp.ge.f32.partialorder %v1840, 0.0
      %vm2327 = vcmp.ge.f32.partialorder %v2178, 0.0
      %vm2328 = vcmp.ge.f32.partialorder %v1842, 0.0
      %vm2329 = vcmp.ge.f32.partialorder %v2180, 0.0
      %vm2330 = vcmp.ge.f32.partialorder %v1845, 0.0
      %vm2331 = vcmp.ge.f32.partialorder %v2183, 0.0
      %vm2332 = vcmp.ge.f32.partialorder %v1847, 0.0
      %vm2333 = vcmp.ge.f32.partialorder %v2185, 0.0
      %vm2334 = vcmp.ge.f32.partialorder %v1850, 0.0
      %vm2335 = vcmp.ge.f32.partialorder %v2188, 0.0
      %vm2336 = vcmp.ge.f32.partialorder %v1852, 0.0
      %vm2337 = vcmp.ge.f32.partialorder %v2190, 0.0
      %vm2338 = vcmp.ge.f32.partialorder %v1855, 0.0
      %vm2339 = vcmp.ge.f32.partialorder %v2193, 0.0
      %vm2340 = vcmp.ge.f32.partialorder %v1857, 0.0
      %vm2341 = vcmp.ge.f32.partialorder %v2195, 0.0
      %vm2342 = vcmp.ge.f32.partialorder %v1860, 0.0
      %vm2343 = vcmp.ge.f32.partialorder %v2198, 0.0
      %vm2344 = vcmp.ge.f32.partialorder %v1862, 0.0
      %vm2345 = vcmp.ge.f32.partialorder %v2200, 0.0
      %vm2346 = vcmp.ge.f32.partialorder %v1865, 0.0
      %vm2347 = vcmp.ge.f32.partialorder %v2203, 0.0
      %vm2348 = vcmp.ge.f32.partialorder %v1867, 0.0
      %vm2349 = vcmp.ge.f32.partialorder %v2205, 0.0
      %vm2350 = vcmp.ge.f32.partialorder %v1870, 0.0
      %vm2351 = vcmp.ge.f32.partialorder %v2208, 0.0
      %vm2352 = vcmp.ge.f32.partialorder %v1872, 0.0
      %vm2353 = vcmp.ge.f32.partialorder %v2210, 0.0
      %vm2354 = vcmp.ge.f32.partialorder %v1875, 0.0
      %vm2355 = vcmp.ge.f32.partialorder %v2213, 0.0
      %vm2356 = vcmp.ge.f32.partialorder %v1877, 0.0
      %vm2357 = vcmp.ge.f32.partialorder %v2215, 0.0
      %vm2358 = vcmp.ge.f32.partialorder %v1880, 0.0
      %vm2359 = vcmp.ge.f32.partialorder %v2218, 0.0
      %vm2360 = vcmp.ge.f32.partialorder %v1882, 0.0
      %vm2361 = vcmp.ge.f32.partialorder %v2220, 0.0
      %vm2362 = vcmp.ge.f32.partialorder %v1885, 0.0
      %vm2363 = vcmp.ge.f32.partialorder %v2223, 0.0
      %vm2364 = vcmp.ge.f32.partialorder %v1887, 0.0
      %vm2365 = vcmp.ge.f32.partialorder %v2225, 0.0
      %vm2366 = vcmp.ge.f32.partialorder %v1890, 0.0
      %vm2367 = vcmp.ge.f32.partialorder %v2228, 0.0
      %vm2368 = vcmp.ge.f32.partialorder %v1892, 0.0
      %vm2369 = vcmp.ge.f32.partialorder %v2230, 0.0
      %vm2370 = vcmp.ge.f32.partialorder %v1895, 0.0
      %vm2371 = vcmp.ge.f32.partialorder %v2233, 0.0
      %vm2372 = vcmp.ge.f32.partialorder %v1897, 0.0
      %vm2373 = vcmp.ge.f32.partialorder %v2235, 0.0
      %vm2374 = vcmp.ge.f32.partialorder %v1900, 0.0
      %vm2375 = vcmp.ge.f32.partialorder %v2238, 0.0
      %vm2376 = vcmp.ge.f32.partialorder %v1902, 0.0
      %vm2377 = vcmp.ge.f32.partialorder %v2240, 0.0
      %vm2378 = vcmp.ge.f32.partialorder %v1905, 0.0
      %vm2379 = vcmp.ge.f32.partialorder %v2243, 0.0
      %vm2380 = vcmp.ge.f32.partialorder %v1907, 0.0
      %vm2381 = vcmp.ge.f32.partialorder %v2245, 0.0
      %vm2382 = vcmp.ge.f32.partialorder %v1910, 0.0
      %vm2383 = vcmp.ge.f32.partialorder %v2248, 0.0
      %vm2384 = vcmp.ge.f32.partialorder %v1912, 0.0
      %vm2385 = vcmp.ge.f32.partialorder %v2250, 0.0
      %vm2386 = vcmp.ge.f32.partialorder %v1915, 0.0
      %vm2387 = vcmp.ge.f32.partialorder %v2253, 0.0
      %vm2388 = vcmp.ge.f32.partialorder %v1917, 0.0
      %vm2389 = vcmp.ge.f32.partialorder %v2255, 0.0
      %vm2390 = vcmp.ge.f32.partialorder %v1920, 0.0
      %vm2391 = vcmp.ge.f32.partialorder %v2258, 0.0
      %vm2392 = vcmp.ge.f32.partialorder %v1922, 0.0
      %vm2393 = vcmp.ge.f32.partialorder %v2260, 0.0
      %vm2394 = vcmp.ge.f32.partialorder %v1925, 0.0
      %vm2395 = vcmp.ge.f32.partialorder %v2263, 0.0
      %vm2396 = vcmp.ge.f32.partialorder %v1927, 0.0
      %vm2397 = vcmp.ge.f32.partialorder %v2265, 0.0
      %vm2398 = vcmp.ge.f32.partialorder %v1930, 0.0
      %vm2399 = vcmp.ge.f32.partialorder %v2268, 0.0
      %vm2400 = vcmp.ge.f32.partialorder %v1932, 0.0
      %vm2401 = vcmp.ge.f32.partialorder %v2270, 0.0
      %vm2402 = vcmp.ge.f32.partialorder %v1935, 0.0
      %vm2403 = vcmp.ge.f32.partialorder %v2273, 0.0
      %vm2404 = vcmp.ge.f32.partialorder %v1937, 0.0
      %vm2405 = vcmp.ge.f32.partialorder %v2275, 0.0
      %vm2406 = vcmp.ge.f32.partialorder %v1940, 0.0
      %vm2407 = vcmp.ge.f32.partialorder %v2278, 0.0
      %vm2408 = vcmp.ge.f32.partialorder %v1942, 0.0
      %vm2409 = vcmp.ge.f32.partialorder %v2280, 0.0
      %v2410 = vmul.f32 %v1785, 0.2
      %v2411 = vmul.f32 %v2123, 0.2
      %v2412 = vmul.f32 %v1787, 0.2
      %v2413 = vmul.f32 %v2125, 0.2
      %v2414 = vmul.f32 %v1790, 0.2
      %v2415 = vmul.f32 %v2128, 0.2
      %v2416 = vmul.f32 %v1792, 0.2
      %v2417 = vmul.f32 %v2130, 0.2
      %v2418 = vmul.f32 %v1795, 0.2
      %v2419 = vmul.f32 %v2133, 0.2
      %v2420 = vmul.f32 %v1797, 0.2
      %v2421 = vmul.f32 %v2135, 0.2
      %v2422 = vmul.f32 %v1800, 0.2
      %v2423 = vmul.f32 %v2138, 0.2
      %v2424 = vmul.f32 %v1802, 0.2
      %v2425 = vmul.f32 %v2140, 0.2
      %v2426 = vmul.f32 %v1805, 0.2
      %v2427 = vmul.f32 %v2143, 0.2
      %v2428 = vmul.f32 %v1807, 0.2
      %v2429 = vmul.f32 %v2145, 0.2
      %v2430 = vmul.f32 %v1810, 0.2
      %v2431 = vmul.f32 %v2148, 0.2
      %v2432 = vmul.f32 %v1812, 0.2
      %v2433 = vmul.f32 %v2150, 0.2
      %v2434 = vmul.f32 %v1815, 0.2
      %v2435 = vmul.f32 %v2153, 0.2
      %v2436 = vmul.f32 %v1817, 0.2
      %v2437 = vmul.f32 %v2155, 0.2
      %v2438 = vmul.f32 %v1820, 0.2
      %v2439 = vmul.f32 %v2158, 0.2
      %v2440 = vmul.f32 %v1822, 0.2
      %v2441 = vmul.f32 %v2160, 0.2
      %v2442 = vmul.f32 %v1825, 0.2
      %v2443 = vmul.f32 %v2163, 0.2
      %v2444 = vmul.f32 %v1827, 0.2
      %v2445 = vmul.f32 %v2165, 0.2
      %v2446 = vmul.f32 %v1830, 0.2
      %v2447 = vmul.f32 %v2168, 0.2
      %v2448 = vmul.f32 %v1832, 0.2
      %v2449 = vmul.f32 %v2170, 0.2
      %v2450 = vmul.f32 %v1835, 0.2
      %v2451 = vmul.f32 %v2173, 0.2
      %v2452 = vmul.f32 %v1837, 0.2
      %v2453 = vmul.f32 %v2175, 0.2
      %v2454 = vmul.f32 %v1840, 0.2
      %v2455 = vmul.f32 %v2178, 0.2
      %v2456 = vmul.f32 %v1842, 0.2
      %v2457 = vmul.f32 %v2180, 0.2
      %v2458 = vmul.f32 %v1845, 0.2
      %v2459 = vmul.f32 %v2183, 0.2
      %v2460 = vmul.f32 %v1847, 0.2
      %v2461 = vmul.f32 %v2185, 0.2
      %v2462 = vmul.f32 %v1850, 0.2
      %v2463 = vmul.f32 %v2188, 0.2
      %v2464 = vmul.f32 %v1852, 0.2
      %v2465 = vmul.f32 %v2190, 0.2
      %v2466 = vmul.f32 %v1855, 0.2
      %v2467 = vmul.f32 %v2193, 0.2
      %v2468 = vmul.f32 %v1857, 0.2
      %v2469 = vmul.f32 %v2195, 0.2
      %v2470 = vmul.f32 %v1860, 0.2
      %v2471 = vmul.f32 %v2198, 0.2
      %v2472 = vmul.f32 %v1862, 0.2
      %v2473 = vmul.f32 %v2200, 0.2
      %v2474 = vmul.f32 %v1865, 0.2
      %v2475 = vmul.f32 %v2203, 0.2
      %v2476 = vmul.f32 %v1867, 0.2
      %v2477 = vmul.f32 %v2205, 0.2
      %v2478 = vmul.f32 %v1870, 0.2
      %v2479 = vmul.f32 %v2208, 0.2
      %v2480 = vmul.f32 %v1872, 0.2
      %v2481 = vmul.f32 %v2210, 0.2
      %v2482 = vmul.f32 %v1875, 0.2
      %v2483 = vmul.f32 %v2213, 0.2
      %v2484 = vmul.f32 %v1877, 0.2
      %v2485 = vmul.f32 %v2215, 0.2
      %v2486 = vmul.f32 %v1880, 0.2
      %v2487 = vmul.f32 %v2218, 0.2
      %v2488 = vmul.f32 %v1882, 0.2
      %v2489 = vmul.f32 %v2220, 0.2
      %v2490 = vmul.f32 %v1885, 0.2
      %v2491 = vmul.f32 %v2223, 0.2
      %v2492 = vmul.f32 %v1887, 0.2
      %v2493 = vmul.f32 %v2225, 0.2
      %v2494 = vmul.f32 %v1890, 0.2
      %v2495 = vmul.f32 %v2228, 0.2
      %v2496 = vmul.f32 %v1892, 0.2
      %v2497 = vmul.f32 %v2230, 0.2
      %v2498 = vmul.f32 %v1895, 0.2
      %v2499 = vmul.f32 %v2233, 0.2
      %v2500 = vmul.f32 %v1897, 0.2
      %v2501 = vmul.f32 %v2235, 0.2
      %v2502 = vmul.f32 %v1900, 0.2
      %v2503 = vmul.f32 %v2238, 0.2
      %v2504 = vmul.f32 %v1902, 0.2
      %v2505 = vmul.f32 %v2240, 0.2
      %v2506 = vmul.f32 %v1905, 0.2
      %v2507 = vmul.f32 %v2243, 0.2
      %v2508 = vmul.f32 %v1907, 0.2
      %v2509 = vmul.f32 %v2245, 0.2
      %v2510 = vmul.f32 %v1910, 0.2
      %v2511 = vmul.f32 %v2248, 0.2
      %v2512 = vmul.f32 %v1912, 0.2
      %v2513 = vmul.f32 %v2250, 0.2
      %v2514 = vmul.f32 %v1915, 0.2
      %v2515 = vmul.f32 %v2253, 0.2
      %v2516 = vmul.f32 %v1917, 0.2
      %v2517 = vmul.f32 %v2255, 0.2
      %v2518 = vmul.f32 %v1920, 0.2
      %v2519 = vmul.f32 %v2258, 0.2
      %v2520 = vmul.f32 %v1922, 0.2
      %v2521 = vmul.f32 %v2260, 0.2
      %v2522 = vmul.f32 %v1925, 0.2
      %v2523 = vmul.f32 %v2263, 0.2
      %v2524 = vmul.f32 %v1927, 0.2
      %v2525 = vmul.f32 %v2265, 0.2
      %v2526 = vmul.f32 %v1930, 0.2
      %v2527 = vmul.f32 %v2268, 0.2
      %v2528 = vmul.f32 %v1932, 0.2
      %v2529 = vmul.f32 %v2270, 0.2
      %v2530 = vmul.f32 %v1935, 0.2
      %v2531 = vmul.f32 %v2273, 0.2
      %v2532 = vmul.f32 %v1937, 0.2
      %v2533 = vmul.f32 %v2275, 0.2
      %v2534 = vmul.f32 %v1940, 0.2
      %v2535 = vmul.f32 %v2278, 0.2
      %v2536 = vmul.f32 %v1942, 0.2
      %v2537 = vmul.f32 %v2280, 0.2
      %v2538 = vsel %vm2282, %v1785, %v2410
      %v2539 = vsel %vm2283, %v2123, %v2411
      %v2540 = vsel %vm2284, %v1787, %v2412
      %v2541 = vsel %vm2285, %v2125, %v2413
      %v2542 = vsel %vm2286, %v1790, %v2414
      %v2543 = vsel %vm2287, %v2128, %v2415
      %v2544 = vsel %vm2288, %v1792, %v2416
      %v2545 = vsel %vm2289, %v2130, %v2417
      %v2546 = vsel %vm2290, %v1795, %v2418
      %v2547 = vsel %vm2291, %v2133, %v2419
      %v2548 = vsel %vm2292, %v1797, %v2420
      %v2549 = vsel %vm2293, %v2135, %v2421
      %v2550 = vsel %vm2294, %v1800, %v2422
      %v2551 = vsel %vm2295, %v2138, %v2423
      %v2552 = vsel %vm2296, %v1802, %v2424
      %v2553 = vsel %vm2297, %v2140, %v2425
      %v2554 = vsel %vm2298, %v1805, %v2426
      %v2555 = vsel %vm2299, %v2143, %v2427
      %v2556 = vsel %vm2300, %v1807, %v2428
      %v2557 = vsel %vm2301, %v2145, %v2429
      %v2558 = vsel %vm2302, %v1810, %v2430
      %v2559 = vsel %vm2303, %v2148, %v2431
      %v2560 = vsel %vm2304, %v1812, %v2432
      %v2561 = vsel %vm2305, %v2150, %v2433
      %v2562 = vsel %vm2306, %v1815, %v2434
      %v2563 = vsel %vm2307, %v2153, %v2435
      %v2564 = vsel %vm2308, %v1817, %v2436
      %v2565 = vsel %vm2309, %v2155, %v2437
      %v2566 = vsel %vm2310, %v1820, %v2438
      %v2567 = vsel %vm2311, %v2158, %v2439
      %v2568 = vsel %vm2312, %v1822, %v2440
      %v2569 = vsel %vm2313, %v2160, %v2441
      %v2570 = vsel %vm2314, %v1825, %v2442
      %v2571 = vsel %vm2315, %v2163, %v2443
      %v2572 = vsel %vm2316, %v1827, %v2444
      %v2573 = vsel %vm2317, %v2165, %v2445
      %v2574 = vsel %vm2318, %v1830, %v2446
      %v2575 = vsel %vm2319, %v2168, %v2447
      %v2576 = vsel %vm2320, %v1832, %v2448
      %v2577 = vsel %vm2321, %v2170, %v2449
      %v2578 = vsel %vm2322, %v1835, %v2450
      %v2579 = vsel %vm2323, %v2173, %v2451
      %v2580 = vsel %vm2324, %v1837, %v2452
      %v2581 = vsel %vm2325, %v2175, %v2453
      %v2582 = vsel %vm2326, %v1840, %v2454
      %v2583 = vsel %vm2327, %v2178, %v2455
      %v2584 = vsel %vm2328, %v1842, %v2456
      %v2585 = vsel %vm2329, %v2180, %v2457
      %v2586 = vsel %vm2330, %v1845, %v2458
      %v2587 = vsel %vm2331, %v2183, %v2459
      %v2588 = vsel %vm2332, %v1847, %v2460
      %v2589 = vsel %vm2333, %v2185, %v2461
      %v2590 = vsel %vm2334, %v1850, %v2462
      %v2591 = vsel %vm2335, %v2188, %v2463
      %v2592 = vsel %vm2336, %v1852, %v2464
      %v2593 = vsel %vm2337, %v2190, %v2465
      %v2594 = vsel %vm2338, %v1855, %v2466
      %v2595 = vsel %vm2339, %v2193, %v2467
      %v2596 = vsel %vm2340, %v1857, %v2468
      %v2597 = vsel %vm2341, %v2195, %v2469
      %v2598 = vsel %vm2342, %v1860, %v2470
      %v2599 = vsel %vm2343, %v2198, %v2471
      %v2600 = vsel %vm2344, %v1862, %v2472
      %v2601 = vsel %vm2345, %v2200, %v2473
      %v2602 = vsel %vm2346, %v1865, %v2474
      %v2603 = vsel %vm2347, %v2203, %v2475
      %v2604 = vsel %vm2348, %v1867, %v2476
      %v2605 = vsel %vm2349, %v2205, %v2477
      %v2606 = vsel %vm2350, %v1870, %v2478
      %v2607 = vsel %vm2351, %v2208, %v2479
      %v2608 = vsel %vm2352, %v1872, %v2480
      %v2609 = vsel %vm2353, %v2210, %v2481
      %v2610 = vsel %vm2354, %v1875, %v2482
      %v2611 = vsel %vm2355, %v2213, %v2483
      %v2612 = vsel %vm2356, %v1877, %v2484
      %v2613 = vsel %vm2357, %v2215, %v2485
      %v2614 = vsel %vm2358, %v1880, %v2486
      %v2615 = vsel %vm2359, %v2218, %v2487
      %v2616 = vsel %vm2360, %v1882, %v2488
      %v2617 = vsel %vm2361, %v2220, %v2489
      %v2618 = vsel %vm2362, %v1885, %v2490
      %v2619 = vsel %vm2363, %v2223, %v2491
      %v2620 = vsel %vm2364, %v1887, %v2492
      %v2621 = vsel %vm2365, %v2225, %v2493
      %v2622 = vsel %vm2366, %v1890, %v2494
      %v2623 = vsel %vm2367, %v2228, %v2495
      %v2624 = vsel %vm2368, %v1892, %v2496
      %v2625 = vsel %vm2369, %v2230, %v2497
      %v2626 = vsel %vm2370, %v1895, %v2498
      %v2627 = vsel %vm2371, %v2233, %v2499
      %v2628 = vsel %vm2372, %v1897, %v2500
      %v2629 = vsel %vm2373, %v2235, %v2501
      %v2630 = vsel %vm2374, %v1900, %v2502
      %v2631 = vsel %vm2375, %v2238, %v2503
      %v2632 = vsel %vm2376, %v1902, %v2504
      %v2633 = vsel %vm2377, %v2240, %v2505
      %v2634 = vsel %vm2378, %v1905, %v2506
      %v2635 = vsel %vm2379, %v2243, %v2507
      %v2636 = vsel %vm2380, %v1907, %v2508
      %v2637 = vsel %vm2381, %v2245, %v2509
      %v2638 = vsel %vm2382, %v1910, %v2510
      %v2639 = vsel %vm2383, %v2248, %v2511
      %v2640 = vsel %vm2384, %v1912, %v2512
      %v2641 = vsel %vm2385, %v2250, %v2513
      %v2642 = vsel %vm2386, %v1915, %v2514
      %v2643 = vsel %vm2387, %v2253, %v2515
      %v2644 = vsel %vm2388, %v1917, %v2516
      %v2645 = vsel %vm2389, %v2255, %v2517
      %v2646 = vsel %vm2390, %v1920, %v2518
      %v2647 = vsel %vm2391, %v2258, %v2519
      %v2648 = vsel %vm2392, %v1922, %v2520
      %v2649 = vsel %vm2393, %v2260, %v2521
      %v2650 = vsel %vm2394, %v1925, %v2522
      %v2651 = vsel %vm2395, %v2263, %v2523
      %v2652 = vsel %vm2396, %v1927, %v2524
      %v2653 = vsel %vm2397, %v2265, %v2525
      %v2654 = vsel %vm2398, %v1930, %v2526
      %v2655 = vsel %vm2399, %v2268, %v2527
      %v2656 = vsel %vm2400, %v1932, %v2528
      %v2657 = vsel %vm2401, %v2270, %v2529
      %v2658 = vsel %vm2402, %v1935, %v2530
      %v2659 = vsel %vm2403, %v2273, %v2531
      %v2660 = vsel %vm2404, %v1937, %v2532
      %v2661 = vsel %vm2405, %v2275, %v2533
      %v2662 = vsel %vm2406, %v1940, %v2534
      %v2663 = vsel %vm2407, %v2278, %v2535
      %v2664 = vsel %vm2408, %v1942, %v2536
      %v2665 = vsel %vm2409, %v2280, %v2537
      %v2666 = vpack.c.bf16 %v2540, %v2538
      %v2667 = vpack.c.bf16 %v2541, %v2539
      %v2668 = vpack.c.bf16 %v2544, %v2542
      %v2669 = vpack.c.bf16 %v2545, %v2543
      %v2670 = vpack.c.bf16 %v2548, %v2546
      %v2671 = vpack.c.bf16 %v2549, %v2547
      %v2672 = vpack.c.bf16 %v2552, %v2550
      %v2673 = vpack.c.bf16 %v2553, %v2551
      %v2674 = vpack.c.bf16 %v2556, %v2554
      %v2675 = vpack.c.bf16 %v2557, %v2555
      %v2676 = vpack.c.bf16 %v2560, %v2558
      %v2677 = vpack.c.bf16 %v2561, %v2559
      %v2678 = vpack.c.bf16 %v2564, %v2562
      %v2679 = vpack.c.bf16 %v2565, %v2563
      %v2680 = vpack.c.bf16 %v2568, %v2566
      %v2681 = vpack.c.bf16 %v2569, %v2567
      %v2682 = vpack.c.bf16 %v2572, %v2570
      %v2683 = vpack.c.bf16 %v2573, %v2571
      %v2684 = vpack.c.bf16 %v2576, %v2574
      %v2685 = vpack.c.bf16 %v2577, %v2575
      %v2686 = vpack.c.bf16 %v2580, %v2578
      %v2687 = vpack.c.bf16 %v2581, %v2579
      %v2688 = vpack.c.bf16 %v2584, %v2582
      %v2689 = vpack.c.bf16 %v2585, %v2583
      %v2690 = vpack.c.bf16 %v2588, %v2586
      %v2691 = vpack.c.bf16 %v2589, %v2587
      %v2692 = vpack.c.bf16 %v2592, %v2590
      %v2693 = vpack.c.bf16 %v2593, %v2591
      %v2694 = vpack.c.bf16 %v2596, %v2594
      %v2695 = vpack.c.bf16 %v2597, %v2595
      %v2696 = vpack.c.bf16 %v2600, %v2598
      %v2697 = vpack.c.bf16 %v2601, %v2599
      %v2698 = vpack.c.bf16 %v2604, %v2602
      %v2699 = vpack.c.bf16 %v2605, %v2603
      %v2700 = vpack.c.bf16 %v2608, %v2606
      %v2701 = vpack.c.bf16 %v2609, %v2607
      %v2702 = vpack.c.bf16 %v2612, %v2610
      %v2703 = vpack.c.bf16 %v2613, %v2611
      %v2704 = vpack.c.bf16 %v2616, %v2614
      %v2705 = vpack.c.bf16 %v2617, %v2615
      %v2706 = vpack.c.bf16 %v2620, %v2618
      %v2707 = vpack.c.bf16 %v2621, %v2619
      %v2708 = vpack.c.bf16 %v2624, %v2622
      %v2709 = vpack.c.bf16 %v2625, %v2623
      %v2710 = vpack.c.bf16 %v2628, %v2626
      %v2711 = vpack.c.bf16 %v2629, %v2627
      %v2712 = vpack.c.bf16 %v2632, %v2630
      %v2713 = vpack.c.bf16 %v2633, %v2631
      %v2714 = vpack.c.bf16 %v2636, %v2634
      %v2715 = vpack.c.bf16 %v2637, %v2635
      %v2716 = vpack.c.bf16 %v2640, %v2638
      %v2717 = vpack.c.bf16 %v2641, %v2639
      %v2718 = vpack.c.bf16 %v2644, %v2642
      %v2719 = vpack.c.bf16 %v2645, %v2643
      %v2720 = vpack.c.bf16 %v2648, %v2646
      %v2721 = vpack.c.bf16 %v2649, %v2647
      %v2722 = vpack.c.bf16 %v2652, %v2650
      %v2723 = vpack.c.bf16 %v2653, %v2651
      %v2724 = vpack.c.bf16 %v2656, %v2654
      %v2725 = vpack.c.bf16 %v2657, %v2655
      %v2726 = vpack.c.bf16 %v2660, %v2658
      %v2727 = vpack.c.bf16 %v2661, %v2659
      %v2728 = vpack.c.bf16 %v2664, %v2662
      %v2729 = vpack.c.bf16 %v2665, %v2663
      %v2730 = vld [vmem:[%s5] sm:$0xf]
      %v2731 = vld [vmem:[%s5 + $0x4] sm:$0xf]
      %v2732 = vld [vmem:[%s5 + $0x8] sm:$0xf]
      %v2733 = vld [vmem:[%s5 + $0xc] sm:$0xf]
      %v2734 = vld [vmem:[%s5 + $0x10] sm:$0xf]
      %v2735 = vld [vmem:[%s5 + $0x14] sm:$0xf]
      %v2736 = vld [vmem:[%s5 + $0x18] sm:$0xf]
      %v2737 = vld [vmem:[%s5 + $0x1c] sm:$0xf]
      %v2738 = vld [vmem:[%s5 + $0x20] sm:$0xf]
      %v2739 = vld [vmem:[%s5 + $0x24] sm:$0xf]
      %v2740 = vld [vmem:[%s5 + $0x28] sm:$0xf]
      %v2741 = vld [vmem:[%s5 + $0x2c] sm:$0xf]
      %v2742 = vld [vmem:[%s5 + $0x30] sm:$0xf]
      %v2743 = vld [vmem:[%s5 + $0x34] sm:$0xf]
      %v2744 = vld [vmem:[%s5 + $0x38] sm:$0xf]
      %v2745 = vld [vmem:[%s5 + $0x3c] sm:$0xf]
      %v2746 = vld [vmem:[%s5 + $0x40] sm:$0xf]
      %v2747 = vld [vmem:[%s5 + $0x44] sm:$0xf]
      %v2748 = vld [vmem:[%s5 + $0x48] sm:$0xf]
      %v2749 = vld [vmem:[%s5 + $0x4c] sm:$0xf]
      %v2750 = vld [vmem:[%s5 + $0x50] sm:$0xf]
      %v2751 = vld [vmem:[%s5 + $0x54] sm:$0xf]
      %v2752 = vld [vmem:[%s5 + $0x58] sm:$0xf]
      %v2753 = vld [vmem:[%s5 + $0x5c] sm:$0xf]
      %v2754 = vld [vmem:[%s5 + $0x60] sm:$0xf]
      %v2755 = vld [vmem:[%s5 + $0x64] sm:$0xf]
      %v2756 = vld [vmem:[%s5 + $0x68] sm:$0xf]
      %v2757 = vld [vmem:[%s5 + $0x6c] sm:$0xf]
      %v2758 = vld [vmem:[%s5 + $0x70] sm:$0xf]
      %v2759 = vld [vmem:[%s5 + $0x74] sm:$0xf]
      %v2760 = vld [vmem:[%s5 + $0x78] sm:$0xf]
      %v2761 = vld [vmem:[%s5 + $0x7c] sm:$0xf]
      %v2762 = vld [vmem:[%s6] sm:$0x1]
      %v2764 = vperm.slane %v2762, 0
      %v2798 = vunpack.c.l.b16 %v2730
      %v2799 = vunpack.c.l.b16 %v2731
      %v2800 = vunpack.c.l.b16 %v2732
      %v2801 = vunpack.c.l.b16 %v2733
      %v2802 = vunpack.c.l.b16 %v2734
      %v2803 = vunpack.c.l.b16 %v2735
      %v2804 = vunpack.c.l.b16 %v2736
      %v2805 = vunpack.c.l.b16 %v2737
      %v2806 = vunpack.c.l.b16 %v2738
      %v2807 = vunpack.c.l.b16 %v2739
      %v2808 = vunpack.c.l.b16 %v2740
      %v2809 = vunpack.c.l.b16 %v2741
      %v2810 = vunpack.c.l.b16 %v2742
      %v2811 = vunpack.c.l.b16 %v2743
      %v2812 = vunpack.c.l.b16 %v2744
      %v2813 = vunpack.c.l.b16 %v2745
      %v2814 = vunpack.c.l.b16 %v2746
      %v2815 = vunpack.c.l.b16 %v2747
      %v2816 = vunpack.c.l.b16 %v2748
      %v2817 = vunpack.c.l.b16 %v2749
      %v2818 = vunpack.c.l.b16 %v2750
      %v2819 = vunpack.c.l.b16 %v2751
      %v2820 = vunpack.c.l.b16 %v2752
      %v2821 = vunpack.c.l.b16 %v2753
      %v2822 = vunpack.c.l.b16 %v2754
      %v2823 = vunpack.c.l.b16 %v2755
      %v2824 = vunpack.c.l.b16 %v2756
      %v2825 = vunpack.c.l.b16 %v2757
      %v2826 = vunpack.c.l.b16 %v2758
      %v2827 = vunpack.c.l.b16 %v2759
      %v2828 = vunpack.c.l.b16 %v2760
      %v2829 = vunpack.c.l.b16 %v2761
      %v2830 = vpack.c.b16 %v2799, %v2798
      %v2831 = vpack.c.b16 %v2801, %v2800
      %v2832 = vpack.c.b16 %v2803, %v2802
      %v2833 = vpack.c.b16 %v2805, %v2804
      %v2834 = vpack.c.b16 %v2807, %v2806
      %v2835 = vpack.c.b16 %v2809, %v2808
      %v2836 = vpack.c.b16 %v2811, %v2810
      %v2837 = vpack.c.b16 %v2813, %v2812
      %v2838 = vpack.c.b16 %v2815, %v2814
      %v2839 = vpack.c.b16 %v2817, %v2816
      %v2840 = vpack.c.b16 %v2819, %v2818
      %v2841 = vpack.c.b16 %v2821, %v2820
      %v2842 = vpack.c.b16 %v2823, %v2822
      %v2843 = vpack.c.b16 %v2825, %v2824
      %v2844 = vpack.c.b16 %v2827, %v2826
      %v2845 = vpack.c.b16 %v2829, %v2828
      %2862 = vmatpush.bf16.msra.mxu0 %v2837
      %2863 = vmatpush.bf16.msra.mxu0 %v2836
      %2864 = vmatpush.bf16.msra.mxu0 %v2835
      %2865 = vmatpush.bf16.msra.mxu0 %v2834
      %2866 = vmatpush.bf16.msra.mxu0 %v2833
      %2867 = vmatpush.bf16.msra.mxu0 %v2832
      %2868 = vmatpush.bf16.msra.mxu0 %v2831
      %2869 = vmatpush.bf16.msra.mxu0 %v2830
      %2870 = vmatmul.bf16.gmra.mxu0 %v2666
      %v2871 = vpop.f32.mrf.mxu0
      %v2872 = vadd.f32 %v2764, %v2871
      %v2873 = vpop.f32.mrf.mxu0
      %v2874 = vadd.f32 %v2764, %v2873
      %2875 = vmatmul.bf16.gmra.mxu0 %v2668
      %v2876 = vpop.f32.mrf.mxu0
      %v2877 = vadd.f32 %v2764, %v2876
      %v2878 = vpop.f32.mrf.mxu0
      %v2879 = vadd.f32 %v2764, %v2878
      %2880 = vmatmul.bf16.gmra.mxu0 %v2670
      %v2881 = vpop.f32.mrf.mxu0
      %v2882 = vadd.f32 %v2764, %v2881
      %v2883 = vpop.f32.mrf.mxu0
      %v2884 = vadd.f32 %v2764, %v2883
      %2885 = vmatmul.bf16.gmra.mxu0 %v2672
      %v2886 = vpop.f32.mrf.mxu0
      %v2887 = vadd.f32 %v2764, %v2886
      %v2888 = vpop.f32.mrf.mxu0
      %v2889 = vadd.f32 %v2764, %v2888
      %2890 = vmatmul.bf16.gmra.mxu0 %v2674
      %v2891 = vpop.f32.mrf.mxu0
      %v2892 = vadd.f32 %v2764, %v2891
      %v2893 = vpop.f32.mrf.mxu0
      %v2894 = vadd.f32 %v2764, %v2893
      %2895 = vmatmul.bf16.gmra.mxu0 %v2676
      %v2896 = vpop.f32.mrf.mxu0
      %v2897 = vadd.f32 %v2764, %v2896
      %v2898 = vpop.f32.mrf.mxu0
      %v2899 = vadd.f32 %v2764, %v2898
      %2900 = vmatmul.bf16.gmra.mxu0 %v2678
      %v2901 = vpop.f32.mrf.mxu0
      %v2902 = vadd.f32 %v2764, %v2901
      %v2903 = vpop.f32.mrf.mxu0
      %v2904 = vadd.f32 %v2764, %v2903
      %2905 = vmatmul.bf16.gmra.mxu0 %v2680
      %v2906 = vpop.f32.mrf.mxu0
      %v2907 = vadd.f32 %v2764, %v2906
      %v2908 = vpop.f32.mrf.mxu0
      %v2909 = vadd.f32 %v2764, %v2908
      %2910 = vmatmul.bf16.gmra.mxu0 %v2682
      %v2911 = vpop.f32.mrf.mxu0
      %v2912 = vadd.f32 %v2764, %v2911
      %v2913 = vpop.f32.mrf.mxu0
      %v2914 = vadd.f32 %v2764, %v2913
      %2915 = vmatmul.bf16.gmra.mxu0 %v2684
      %v2916 = vpop.f32.mrf.mxu0
      %v2917 = vadd.f32 %v2764, %v2916
      %v2918 = vpop.f32.mrf.mxu0
      %v2919 = vadd.f32 %v2764, %v2918
      %2920 = vmatmul.bf16.gmra.mxu0 %v2686
      %v2921 = vpop.f32.mrf.mxu0
      %v2922 = vadd.f32 %v2764, %v2921
      %v2923 = vpop.f32.mrf.mxu0
      %v2924 = vadd.f32 %v2764, %v2923
      %2925 = vmatmul.bf16.gmra.mxu0 %v2688
      %v2926 = vpop.f32.mrf.mxu0
      %v2927 = vadd.f32 %v2764, %v2926
      %v2928 = vpop.f32.mrf.mxu0
      %v2929 = vadd.f32 %v2764, %v2928
      %2930 = vmatmul.bf16.gmra.mxu0 %v2690
      %v2931 = vpop.f32.mrf.mxu0
      %v2932 = vadd.f32 %v2764, %v2931
      %v2933 = vpop.f32.mrf.mxu0
      %v2934 = vadd.f32 %v2764, %v2933
      %2935 = vmatmul.bf16.gmra.mxu0 %v2692
      %v2936 = vpop.f32.mrf.mxu0
      %v2937 = vadd.f32 %v2764, %v2936
      %v2938 = vpop.f32.mrf.mxu0
      %v2939 = vadd.f32 %v2764, %v2938
      %2940 = vmatmul.bf16.gmra.mxu0 %v2694
      %v2941 = vpop.f32.mrf.mxu0
      %v2942 = vadd.f32 %v2764, %v2941
      %v2943 = vpop.f32.mrf.mxu0
      %v2944 = vadd.f32 %v2764, %v2943
      %2945 = vmatmul.bf16.gmra.mxu0 %v2696
      %v2946 = vpop.f32.mrf.mxu0
      %v2947 = vadd.f32 %v2764, %v2946
      %v2948 = vpop.f32.mrf.mxu0
      %v2949 = vadd.f32 %v2764, %v2948
      %2950 = vmatmul.bf16.gmra.mxu0 %v2698
      %v2951 = vpop.f32.mrf.mxu0
      %v2952 = vadd.f32 %v2764, %v2951
      %v2953 = vpop.f32.mrf.mxu0
      %v2954 = vadd.f32 %v2764, %v2953
      %2955 = vmatmul.bf16.gmra.mxu0 %v2700
      %v2956 = vpop.f32.mrf.mxu0
      %v2957 = vadd.f32 %v2764, %v2956
      %v2958 = vpop.f32.mrf.mxu0
      %v2959 = vadd.f32 %v2764, %v2958
      %2960 = vmatmul.bf16.gmra.mxu0 %v2702
      %v2961 = vpop.f32.mrf.mxu0
      %v2962 = vadd.f32 %v2764, %v2961
      %v2963 = vpop.f32.mrf.mxu0
      %v2964 = vadd.f32 %v2764, %v2963
      %2965 = vmatmul.bf16.gmra.mxu0 %v2704
      %v2966 = vpop.f32.mrf.mxu0
      %v2967 = vadd.f32 %v2764, %v2966
      %v2968 = vpop.f32.mrf.mxu0
      %v2969 = vadd.f32 %v2764, %v2968
      %2970 = vmatmul.bf16.gmra.mxu0 %v2706
      %v2971 = vpop.f32.mrf.mxu0
      %v2972 = vadd.f32 %v2764, %v2971
      %v2973 = vpop.f32.mrf.mxu0
      %v2974 = vadd.f32 %v2764, %v2973
      %2975 = vmatmul.bf16.gmra.mxu0 %v2708
      %v2976 = vpop.f32.mrf.mxu0
      %v2977 = vadd.f32 %v2764, %v2976
      %v2978 = vpop.f32.mrf.mxu0
      %v2979 = vadd.f32 %v2764, %v2978
      %2980 = vmatmul.bf16.gmra.mxu0 %v2710
      %v2981 = vpop.f32.mrf.mxu0
      %v2982 = vadd.f32 %v2764, %v2981
      %v2983 = vpop.f32.mrf.mxu0
      %v2984 = vadd.f32 %v2764, %v2983
      %2985 = vmatmul.bf16.gmra.mxu0 %v2712
      %v2986 = vpop.f32.mrf.mxu0
      %v2987 = vadd.f32 %v2764, %v2986
      %v2988 = vpop.f32.mrf.mxu0
      %v2989 = vadd.f32 %v2764, %v2988
      %2990 = vmatmul.bf16.gmra.mxu0 %v2714
      %v2991 = vpop.f32.mrf.mxu0
      %v2992 = vadd.f32 %v2764, %v2991
      %v2993 = vpop.f32.mrf.mxu0
      %v2994 = vadd.f32 %v2764, %v2993
      %2995 = vmatmul.bf16.gmra.mxu0 %v2716
      %v2996 = vpop.f32.mrf.mxu0
      %v2997 = vadd.f32 %v2764, %v2996
      %v2998 = vpop.f32.mrf.mxu0
      %v2999 = vadd.f32 %v2764, %v2998
      %3000 = vmatmul.bf16.gmra.mxu0 %v2718
      %v3001 = vpop.f32.mrf.mxu0
      %v3002 = vadd.f32 %v2764, %v3001
      %v3003 = vpop.f32.mrf.mxu0
      %v3004 = vadd.f32 %v2764, %v3003
      %3005 = vmatmul.bf16.gmra.mxu0 %v2720
      %v3006 = vpop.f32.mrf.mxu0
      %v3007 = vadd.f32 %v2764, %v3006
      %v3008 = vpop.f32.mrf.mxu0
      %v3009 = vadd.f32 %v2764, %v3008
      %3010 = vmatmul.bf16.gmra.mxu0 %v2722
      %v3011 = vpop.f32.mrf.mxu0
      %v3012 = vadd.f32 %v2764, %v3011
      %v3013 = vpop.f32.mrf.mxu0
      %v3014 = vadd.f32 %v2764, %v3013
      %3015 = vmatmul.bf16.gmra.mxu0 %v2724
      %v3016 = vpop.f32.mrf.mxu0
      %v3017 = vadd.f32 %v2764, %v3016
      %v3018 = vpop.f32.mrf.mxu0
      %v3019 = vadd.f32 %v2764, %v3018
      %3020 = vmatmul.bf16.gmra.mxu0 %v2726
      %v3021 = vpop.f32.mrf.mxu0
      %v3022 = vadd.f32 %v2764, %v3021
      %v3023 = vpop.f32.mrf.mxu0
      %v3024 = vadd.f32 %v2764, %v3023
      %3025 = vmatmul.bf16.gmra.mxu0 %v2728
      %v3026 = vpop.f32.mrf.mxu0
      %v3027 = vadd.f32 %v2764, %v3026
      %v3028 = vpop.f32.mrf.mxu0
      %v3029 = vadd.f32 %v2764, %v3028
      %3030 = vdwg.mxu0
      %3031 = vmatpush.bf16.msra.mxu0 %v2845
      %3032 = vmatpush.bf16.msra.mxu0 %v2844
      %3033 = vmatpush.bf16.msra.mxu0 %v2843
      %3034 = vmatpush.bf16.msra.mxu0 %v2842
      %3035 = vmatpush.bf16.msra.mxu0 %v2841
      %3036 = vmatpush.bf16.msra.mxu0 %v2840
      %3037 = vmatpush.bf16.msra.mxu0 %v2839
      %3038 = vmatpush.bf16.msra.mxu0 %v2838
      %3039 = vmatmul.bf16.gmra.mxu0 %v2667
      %v3040 = vpop.f32.mrf.mxu0
      %v3041 = vadd.f32 %v2872, %v3040
      %v3042 = vpop.f32.mrf.mxu0
      %v3043 = vadd.f32 %v2874, %v3042
      %3044 = vmatmul.bf16.gmra.mxu0 %v2669
      %v3045 = vpop.f32.mrf.mxu0
      %v3046 = vadd.f32 %v2877, %v3045
      %v3047 = vpop.f32.mrf.mxu0
      %v3048 = vadd.f32 %v2879, %v3047
      %3049 = vmatmul.bf16.gmra.mxu0 %v2671
      %v3050 = vpop.f32.mrf.mxu0
      %v3051 = vadd.f32 %v2882, %v3050
      %v3052 = vpop.f32.mrf.mxu0
      %v3053 = vadd.f32 %v2884, %v3052
      %3054 = vmatmul.bf16.gmra.mxu0 %v2673
      %v3055 = vpop.f32.mrf.mxu0
      %v3056 = vadd.f32 %v2887, %v3055
      %v3057 = vpop.f32.mrf.mxu0
      %v3058 = vadd.f32 %v2889, %v3057
      %3059 = vmatmul.bf16.gmra.mxu0 %v2675
      %v3060 = vpop.f32.mrf.mxu0
      %v3061 = vadd.f32 %v2892, %v3060
      %v3062 = vpop.f32.mrf.mxu0
      %v3063 = vadd.f32 %v2894, %v3062
      %3064 = vmatmul.bf16.gmra.mxu0 %v2677
      %v3065 = vpop.f32.mrf.mxu0
      %v3066 = vadd.f32 %v2897, %v3065
      %v3067 = vpop.f32.mrf.mxu0
      %v3068 = vadd.f32 %v2899, %v3067
      %3069 = vmatmul.bf16.gmra.mxu0 %v2679
      %v3070 = vpop.f32.mrf.mxu0
      %v3071 = vadd.f32 %v2902, %v3070
      %v3072 = vpop.f32.mrf.mxu0
      %v3073 = vadd.f32 %v2904, %v3072
      %3074 = vmatmul.bf16.gmra.mxu0 %v2681
      %v3075 = vpop.f32.mrf.mxu0
      %v3076 = vadd.f32 %v2907, %v3075
      %v3077 = vpop.f32.mrf.mxu0
      %v3078 = vadd.f32 %v2909, %v3077
      %3079 = vmatmul.bf16.gmra.mxu0 %v2683
      %v3080 = vpop.f32.mrf.mxu0
      %v3081 = vadd.f32 %v2912, %v3080
      %v3082 = vpop.f32.mrf.mxu0
      %v3083 = vadd.f32 %v2914, %v3082
      %3084 = vmatmul.bf16.gmra.mxu0 %v2685
      %v3085 = vpop.f32.mrf.mxu0
      %v3086 = vadd.f32 %v2917, %v3085
      %v3087 = vpop.f32.mrf.mxu0
      %v3088 = vadd.f32 %v2919, %v3087
      %3089 = vmatmul.bf16.gmra.mxu0 %v2687
      %v3090 = vpop.f32.mrf.mxu0
      %v3091 = vadd.f32 %v2922, %v3090
      %v3092 = vpop.f32.mrf.mxu0
      %v3093 = vadd.f32 %v2924, %v3092
      %3094 = vmatmul.bf16.gmra.mxu0 %v2689
      %v3095 = vpop.f32.mrf.mxu0
      %v3096 = vadd.f32 %v2927, %v3095
      %v3097 = vpop.f32.mrf.mxu0
      %v3098 = vadd.f32 %v2929, %v3097
      %3099 = vmatmul.bf16.gmra.mxu0 %v2691
      %v3100 = vpop.f32.mrf.mxu0
      %v3101 = vadd.f32 %v2932, %v3100
      %v3102 = vpop.f32.mrf.mxu0
      %v3103 = vadd.f32 %v2934, %v3102
      %3104 = vmatmul.bf16.gmra.mxu0 %v2693
      %v3105 = vpop.f32.mrf.mxu0
      %v3106 = vadd.f32 %v2937, %v3105
      %v3107 = vpop.f32.mrf.mxu0
      %v3108 = vadd.f32 %v2939, %v3107
      %3109 = vmatmul.bf16.gmra.mxu0 %v2695
      %v3110 = vpop.f32.mrf.mxu0
      %v3111 = vadd.f32 %v2942, %v3110
      %v3112 = vpop.f32.mrf.mxu0
      %v3113 = vadd.f32 %v2944, %v3112
      %3114 = vmatmul.bf16.gmra.mxu0 %v2697
      %v3115 = vpop.f32.mrf.mxu0
      %v3116 = vadd.f32 %v2947, %v3115
      %v3117 = vpop.f32.mrf.mxu0
      %v3118 = vadd.f32 %v2949, %v3117
      %3119 = vmatmul.bf16.gmra.mxu0 %v2699
      %v3120 = vpop.f32.mrf.mxu0
      %v3121 = vadd.f32 %v2952, %v3120
      %v3122 = vpop.f32.mrf.mxu0
      %v3123 = vadd.f32 %v2954, %v3122
      %3124 = vmatmul.bf16.gmra.mxu0 %v2701
      %v3125 = vpop.f32.mrf.mxu0
      %v3126 = vadd.f32 %v2957, %v3125
      %v3127 = vpop.f32.mrf.mxu0
      %v3128 = vadd.f32 %v2959, %v3127
      %3129 = vmatmul.bf16.gmra.mxu0 %v2703
      %v3130 = vpop.f32.mrf.mxu0
      %v3131 = vadd.f32 %v2962, %v3130
      %v3132 = vpop.f32.mrf.mxu0
      %v3133 = vadd.f32 %v2964, %v3132
      %3134 = vmatmul.bf16.gmra.mxu0 %v2705
      %v3135 = vpop.f32.mrf.mxu0
      %v3136 = vadd.f32 %v2967, %v3135
      %v3137 = vpop.f32.mrf.mxu0
      %v3138 = vadd.f32 %v2969, %v3137
      %3139 = vmatmul.bf16.gmra.mxu0 %v2707
      %v3140 = vpop.f32.mrf.mxu0
      %v3141 = vadd.f32 %v2972, %v3140
      %v3142 = vpop.f32.mrf.mxu0
      %v3143 = vadd.f32 %v2974, %v3142
      %3144 = vmatmul.bf16.gmra.mxu0 %v2709
      %v3145 = vpop.f32.mrf.mxu0
      %v3146 = vadd.f32 %v2977, %v3145
      %v3147 = vpop.f32.mrf.mxu0
      %v3148 = vadd.f32 %v2979, %v3147
      %3149 = vmatmul.bf16.gmra.mxu0 %v2711
      %v3150 = vpop.f32.mrf.mxu0
      %v3151 = vadd.f32 %v2982, %v3150
      %v3152 = vpop.f32.mrf.mxu0
      %v3153 = vadd.f32 %v2984, %v3152
      %3154 = vmatmul.bf16.gmra.mxu0 %v2713
      %v3155 = vpop.f32.mrf.mxu0
      %v3156 = vadd.f32 %v2987, %v3155
      %v3157 = vpop.f32.mrf.mxu0
      %v3158 = vadd.f32 %v2989, %v3157
      %3159 = vmatmul.bf16.gmra.mxu0 %v2715
      %v3160 = vpop.f32.mrf.mxu0
      %v3161 = vadd.f32 %v2992, %v3160
      %v3162 = vpop.f32.mrf.mxu0
      %v3163 = vadd.f32 %v2994, %v3162
      %3164 = vmatmul.bf16.gmra.mxu0 %v2717
      %v3165 = vpop.f32.mrf.mxu0
      %v3166 = vadd.f32 %v2997, %v3165
      %v3167 = vpop.f32.mrf.mxu0
      %v3168 = vadd.f32 %v2999, %v3167
      %3169 = vmatmul.bf16.gmra.mxu0 %v2719
      %v3170 = vpop.f32.mrf.mxu0
      %v3171 = vadd.f32 %v3002, %v3170
      %v3172 = vpop.f32.mrf.mxu0
      %v3173 = vadd.f32 %v3004, %v3172
      %3174 = vmatmul.bf16.gmra.mxu0 %v2721
      %v3175 = vpop.f32.mrf.mxu0
      %v3176 = vadd.f32 %v3007, %v3175
      %v3177 = vpop.f32.mrf.mxu0
      %v3178 = vadd.f32 %v3009, %v3177
      %3179 = vmatmul.bf16.gmra.mxu0 %v2723
      %v3180 = vpop.f32.mrf.mxu0
      %v3181 = vadd.f32 %v3012, %v3180
      %v3182 = vpop.f32.mrf.mxu0
      %v3183 = vadd.f32 %v3014, %v3182
      %3184 = vmatmul.bf16.gmra.mxu0 %v2725
      %v3185 = vpop.f32.mrf.mxu0
      %v3186 = vadd.f32 %v3017, %v3185
      %v3187 = vpop.f32.mrf.mxu0
      %v3188 = vadd.f32 %v3019, %v3187
      %3189 = vmatmul.bf16.gmra.mxu0 %v2727
      %v3190 = vpop.f32.mrf.mxu0
      %v3191 = vadd.f32 %v3022, %v3190
      %v3192 = vpop.f32.mrf.mxu0
      %v3193 = vadd.f32 %v3024, %v3192
      %3194 = vmatmul.bf16.gmra.mxu0 %v2729
      %v3195 = vpop.f32.mrf.mxu0
      %v3196 = vadd.f32 %v3027, %v3195
      %v3197 = vpop.f32.mrf.mxu0
      %v3198 = vadd.f32 %v3029, %v3197
      %3199 = vdwg.mxu0
      %vm3200 = vcmask 64512
      %3201 = vst.msk [vmem:[%s280] sm:$0xff] %vm3200, %v3041
      %3202 = vst.msk [vmem:[%s280 + $0x8] sm:$0xff] %vm3200, %v3043
      %3203 = vst.msk [vmem:[%s280 + $0x10] sm:$0xff] %vm3200, %v3046
      %3204 = vst.msk [vmem:[%s280 + $0x18] sm:$0xff] %vm3200, %v3048
      %3205 = vst.msk [vmem:[%s280 + $0x20] sm:$0xff] %vm3200, %v3051
      %3206 = vst.msk [vmem:[%s280 + $0x28] sm:$0xff] %vm3200, %v3053
      %3207 = vst.msk [vmem:[%s280 + $0x30] sm:$0xff] %vm3200, %v3056
      %3208 = vst.msk [vmem:[%s280 + $0x38] sm:$0xff] %vm3200, %v3058
      %3209 = vst.msk [vmem:[%s280 + $0x40] sm:$0xff] %vm3200, %v3061
      %3210 = vst.msk [vmem:[%s280 + $0x48] sm:$0xff] %vm3200, %v3063
      %3211 = vst.msk [vmem:[%s280 + $0x50] sm:$0xff] %vm3200, %v3066
      %3212 = vst.msk [vmem:[%s280 + $0x58] sm:$0xff] %vm3200, %v3068
      %3213 = vst.msk [vmem:[%s280 + $0x60] sm:$0xff] %vm3200, %v3071
      %3214 = vst.msk [vmem:[%s280 + $0x68] sm:$0xff] %vm3200, %v3073
      %3215 = vst.msk [vmem:[%s280 + $0x70] sm:$0xff] %vm3200, %v3076
      %3216 = vst.msk [vmem:[%s280 + $0x78] sm:$0xff] %vm3200, %v3078
      %3217 = vst.msk [vmem:[%s280 + $0x80] sm:$0xff] %vm3200, %v3081
      %3218 = vst.msk [vmem:[%s280 + $0x88] sm:$0xff] %vm3200, %v3083
      %3219 = vst.msk [vmem:[%s280 + $0x90] sm:$0xff] %vm3200, %v3086
      %3220 = vst.msk [vmem:[%s280 + $0x98] sm:$0xff] %vm3200, %v3088
      %3221 = vst.msk [vmem:[%s280 + $0xa0] sm:$0xff] %vm3200, %v3091
      %3222 = vst.msk [vmem:[%s280 + $0xa8] sm:$0xff] %vm3200, %v3093
      %3223 = vst.msk [vmem:[%s280 + $0xb0] sm:$0xff] %vm3200, %v3096
      %3224 = vst.msk [vmem:[%s280 + $0xb8] sm:$0xff] %vm3200, %v3098
      %3225 = vst.msk [vmem:[%s280 + $0xc0] sm:$0xff] %vm3200, %v3101
      %3226 = vst.msk [vmem:[%s280 + $0xc8] sm:$0xff] %vm3200, %v3103
      %3227 = vst.msk [vmem:[%s280 + $0xd0] sm:$0xff] %vm3200, %v3106
      %3228 = vst.msk [vmem:[%s280 + $0xd8] sm:$0xff] %vm3200, %v3108
      %3229 = vst.msk [vmem:[%s280 + $0xe0] sm:$0xff] %vm3200, %v3111
      %3230 = vst.msk [vmem:[%s280 + $0xe8] sm:$0xff] %vm3200, %v3113
      %3231 = vst.msk [vmem:[%s280 + $0xf0] sm:$0xff] %vm3200, %v3116
      %3232 = vst.msk [vmem:[%s280 + $0xf8] sm:$0xff] %vm3200, %v3118
      %3233 = vst.msk [vmem:[%s280 + $0x100] sm:$0xff] %vm3200, %v3121
      %3234 = vst.msk [vmem:[%s280 + $0x108] sm:$0xff] %vm3200, %v3123
      %3235 = vst.msk [vmem:[%s280 + $0x110] sm:$0xff] %vm3200, %v3126
      %3236 = vst.msk [vmem:[%s280 + $0x118] sm:$0xff] %vm3200, %v3128
      %3237 = vst.msk [vmem:[%s280 + $0x120] sm:$0xff] %vm3200, %v3131
      %3238 = vst.msk [vmem:[%s280 + $0x128] sm:$0xff] %vm3200, %v3133
      %3239 = vst.msk [vmem:[%s280 + $0x130] sm:$0xff] %vm3200, %v3136
      %3240 = vst.msk [vmem:[%s280 + $0x138] sm:$0xff] %vm3200, %v3138
      %3241 = vst.msk [vmem:[%s280 + $0x140] sm:$0xff] %vm3200, %v3141
      %3242 = vst.msk [vmem:[%s280 + $0x148] sm:$0xff] %vm3200, %v3143
      %3243 = vst.msk [vmem:[%s280 + $0x150] sm:$0xff] %vm3200, %v3146
      %3244 = vst.msk [vmem:[%s280 + $0x158] sm:$0xff] %vm3200, %v3148
      %3245 = vst.msk [vmem:[%s280 + $0x160] sm:$0xff] %vm3200, %v3151
      %3246 = vst.msk [vmem:[%s280 + $0x168] sm:$0xff] %vm3200, %v3153
      %3247 = vst.msk [vmem:[%s280 + $0x170] sm:$0xff] %vm3200, %v3156
      %3248 = vst.msk [vmem:[%s280 + $0x178] sm:$0xff] %vm3200, %v3158
      %3249 = vst.msk [vmem:[%s280 + $0x180] sm:$0xff] %vm3200, %v3161
      %3250 = vst.msk [vmem:[%s280 + $0x188] sm:$0xff] %vm3200, %v3163
      %3251 = vst.msk [vmem:[%s280 + $0x190] sm:$0xff] %vm3200, %v3166
      %3252 = vst.msk [vmem:[%s280 + $0x198] sm:$0xff] %vm3200, %v3168
      %3253 = vst.msk [vmem:[%s280 + $0x1a0] sm:$0xff] %vm3200, %v3171
      %3254 = vst.msk [vmem:[%s280 + $0x1a8] sm:$0xff] %vm3200, %v3173
      %3255 = vst.msk [vmem:[%s280 + $0x1b0] sm:$0xff] %vm3200, %v3176
      %3256 = vst.msk [vmem:[%s280 + $0x1b8] sm:$0xff] %vm3200, %v3178
      %3257 = vst.msk [vmem:[%s280 + $0x1c0] sm:$0xff] %vm3200, %v3181
      %3258 = vst.msk [vmem:[%s280 + $0x1c8] sm:$0xff] %vm3200, %v3183
      %3259 = vst.msk [vmem:[%s280 + $0x1d0] sm:$0xff] %vm3200, %v3186
      %3260 = vst.msk [vmem:[%s280 + $0x1d8] sm:$0xff] %vm3200, %v3188
      %3261 = vst.msk [vmem:[%s280 + $0x1e0] sm:$0xff] %vm3200, %v3191
      %3262 = vst.msk [vmem:[%s280 + $0x1e8] sm:$0xff] %vm3200, %v3193
      %3263 = vst.msk [vmem:[%s280 + $0x1f0] sm:$0xff] %vm3200, %v3196
      %3264 = vst.msk [vmem:[%s280 + $0x1f8] sm:$0xff] %vm3200, %v3198
      %s3265 = smul.u32 64, %s18
      %p3266 = scmp.lt.s32.totalorder %s3265, 127
      %s3267 = scalar_select %p3266, %s3265, 127
      %s3268 = smul.addr %s3267, 8
      %s3269 = scalar_lea.vmem %s7, %s3268
      // Predicated region
      $region49: #{tpu_custom_call.1} parent=47 // pred_check
        %p3270 = pneg %p188
      $region50: #{tpu_custom_call.1} parent=47 // pred_check_branch
        %3272 = sbr.rel (%p3270) target = $region52
      $region51: #{tpu_custom_call.1} parent=47 // pred_region
        %s3273 = smul.u32 64, %s18
      $region52: #{tpu_custom_call.1} parent=47 // pred_fallthru
        _
    $region48: #{tpu_custom_call.1} parent=5 // pred_fallthru
      _
    %p3274 = scmp.le.s32.totalorder 2, %s13
    // Predicated region
    $region53: #{tpu_custom_call.1} parent=5 // pred_check
      %p3275 = pneg %p3274
    $region54: #{tpu_custom_call.1} parent=5 // pred_check_branch
      %3277 = sbr.rel (%p3275) target = $region56
    $region55: #{tpu_custom_call.1} parent=5 // pred_region
      %s3278 = ssub.s32 %s13, 2
      // Predicated region
      $region57: #{tpu_custom_call.1} parent=55 // pred_check
        %p3279 = pneg %p194
      $region58: #{tpu_custom_call.1} parent=55 // pred_check_branch
        %3281 = sbr.rel (%p3279) target = $region60
      $region59: #{tpu_custom_call.1} parent=55 // pred_region
        %s3282 = smul.u32 64, %s19
        %p3283 = scmp.lt.s32.totalorder %s3282, 127
        %s3284 = scalar_select %p3283, %s3282, 127
        %s3285 = smul.addr %s3284, 8
        %s3286 = scalar_lea.vmem %s7, %s3285
      $region60: #{tpu_custom_call.1} parent=55 // pred_fallthru
        _
    $region56: #{tpu_custom_call.1} parent=5 // pred_fallthru
      _
  $region6: #{tpu_custom_call.1} parent=0 // loop_footer
    %s17 = sadd.s32 1, %s13
  $region7: #{tpu_custom_call.1} parent=0 // loop_footer_branch
    %12 = sbr.rel target = $region3
  $region8: #{tpu_custom_call.1} parent=0 // loop_exit
    _

</llo_original>
